<compile_context>
chip_gen: v5e
topology: v5e:2x2
jax: 0.10.0
libtpu: 0.0.40
codegen_flags: <defaults>
</compile_context>

<pallas_src>
import functools

import jax
import jax.numpy as jnp
from jax.experimental import pallas as pl
from jax.experimental.pallas import tpu as pltpu

EPS = 1e-5
ROW_TARGET = 512                       # target output rows (M) per conv tile
VMEM_LIMIT_BYTES = 48 * 1024 * 1024    # above the 32 MiB scoped default, below
                                       # v7x's 64 MiB physical VMEM.

# (cin_real, cin_padded, cout_real, cout_padded, stride) per layer.  Channel
# padding keeps every stored activation lane dim a multiple of 128 (layer 1:
# 64 -> 128) and aligns the layer-1 contraction dim; padded weight / gamma /
# beta entries are zero, so real channels are unaffected.
LAYER_DEFS = (
    (3,   8,   64,  128, 2),
    (64,  128, 128, 128, 2),
    (128, 128, 256, 256, 1),
)


def _cparams():
    return pltpu.CompilerParams(
        dimension_semantics=("parallel", "parallel"),
        vmem_limit_bytes=VMEM_LIMIT_BYTES,
    )


# ----------------------------------------------------------------------------
# Pass 1: implicit-GEMM conv + per-tile BatchNorm partial statistics
# ----------------------------------------------------------------------------
def _conv_stats_kernel(xq_ref, w_ref, y_ref, stats_ref, *, taps, th, wo, cin, hq):
    # xq_ref:    (1, P*Hq, Wq, Cin) bf16 -- whole (padded / parity-split) image
    # w_ref:     (9, Cin, Cout)     bf16 -- one (Cin, Cout) matrix per 3x3 tap
    # y_ref:     (1, 1, TH*Wo, Cout) f32 -- conv output tile (the accumulator)
    # stats_ref: (1, 1, 2, Cout)     f32 -- [sum, sum of squares] for this tile
    row0 = pl.program_id(1) * th
    tm = th * wo

    def tap_matmul(t):
        par, dr, dc = taps[t]
        xs = xq_ref[0, pl.ds(par * hq + row0 + dr, th), pl.ds(dc, wo), :]
        return jnp.dot(xs.reshape(tm, cin), w_ref[t],
                       preferred_element_type=jnp.float32)

    # Accumulate the 9 taps directly into the f32 output block (VMEM resident).
    y_ref[0, 0] = tap_matmul(0)
    for t in range(1, len(taps)):
        y_ref[0, 0] += tap_matmul(t)

    # One-pass partial BN statistics (finished globally outside the kernel).
    acc = y_ref[0, 0]
    stats_ref[0, 0, 0:1, :] = jnp.sum(acc, axis=0, keepdims=True)
    stats_ref[0, 0, 1:2, :] = jnp.sum(acc * acc, axis=0, keepdims=True)


def _conv_stats(xq, w9, taps, *, th, wo, r, hq):
    n, ph, wq, cin = xq.shape
    cout = w9.shape[2]
    tm = th * wo
    kernel = functools.partial(
        _conv_stats_kernel, taps=taps, th=th, wo=wo, cin=cin, hq=hq)
    return pl.pallas_call(
        kernel,
        out_shape=(
            jax.ShapeDtypeStruct((n, r, tm, cout), jnp.float32),
            jax.ShapeDtypeStruct((n, r, 2, cout), jnp.float32),
        ),
        grid=(n, r),
        in_specs=[
            # Whole (parity-split) image; the index map ignores the row-block
            # axis so the DMA is issued once per image and reused across rows.
            pl.BlockSpec((1, ph, wq, cin), lambda i, j: (i, 0, 0, 0)),
            pl.BlockSpec((9, cin, cout), lambda i, j: (0, 0, 0)),
        ],
        out_specs=(
            pl.BlockSpec((1, 1, tm, cout), lambda i, j: (i, j, 0, 0)),
            pl.BlockSpec((1, 1, 2, cout), lambda i, j: (i, j, 0, 0)),
        ),
        compiler_params=_cparams(),
    )(xq, w9)


# ----------------------------------------------------------------------------
# Pass 2: apply BatchNorm (precomputed scale/shift) + ReLU
# ----------------------------------------------------------------------------
def _bn_relu_kernel(y_ref, scale_ref, shift_ref, o_ref):
    y = y_ref[0, 0]                                          # (TM, C) f32
    o_ref[0, 0] = jnp.maximum(
        y * scale_ref[...] + shift_ref[...], 0.0).astype(o_ref.dtype)


def _bn_relu(y, scale, shift, out_dtype):
    n, r, tm, c = y.shape
    return pl.pallas_call(
        _bn_relu_kernel,
        out_shape=jax.ShapeDtypeStruct((n, r, tm, c), out_dtype),
        grid=(n, r),
        in_specs=[
            pl.BlockSpec((1, 1, tm, c), lambda i, j: (i, j, 0, 0)),
            pl.BlockSpec((1, c), lambda i, j: (0, 0)),
            pl.BlockSpec((1, c), lambda i, j: (0, 0)),
        ],
        out_specs=pl.BlockSpec((1, 1, tm, c), lambda i, j: (i, j, 0, 0)),
        compiler_params=_cparams(),
    )(y, scale, shift)


# ----------------------------------------------------------------------------
# Plain-JAX glue: padding + (for stride 2) parity / space-to-depth re-layout
# ----------------------------------------------------------------------------
def _pick_rows(ho, wo, target=ROW_TARGET):
    # Output rows per tile: aim for ~`target` flattened rows per grid step and
    # keep the in-kernel (TH, Wo, Cin) -> (TH*Wo, Cin) flatten layout-trivial
    # (Wo % 8 == 0, otherwise a single row per step).
    if wo % 8 != 0:
        return 1
    best = 1
    for th in range(1, ho + 1):
        if ho % th == 0 and th * wo <= target:
            best = th
    return best


def _prep_input(x_nhwc, stride):
    """Pad by 1; for stride 2, split into 4 parity planes (space-to-depth on the
    *input only*, no 9x blow-up) stacked along H, so every 3x3 tap becomes a
    contiguous un-strided window.  Returns (xq, taps, ho, wo, hq) with
    xq: (N, P*Hq, Wq, Cin) and taps: list of (plane, row_off, col_off)."""
    n, h, w, c = x_nhwc.shape
    ho = (h - 1) // stride + 1
    wo = (w - 1) // stride + 1
    xp = jnp.pad(x_nhwc, ((0, 0), (1, 1), (1, 1), (0, 0)))
    if stride == 1:
        taps = [(0, ky, kx) for ky in range(3) for kx in range(3)]
        return xp, taps, ho, wo, h + 2
    # stride == 2: parity planes P[rp][cp] = xp[:, rp::2, cp::2, :]
    hq, wq = ho + 1, wo + 1
    planes = []
    for rp in range(2):
        for cp in range(2):
            plane = xp[:, rp::2, cp::2, :][:, :hq, :wq, :]
            plane = jnp.pad(plane, ((0, 0), (0, hq - plane.shape[1]),
                                    (0, wq - plane.shape[2]), (0, 0)))
            planes.append(plane)
    xq = jnp.concatenate(planes, axis=1)          # (N, 4*Hq, Wq, C)
    taps = [((ky % 2) * 2 + (kx % 2), ky // 2, kx // 2)
            for ky in range(3) for kx in range(3)]
    return xq, taps, ho, wo, hq


# ----------------------------------------------------------------------------
# Parameter init (deterministic, synthetic — mirrors the fallback backbone)
# ----------------------------------------------------------------------------
def init_params(key):
    params = []
    for cin_r, cin_p, cout_r, cout_p, _stride in LAYER_DEFS:
        key, kw, kg, kb = jax.random.split(key, 4)
        fan_in = 9 * cin_r
        w = jax.random.normal(kw, (3, 3, cin_r, cout_r), jnp.float32) / jnp.sqrt(
            jnp.float32(fan_in))
        # Zero-pad Cin / Cout so stored activations stay lane-dense; the padded
        # rows/cols are exact zeros, so real channels are bit-identical.
        w = jnp.pad(w, ((0, 0), (0, 0), (0, cin_p - cin_r), (0, cout_p - cout_r)))
        gamma = jnp.pad(1.0 + 0.1 * jax.random.normal(kg, (cout_r,), jnp.float32),
                        (0, cout_p - cout_r))
        beta = jnp.pad(0.1 * jax.random.normal(kb, (cout_r,), jnp.float32),
                       (0, cout_p - cout_r))
        # NOTE: Conv2d bias omitted — with training-mode BatchNorm right after
        # the conv, a per-channel constant bias is cancelled exactly by the
        # mean subtraction.
        params.append(dict(w9=w.reshape(9, cin_p, cout_p), gamma=gamma, beta=beta))
    return params


# ----------------------------------------------------------------------------
# HRNet simplified-backbone forward
# ----------------------------------------------------------------------------
@jax.jit
def hrnet_forward(x_nchw, params):
    x = jnp.transpose(x_nchw, (0, 2, 3, 1)).astype(jnp.bfloat16)   # NHWC, bf16
    n = x.shape[0]
    # Zero-pad the RGB input channels to the padded layer-1 Cin.
    x = jnp.pad(x, ((0, 0), (0, 0), (0, 0), (0, LAYER_DEFS[0][1] - x.shape[-1])))

    for li, ((_cr, _cp, _cout_r, cout_pad, stride), p) in enumerate(
            zip(LAYER_DEFS, params)):
        last = li == len(LAYER_DEFS) - 1
        xq, taps, ho, wo, hq = _prep_input(x, stride)
        th = _pick_rows(ho, wo)
        r = ho // th

        # Pass 1: implicit-GEMM conv (bf16 MXU, f32 accum) + per-tile stats.
        y, stats = _conv_stats(xq, p["w9"].astype(jnp.bfloat16), taps,
                               th=th, wo=wo, r=r, hq=hq)

        # Finish global (whole-batch) BatchNorm statistics: tiny (2, C) math.
        tot = jnp.sum(stats, axis=(0, 1))                       # (2, C)
        inv_m = 1.0 / float(n * ho * wo)
        mean = tot[0] * inv_m
        var = jnp.maximum(tot[1] * inv_m - mean * mean, 0.0)    # biased, as in PyTorch
        inv_std = jax.lax.rsqrt(var + EPS)
        scale = (p["gamma"] * inv_std).reshape(1, cout_pad)
        shift = (p["beta"] - mean * p["gamma"] * inv_std).reshape(1, cout_pad)

        # Pass 2: y*scale + shift, ReLU; bf16 between layers, f32 at the end.
        act = _bn_relu(y, scale, shift, jnp.float32 if last else jnp.bfloat16)
        x = act.reshape(n, ho, wo, cout_pad)

    x = x[..., :LAYER_DEFS[-1][2]]                 # drop channel padding
    return jnp.transpose(x, (0, 3, 1, 2))          # NHWC -> NCHW (f32)


if __name__ == "__main__":
    key = jax.random.PRNGKey(0)
    k_params, k_x = jax.random.split(key)
    params = init_params(k_params)

    # Small input consistent with the module: batch=2, 3 channels, 16x16.
    x = jax.random.normal(k_x, (2, 3, 16, 16), jnp.float32)

    out = jax.block_until_ready(hrnet_forward(x, params))

    assert out.shape == (2, 256, 4, 4), out.shape
    assert out.dtype == jnp.float32
    print("KERNEL_OK")
</pallas_src>

<mosaic_0001>
module attributes {stable_mosaic.version = 11 : i64} {
  func.func @_conv_stats_kernel(%arg0: i32, %arg1: i32, %arg2: memref<1x36x9x8xbf16, #tpu.memory_space<vmem>>, %arg3: memref<9x8x128xbf16, #tpu.memory_space<vmem>>, %arg4: memref<1x1x64x128xf32, #tpu.memory_space<vmem>>, %arg5: memref<1x1x2x128xf32, #tpu.memory_space<vmem>>) attributes {dimension_semantics = [#tpu.dimension_semantics<parallel>, #tpu.dimension_semantics<parallel>], iteration_bounds = array<i64: 2, 1>, scalar_prefetch = 0 : i64, scratch_operands = 0 : i64, tpu.core_type = #tpu.core_type<tc>, window_params = [{transform_indices = @transform_0, window_bounds = array<i64: 1, 36, 9, 8>}, {pipeline_mode = #tpu.pipeline_mode<synchronous>, transform_indices = @transform_1, window_bounds = array<i64: 9, 8, 128>}, {transform_indices = @transform_2, window_bounds = array<i64: 1, 1, 64, 128>}, {transform_indices = @transform_3, window_bounds = array<i64: 1, 1, 2, 128>}]} {
    %c8_i32 = arith.constant 8 : i32
    %0 = arith.muli %arg1, %c8_i32 : i32
    %c0_i32 = arith.constant 0 : i32
    %1 = arith.addi %c0_i32, %0 : i32
    %c0_i32_0 = arith.constant 0 : i32
    %2 = arith.addi %1, %c0_i32_0 : i32
    %c0 = arith.constant 0 : index
    %3 = arith.index_cast %2 : i32 to index
    %c0_1 = arith.constant 0 : index
    %c0_2 = arith.constant 0 : index
    %4 = vector.load %arg2[%c0, %3, %c0_1, %c0_2] : memref<1x36x9x8xbf16, #tpu.memory_space<vmem>>, vector<1x8x8x8xbf16>
    %5 = vector.shape_cast %4 : vector<1x8x8x8xbf16> to vector<8x8x8xbf16>
    %6 = vector.shape_cast %5 : vector<8x8x8xbf16> to vector<64x8xbf16>
    %c0_3 = arith.constant 0 : index
    %c0_4 = arith.constant 0 : index
    %c0_5 = arith.constant 0 : index
    %7 = vector.load %arg3[%c0_3, %c0_4, %c0_5] : memref<9x8x128xbf16, #tpu.memory_space<vmem>>, vector<1x8x128xbf16>
    %8 = vector.shape_cast %7 : vector<1x8x128xbf16> to vector<8x128xbf16>
    %cst = arith.constant dense<0.000000e+00> : vector<64x128xf32>
    %9 = tpu.matmul %6, %8, %cst {dimension_numbers = #tpu.dot_dimension_numbers<[1], [0], [0], [1], [0, 0, 1, 1], [], []>} : vector<64x8xbf16>, vector<8x128xbf16>, vector<64x128xf32> -> vector<64x128xf32>
    %c0_6 = arith.constant 0 : index
    %c0_7 = arith.constant 0 : index
    %c0_8 = arith.constant 0 : index
    %c0_9 = arith.constant 0 : index
    %10 = vector.load %arg4[%c0_6, %c0_7, %c0_8, %c0_9] : memref<1x1x64x128xf32, #tpu.memory_space<vmem>>, vector<1x1x64x128xf32>
    %11 = vector.shape_cast %10 : vector<1x1x64x128xf32> to vector<64x128xf32>
    %12 = vector.shape_cast %9 : vector<64x128xf32> to vector<1x1x64x128xf32>
    tpu.vector_store %arg4[%c0_6, %c0_7, %c0_8, %c0_9], %12 {strides = array<i32>} : memref<1x1x64x128xf32, #tpu.memory_space<vmem>>, vector<1x1x64x128xf32>,
    %c0_10 = arith.constant 0 : index
    %c0_11 = arith.constant 0 : index
    %c0_12 = arith.constant 0 : index
    %c0_13 = arith.constant 0 : index
    %13 = vector.load %arg4[%c0_10, %c0_11, %c0_12, %c0_13] : memref<1x1x64x128xf32, #tpu.memory_space<vmem>>, vector<1x1x64x128xf32>
    %14 = vector.shape_cast %13 : vector<1x1x64x128xf32> to vector<64x128xf32>
    %c9_i32 = arith.constant 9 : i32
    %15 = arith.addi %c9_i32, %0 : i32
    %c0_i32_14 = arith.constant 0 : i32
    %16 = arith.addi %15, %c0_i32_14 : i32
    %c0_15 = arith.constant 0 : index
    %17 = arith.index_cast %16 : i32 to index
    %c0_16 = arith.constant 0 : index
    %c0_17 = arith.constant 0 : index
    %18 = vector.load %arg2[%c0_15, %17, %c0_16, %c0_17] : memref<1x36x9x8xbf16, #tpu.memory_space<vmem>>, vector<1x8x8x8xbf16>
    %19 = vector.shape_cast %18 : vector<1x8x8x8xbf16> to vector<8x8x8xbf16>
    %20 = vector.shape_cast %19 : vector<8x8x8xbf16> to vector<64x8xbf16>
    %c1 = arith.constant 1 : index
    %c0_18 = arith.constant 0 : index
    %c0_19 = arith.constant 0 : index
    %21 = vector.load %arg3[%c1, %c0_18, %c0_19] : memref<9x8x128xbf16, #tpu.memory_space<vmem>>, vector<1x8x128xbf16>
    %22 = vector.shape_cast %21 : vector<1x8x128xbf16> to vector<8x128xbf16>
    %cst_20 = arith.constant dense<0.000000e+00> : vector<64x128xf32>
    %23 = tpu.matmul %20, %22, %cst_20 {dimension_numbers = #tpu.dot_dimension_numbers<[1], [0], [0], [1], [0, 0, 1, 1], [], []>} : vector<64x8xbf16>, vector<8x128xbf16>, vector<64x128xf32> -> vector<64x128xf32>
    %24 = arith.addf %14, %23 : vector<64x128xf32>
    %c0_21 = arith.constant 0 : index
    %c0_22 = arith.constant 0 : index
    %c0_23 = arith.constant 0 : index
    %c0_24 = arith.constant 0 : index
    %25 = vector.load %arg4[%c0_21, %c0_22, %c0_23, %c0_24] : memref<1x1x64x128xf32, #tpu.memory_space<vmem>>, vector<1x1x64x128xf32>
    %26 = vector.shape_cast %25 : vector<1x1x64x128xf32> to vector<64x128xf32>
    %27 = vector.shape_cast %24 : vector<64x128xf32> to vector<1x1x64x128xf32>
    tpu.vector_store %arg4[%c0_21, %c0_22, %c0_23, %c0_24], %27 {strides = array<i32>} : memref<1x1x64x128xf32, #tpu.memory_space<vmem>>, vector<1x1x64x128xf32>,
    %c0_25 = arith.constant 0 : index
    %c0_26 = arith.constant 0 : index
    %c0_27 = arith.constant 0 : index
    %c0_28 = arith.constant 0 : index
    %28 = vector.load %arg4[%c0_25, %c0_26, %c0_27, %c0_28] : memref<1x1x64x128xf32, #tpu.memory_space<vmem>>, vector<1x1x64x128xf32>
    %29 = vector.shape_cast %28 : vector<1x1x64x128xf32> to vector<64x128xf32>
    %c0_i32_29 = arith.constant 0 : i32
    %30 = arith.addi %c0_i32_29, %0 : i32
    %c0_i32_30 = arith.constant 0 : i32
    %31 = arith.addi %30, %c0_i32_30 : i32
    %c0_31 = arith.constant 0 : index
    %32 = arith.index_cast %31 : i32 to index
    %c1_32 = arith.constant 1 : index
    %c0_33 = arith.constant 0 : index
    %33 = vector.load %arg2[%c0_31, %32, %c1_32, %c0_33] : memref<1x36x9x8xbf16, #tpu.memory_space<vmem>>, vector<1x8x8x8xbf16>
    %34 = vector.shape_cast %33 : vector<1x8x8x8xbf16> to vector<8x8x8xbf16>
    %35 = vector.shape_cast %34 : vector<8x8x8xbf16> to vector<64x8xbf16>
    %c2 = arith.constant 2 : index
    %c0_34 = arith.constant 0 : index
    %c0_35 = arith.constant 0 : index
    %36 = vector.load %arg3[%c2, %c0_34, %c0_35] : memref<9x8x128xbf16, #tpu.memory_space<vmem>>, vector<1x8x128xbf16>
    %37 = vector.shape_cast %36 : vector<1x8x128xbf16> to vector<8x128xbf16>
    %cst_36 = arith.constant dense<0.000000e+00> : vector<64x128xf32>
    %38 = tpu.matmul %35, %37, %cst_36 {dimension_numbers = #tpu.dot_dimension_numbers<[1], [0], [0], [1], [0, 0, 1, 1], [], []>} : vector<64x8xbf16>, vector<8x128xbf16>, vector<64x128xf32> -> vector<64x128xf32>
    %39 = arith.addf %29, %38 : vector<64x128xf32>
    %c0_37 = arith.constant 0 : index
    %c0_38 = arith.constant 0 : index
    %c0_39 = arith.constant 0 : index
    %c0_40 = arith.constant 0 : index
    %40 = vector.load %arg4[%c0_37, %c0_38, %c0_39, %c0_40] : memref<1x1x64x128xf32, #tpu.memory_space<vmem>>, vector<1x1x64x128xf32>
    %41 = vector.shape_cast %40 : vector<1x1x64x128xf32> to vector<64x128xf32>
    %42 = vector.shape_cast %39 : vector<64x128xf32> to vector<1x1x64x128xf32>
    tpu.vector_store %arg4[%c0_37, %c0_38, %c0_39, %c0_40], %42 {strides = array<i32>} : memref<1x1x64x128xf32, #tpu.memory_space<vmem>>, vector<1x1x64x128xf32>,
    %c0_41 = arith.constant 0 : index
    %c0_42 = arith.constant 0 : index
    %c0_43 = arith.constant 0 : index
    %c0_44 = arith.constant 0 : index
    %43 = vector.load %arg4[%c0_41, %c0_42, %c0_43, %c0_44] : memref<1x1x64x128xf32, #tpu.memory_space<vmem>>, vector<1x1x64x128xf32>
    %44 = vector.shape_cast %43 : vector<1x1x64x128xf32> to vector<64x128xf32>
    %c18_i32 = arith.constant 18 : i32
    %45 = arith.addi %c18_i32, %0 : i32
    %c0_i32_45 = arith.constant 0 : i32
    %46 = arith.addi %45, %c0_i32_45 : i32
    %c0_46 = arith.constant 0 : index
    %47 = arith.index_cast %46 : i32 to index
    %c0_47 = arith.constant 0 : index
    %c0_48 = arith.constant 0 : index
    %48 = vector.load %arg2[%c0_46, %47, %c0_47, %c0_48] : memref<1x36x9x8xbf16, #tpu.memory_space<vmem>>, vector<1x8x8x8xbf16>
    %49 = vector.shape_cast %48 : vector<1x8x8x8xbf16> to vector<8x8x8xbf16>
    %50 = vector.shape_cast %49 : vector<8x8x8xbf16> to vector<64x8xbf16>
    %c3 = arith.constant 3 : index
    %c0_49 = arith.constant 0 : index
    %c0_50 = arith.constant 0 : index
    %51 = vector.load %arg3[%c3, %c0_49, %c0_50] : memref<9x8x128xbf16, #tpu.memory_space<vmem>>, vector<1x8x128xbf16>
    %52 = vector.shape_cast %51 : vector<1x8x128xbf16> to vector<8x128xbf16>
    %cst_51 = arith.constant dense<0.000000e+00> : vector<64x128xf32>
    %53 = tpu.matmul %50, %52, %cst_51 {dimension_numbers = #tpu.dot_dimension_numbers<[1], [0], [0], [1], [0, 0, 1, 1], [], []>} : vector<64x8xbf16>, vector<8x128xbf16>, vector<64x128xf32> -> vector<64x128xf32>
    %54 = arith.addf %44, %53 : vector<64x128xf32>
    %c0_52 = arith.constant 0 : index
    %c0_53 = arith.constant 0 : index
    %c0_54 = arith.constant 0 : index
    %c0_55 = arith.constant 0 : index
    %55 = vector.load %arg4[%c0_52, %c0_53, %c0_54, %c0_55] : memref<1x1x64x128xf32, #tpu.memory_space<vmem>>, vector<1x1x64x128xf32>
    %56 = vector.shape_cast %55 : vector<1x1x64x128xf32> to vector<64x128xf32>
    %57 = vector.shape_cast %54 : vector<64x128xf32> to vector<1x1x64x128xf32>
    tpu.vector_store %arg4[%c0_52, %c0_53, %c0_54, %c0_55], %57 {strides = array<i32>} : memref<1x1x64x128xf32, #tpu.memory_space<vmem>>, vector<1x1x64x128xf32>,
    %c0_56 = arith.constant 0 : index
    %c0_57 = arith.constant 0 : index
    %c0_58 = arith.constant 0 : index
    %c0_59 = arith.constant 0 : index
    %58 = vector.load %arg4[%c0_56, %c0_57, %c0_58, %c0_59] : memref<1x1x64x128xf32, #tpu.memory_space<vmem>>, vector<1x1x64x128xf32>
    %59 = vector.shape_cast %58 : vector<1x1x64x128xf32> to vector<64x128xf32>
    %c27_i32 = arith.constant 27 : i32
    %60 = arith.addi %c27_i32, %0 : i32
    %c0_i32_60 = arith.constant 0 : i32
    %61 = arith.addi %60, %c0_i32_60 : i32
    %c0_61 = arith.constant 0 : index
    %62 = arith.index_cast %61 : i32 to index
    %c0_62 = arith.constant 0 : index
    %c0_63 = arith.constant 0 : index
    %63 = vector.load %arg2[%c0_61, %62, %c0_62, %c0_63] : memref<1x36x9x8xbf16, #tpu.memory_space<vmem>>, vector<1x8x8x8xbf16>
    %64 = vector.shape_cast %63 : vector<1x8x8x8xbf16> to vector<8x8x8xbf16>
    %65 = vector.shape_cast %64 : vector<8x8x8xbf16> to vector<64x8xbf16>
    %c4 = arith.constant 4 : index
    %c0_64 = arith.constant 0 : index
    %c0_65 = arith.constant 0 : index
    %66 = vector.load %arg3[%c4, %c0_64, %c0_65] : memref<9x8x128xbf16, #tpu.memory_space<vmem>>, vector<1x8x128xbf16>
    %67 = vector.shape_cast %66 : vector<1x8x128xbf16> to vector<8x128xbf16>
    %cst_66 = arith.constant dense<0.000000e+00> : vector<64x128xf32>
    %68 = tpu.matmul %65, %67, %cst_66 {dimension_numbers = #tpu.dot_dimension_numbers<[1], [0], [0], [1], [0, 0, 1, 1], [], []>} : vector<64x8xbf16>, vector<8x128xbf16>, vector<64x128xf32> -> vector<64x128xf32>
    %69 = arith.addf %59, %68 : vector<64x128xf32>
    %c0_67 = arith.constant 0 : index
    %c0_68 = arith.constant 0 : index
    %c0_69 = arith.constant 0 : index
    %c0_70 = arith.constant 0 : index
    %70 = vector.load %arg4[%c0_67, %c0_68, %c0_69, %c0_70] : memref<1x1x64x128xf32, #tpu.memory_space<vmem>>, vector<1x1x64x128xf32>
    %71 = vector.shape_cast %70 : vector<1x1x64x128xf32> to vector<64x128xf32>
    %72 = vector.shape_cast %69 : vector<64x128xf32> to vector<1x1x64x128xf32>
    tpu.vector_store %arg4[%c0_67, %c0_68, %c0_69, %c0_70], %72 {strides = array<i32>} : memref<1x1x64x128xf32, #tpu.memory_space<vmem>>, vector<1x1x64x128xf32>,
    %c0_71 = arith.constant 0 : index
    %c0_72 = arith.constant 0 : index
    %c0_73 = arith.constant 0 : index
    %c0_74 = arith.constant 0 : index
    %73 = vector.load %arg4[%c0_71, %c0_72, %c0_73, %c0_74] : memref<1x1x64x128xf32, #tpu.memory_space<vmem>>, vector<1x1x64x128xf32>
    %74 = vector.shape_cast %73 : vector<1x1x64x128xf32> to vector<64x128xf32>
    %c18_i32_75 = arith.constant 18 : i32
    %75 = arith.addi %c18_i32_75, %0 : i32
    %c0_i32_76 = arith.constant 0 : i32
    %76 = arith.addi %75, %c0_i32_76 : i32
    %c0_77 = arith.constant 0 : index
    %77 = arith.index_cast %76 : i32 to index
    %c1_78 = arith.constant 1 : index
    %c0_79 = arith.constant 0 : index
    %78 = vector.load %arg2[%c0_77, %77, %c1_78, %c0_79] : memref<1x36x9x8xbf16, #tpu.memory_space<vmem>>, vector<1x8x8x8xbf16>
    %79 = vector.shape_cast %78 : vector<1x8x8x8xbf16> to vector<8x8x8xbf16>
    %80 = vector.shape_cast %79 : vector<8x8x8xbf16> to vector<64x8xbf16>
    %c5 = arith.constant 5 : index
    %c0_80 = arith.constant 0 : index
    %c0_81 = arith.constant 0 : index
    %81 = vector.load %arg3[%c5, %c0_80, %c0_81] : memref<9x8x128xbf16, #tpu.memory_space<vmem>>, vector<1x8x128xbf16>
    %82 = vector.shape_cast %81 : vector<1x8x128xbf16> to vector<8x128xbf16>
    %cst_82 = arith.constant dense<0.000000e+00> : vector<64x128xf32>
    %83 = tpu.matmul %80, %82, %cst_82 {dimension_numbers = #tpu.dot_dimension_numbers<[1], [0], [0], [1], [0, 0, 1, 1], [], []>} : vector<64x8xbf16>, vector<8x128xbf16>, vector<64x128xf32> -> vector<64x128xf32>
    %84 = arith.addf %74, %83 : vector<64x128xf32>
    %c0_83 = arith.constant 0 : index
    %c0_84 = arith.constant 0 : index
    %c0_85 = arith.constant 0 : index
    %c0_86 = arith.constant 0 : index
    %85 = vector.load %arg4[%c0_83, %c0_84, %c0_85, %c0_86] : memref<1x1x64x128xf32, #tpu.memory_space<vmem>>, vector<1x1x64x128xf32>
    %86 = vector.shape_cast %85 : vector<1x1x64x128xf32> to vector<64x128xf32>
    %87 = vector.shape_cast %84 : vector<64x128xf32> to vector<1x1x64x128xf32>
    tpu.vector_store %arg4[%c0_83, %c0_84, %c0_85, %c0_86], %87 {strides = array<i32>} : memref<1x1x64x128xf32, #tpu.memory_space<vmem>>, vector<1x1x64x128xf32>,
    %c0_87 = arith.constant 0 : index
    %c0_88 = arith.constant 0 : index
    %c0_89 = arith.constant 0 : index
    %c0_90 = arith.constant 0 : index
    %88 = vector.load %arg4[%c0_87, %c0_88, %c0_89, %c0_90] : memref<1x1x64x128xf32, #tpu.memory_space<vmem>>, vector<1x1x64x128xf32>
    %89 = vector.shape_cast %88 : vector<1x1x64x128xf32> to vector<64x128xf32>
    %c0_i32_91 = arith.constant 0 : i32
    %90 = arith.addi %c0_i32_91, %0 : i32
    %c1_i32 = arith.constant 1 : i32
    %91 = arith.addi %90, %c1_i32 : i32
    %c0_92 = arith.constant 0 : index
    %92 = arith.index_cast %91 : i32 to index
    %c0_93 = arith.constant 0 : index
    %c0_94 = arith.constant 0 : index
    %93 = vector.load %arg2[%c0_92, %92, %c0_93, %c0_94] : memref<1x36x9x8xbf16, #tpu.memory_space<vmem>>, vector<1x8x8x8xbf16>
    %94 = vector.shape_cast %93 : vector<1x8x8x8xbf16> to vector<8x8x8xbf16>
    %95 = vector.shape_cast %94 : vector<8x8x8xbf16> to vector<64x8xbf16>
    %c6 = arith.constant 6 : index
    %c0_95 = arith.constant 0 : index
    %c0_96 = arith.constant 0 : index
    %96 = vector.load %arg3[%c6, %c0_95, %c0_96] : memref<9x8x128xbf16, #tpu.memory_space<vmem>>, vector<1x8x128xbf16>
    %97 = vector.shape_cast %96 : vector<1x8x128xbf16> to vector<8x128xbf16>
    %cst_97 = arith.constant dense<0.000000e+00> : vector<64x128xf32>
    %98 = tpu.matmul %95, %97, %cst_97 {dimension_numbers = #tpu.dot_dimension_numbers<[1], [0], [0], [1], [0, 0, 1, 1], [], []>} : vector<64x8xbf16>, vector<8x128xbf16>, vector<64x128xf32> -> vector<64x128xf32>
    %99 = arith.addf %89, %98 : vector<64x128xf32>
    %c0_98 = arith.constant 0 : index
    %c0_99 = arith.constant 0 : index
    %c0_100 = arith.constant 0 : index
    %c0_101 = arith.constant 0 : index
    %100 = vector.load %arg4[%c0_98, %c0_99, %c0_100, %c0_101] : memref<1x1x64x128xf32, #tpu.memory_space<vmem>>, vector<1x1x64x128xf32>
    %101 = vector.shape_cast %100 : vector<1x1x64x128xf32> to vector<64x128xf32>
    %102 = vector.shape_cast %99 : vector<64x128xf32> to vector<1x1x64x128xf32>
    tpu.vector_store %arg4[%c0_98, %c0_99, %c0_100, %c0_101], %102 {strides = array<i32>} : memref<1x1x64x128xf32, #tpu.memory_space<vmem>>, vector<1x1x64x128xf32>,
    %c0_102 = arith.constant 0 : index
    %c0_103 = arith.constant 0 : index
    %c0_104 = arith.constant 0 : index
    %c0_105 = arith.constant 0 : index
    %103 = vector.load %arg4[%c0_102, %c0_103, %c0_104, %c0_105] : memref<1x1x64x128xf32, #tpu.memory_space<vmem>>, vector<1x1x64x128xf32>
    %104 = vector.shape_cast %103 : vector<1x1x64x128xf32> to vector<64x128xf32>
    %c9_i32_106 = arith.constant 9 : i32
    %105 = arith.addi %c9_i32_106, %0 : i32
    %c1_i32_107 = arith.constant 1 : i32
    %106 = arith.addi %105, %c1_i32_107 : i32
    %c0_108 = arith.constant 0 : index
    %107 = arith.index_cast %106 : i32 to index
    %c0_109 = arith.constant 0 : index
    %c0_110 = arith.constant 0 : index
    %108 = vector.load %arg2[%c0_108, %107, %c0_109, %c0_110] : memref<1x36x9x8xbf16, #tpu.memory_space<vmem>>, vector<1x8x8x8xbf16>
    %109 = vector.shape_cast %108 : vector<1x8x8x8xbf16> to vector<8x8x8xbf16>
    %110 = vector.shape_cast %109 : vector<8x8x8xbf16> to vector<64x8xbf16>
    %c7 = arith.constant 7 : index
    %c0_111 = arith.constant 0 : index
    %c0_112 = arith.constant 0 : index
    %111 = vector.load %arg3[%c7, %c0_111, %c0_112] : memref<9x8x128xbf16, #tpu.memory_space<vmem>>, vector<1x8x128xbf16>
    %112 = vector.shape_cast %111 : vector<1x8x128xbf16> to vector<8x128xbf16>
    %cst_113 = arith.constant dense<0.000000e+00> : vector<64x128xf32>
    %113 = tpu.matmul %110, %112, %cst_113 {dimension_numbers = #tpu.dot_dimension_numbers<[1], [0], [0], [1], [0, 0, 1, 1], [], []>} : vector<64x8xbf16>, vector<8x128xbf16>, vector<64x128xf32> -> vector<64x128xf32>
    %114 = arith.addf %104, %113 : vector<64x128xf32>
    %c0_114 = arith.constant 0 : index
    %c0_115 = arith.constant 0 : index
    %c0_116 = arith.constant 0 : index
    %c0_117 = arith.constant 0 : index
    %115 = vector.load %arg4[%c0_114, %c0_115, %c0_116, %c0_117] : memref<1x1x64x128xf32, #tpu.memory_space<vmem>>, vector<1x1x64x128xf32>
    %116 = vector.shape_cast %115 : vector<1x1x64x128xf32> to vector<64x128xf32>
    %117 = vector.shape_cast %114 : vector<64x128xf32> to vector<1x1x64x128xf32>
    tpu.vector_store %arg4[%c0_114, %c0_115, %c0_116, %c0_117], %117 {strides = array<i32>} : memref<1x1x64x128xf32, #tpu.memory_space<vmem>>, vector<1x1x64x128xf32>,
    %c0_118 = arith.constant 0 : index
    %c0_119 = arith.constant 0 : index
    %c0_120 = arith.constant 0 : index
    %c0_121 = arith.constant 0 : index
    %118 = vector.load %arg4[%c0_118, %c0_119, %c0_120, %c0_121] : memref<1x1x64x128xf32, #tpu.memory_space<vmem>>, vector<1x1x64x128xf32>
    %119 = vector.shape_cast %118 : vector<1x1x64x128xf32> to vector<64x128xf32>
    %c0_i32_122 = arith.constant 0 : i32
    %120 = arith.addi %c0_i32_122, %0 : i32
    %c1_i32_123 = arith.constant 1 : i32
    %121 = arith.addi %120, %c1_i32_123 : i32
    %c0_124 = arith.constant 0 : index
    %122 = arith.index_cast %121 : i32 to index
    %c1_125 = arith.constant 1 : index
    %c0_126 = arith.constant 0 : index
    %123 = vector.load %arg2[%c0_124, %122, %c1_125, %c0_126] : memref<1x36x9x8xbf16, #tpu.memory_space<vmem>>, vector<1x8x8x8xbf16>
    %124 = vector.shape_cast %123 : vector<1x8x8x8xbf16> to vector<8x8x8xbf16>
    %125 = vector.shape_cast %124 : vector<8x8x8xbf16> to vector<64x8xbf16>
    %c8 = arith.constant 8 : index
    %c0_127 = arith.constant 0 : index
    %c0_128 = arith.constant 0 : index
    %126 = vector.load %arg3[%c8, %c0_127, %c0_128] : memref<9x8x128xbf16, #tpu.memory_space<vmem>>, vector<1x8x128xbf16>
    %127 = vector.shape_cast %126 : vector<1x8x128xbf16> to vector<8x128xbf16>
    %cst_129 = arith.constant dense<0.000000e+00> : vector<64x128xf32>
    %128 = tpu.matmul %125, %127, %cst_129 {dimension_numbers = #tpu.dot_dimension_numbers<[1], [0], [0], [1], [0, 0, 1, 1], [], []>} : vector<64x8xbf16>, vector<8x128xbf16>, vector<64x128xf32> -> vector<64x128xf32>
    %129 = arith.addf %119, %128 : vector<64x128xf32>
    %c0_130 = arith.constant 0 : index
    %c0_131 = arith.constant 0 : index
    %c0_132 = arith.constant 0 : index
    %c0_133 = arith.constant 0 : index
    %130 = vector.load %arg4[%c0_130, %c0_131, %c0_132, %c0_133] : memref<1x1x64x128xf32, #tpu.memory_space<vmem>>, vector<1x1x64x128xf32>
    %131 = vector.shape_cast %130 : vector<1x1x64x128xf32> to vector<64x128xf32>
    %132 = vector.shape_cast %129 : vector<64x128xf32> to vector<1x1x64x128xf32>
    tpu.vector_store %arg4[%c0_130, %c0_131, %c0_132, %c0_133], %132 {strides = array<i32>} : memref<1x1x64x128xf32, #tpu.memory_space<vmem>>, vector<1x1x64x128xf32>,
    %c0_134 = arith.constant 0 : index
    %c0_135 = arith.constant 0 : index
    %c0_136 = arith.constant 0 : index
    %c0_137 = arith.constant 0 : index
    %133 = vector.load %arg4[%c0_134, %c0_135, %c0_136, %c0_137] : memref<1x1x64x128xf32, #tpu.memory_space<vmem>>, vector<1x1x64x128xf32>
    %134 = vector.shape_cast %133 : vector<1x1x64x128xf32> to vector<64x128xf32>
    %cst_138 = arith.constant dense<0.000000e+00> : vector<128xf32>
    %135 = vector.multi_reduction <add>, %134, %cst_138 [0] : vector<64x128xf32> to vector<128xf32>
    %136 = vector.shape_cast %135 : vector<128xf32> to vector<1x128xf32>
    %c0_139 = arith.constant 0 : index
    %c0_140 = arith.constant 0 : index
    %c0_141 = arith.constant 0 : index
    %c0_142 = arith.constant 0 : index
    %137 = vector.load %arg5[%c0_139, %c0_140, %c0_141, %c0_142] : memref<1x1x2x128xf32, #tpu.memory_space<vmem>>, vector<1x1x1x128xf32>
    %138 = vector.shape_cast %137 : vector<1x1x1x128xf32> to vector<1x128xf32>
    %139 = vector.shape_cast %136 : vector<1x128xf32> to vector<1x1x1x128xf32>
    tpu.vector_store %arg5[%c0_139, %c0_140, %c0_141, %c0_142], %139 {strides = array<i32>} : memref<1x1x2x128xf32, #tpu.memory_space<vmem>>, vector<1x1x1x128xf32>,
    %140 = arith.mulf %134, %134 : vector<64x128xf32>
    %cst_143 = arith.constant dense<0.000000e+00> : vector<128xf32>
    %141 = vector.multi_reduction <add>, %140, %cst_143 [0] : vector<64x128xf32> to vector<128xf32>
    %142 = vector.shape_cast %141 : vector<128xf32> to vector<1x128xf32>
    %c0_144 = arith.constant 0 : index
    %c0_145 = arith.constant 0 : index
    %c1_146 = arith.constant 1 : index
    %c0_147 = arith.constant 0 : index
    %143 = vector.load %arg5[%c0_144, %c0_145, %c1_146, %c0_147] : memref<1x1x2x128xf32, #tpu.memory_space<vmem>>, vector<1x1x1x128xf32>
    %144 = vector.shape_cast %143 : vector<1x1x1x128xf32> to vector<1x128xf32>
    %145 = vector.shape_cast %142 : vector<1x128xf32> to vector<1x1x1x128xf32>
    tpu.vector_store %arg5[%c0_144, %c0_145, %c1_146, %c0_147], %145 {strides = array<i32>} : memref<1x1x2x128xf32, #tpu.memory_space<vmem>>, vector<1x1x1x128xf32>,
    return
  }
  func.func @transform_0(%arg0: i32, %arg1: i32) -> (i32, i32, i32, i32) {
    %c0_i32 = arith.constant 0 : i32
    %c0_i32_0 = arith.constant 0 : i32
    %c0_i32_1 = arith.constant 0 : i32
    %c0_i32_2 = arith.constant 0 : i32
    return %arg0, %c0_i32, %c0_i32_0, %c0_i32_1 : i32, i32, i32, i32
  }
  func.func @transform_1(%arg0: i32, %arg1: i32) -> (i32, i32, i32) {
    %c0_i32 = arith.constant 0 : i32
    %c0_i32_0 = arith.constant 0 : i32
    %c0_i32_1 = arith.constant 0 : i32
    %c0_i32_2 = arith.constant 0 : i32
    return %c0_i32, %c0_i32_0, %c0_i32_1 : i32, i32, i32
  }
  func.func @transform_2(%arg0: i32, %arg1: i32) -> (i32, i32, i32, i32) {
    %c0_i32 = arith.constant 0 : i32
    %c0_i32_0 = arith.constant 0 : i32
    %c0_i32_1 = arith.constant 0 : i32
    return %arg0, %arg1, %c0_i32, %c0_i32_0 : i32, i32, i32, i32
  }
  func.func @transform_3(%arg0: i32, %arg1: i32) -> (i32, i32, i32, i32) {
    %c0_i32 = arith.constant 0 : i32
    %c0_i32_0 = arith.constant 0 : i32
    %c0_i32_1 = arith.constant 0 : i32
    return %arg0, %arg1, %c0_i32, %c0_i32_0 : i32, i32, i32, i32
  }
}

module attributes {stable_mosaic.version = 11 : i64} {
  func.func @_bn_relu_kernel(%arg0: i32, %arg1: i32, %arg2: memref<1x1x64x128xf32, #tpu.memory_space<vmem>>, %arg3: memref<1x128xf32, #tpu.memory_space<vmem>>, %arg4: memref<1x128xf32, #tpu.memory_space<vmem>>, %arg5: memref<1x1x64x128xbf16, #tpu.memory_space<vmem>>) attributes {dimension_semantics = [#tpu.dimension_semantics<parallel>, #tpu.dimension_semantics<parallel>], iteration_bounds = array<i64: 2, 1>, scalar_prefetch = 0 : i64, scratch_operands = 0 : i64, tpu.core_type = #tpu.core_type<tc>, window_params = [{transform_indices = @transform_0, window_bounds = array<i64: 1, 1, 64, 128>}, {pipeline_mode = #tpu.pipeline_mode<synchronous>, transform_indices = @transform_1, window_bounds = array<i64: 1, 128>}, {pipeline_mode = #tpu.pipeline_mode<synchronous>, transform_indices = @transform_2, window_bounds = array<i64: 1, 128>}, {transform_indices = @transform_3, window_bounds = array<i64: 1, 1, 64, 128>}]} {
    %c0 = arith.constant 0 : index
    %c0_0 = arith.constant 0 : index
    %c0_1 = arith.constant 0 : index
    %c0_2 = arith.constant 0 : index
    %0 = vector.load %arg2[%c0, %c0_0, %c0_1, %c0_2] : memref<1x1x64x128xf32, #tpu.memory_space<vmem>>, vector<1x1x64x128xf32>
    %1 = vector.shape_cast %0 : vector<1x1x64x128xf32> to vector<64x128xf32>
    %c0_3 = arith.constant 0 : index
    %c0_4 = arith.constant 0 : index
    %2 = vector.load %arg3[%c0_3, %c0_4] : memref<1x128xf32, #tpu.memory_space<vmem>>, vector<1x128xf32>
    %3 = vector.broadcast %2 : vector<1x128xf32> to vector<64x128xf32>
    %4 = arith.mulf %1, %3 : vector<64x128xf32>
    %c0_5 = arith.constant 0 : index
    %c0_6 = arith.constant 0 : index
    %5 = vector.load %arg4[%c0_5, %c0_6] : memref<1x128xf32, #tpu.memory_space<vmem>>, vector<1x128xf32>
    %6 = vector.broadcast %5 : vector<1x128xf32> to vector<64x128xf32>
    %7 = arith.addf %4, %6 : vector<64x128xf32>
    %cst = arith.constant 0.000000e+00 : f32
    %8 = vector.broadcast %cst : f32 to vector<64x128xf32>
    %9 = arith.maximumf %7, %8 : vector<64x128xf32>
    %10 = arith.truncf %9 : vector<64x128xf32> to vector<64x128xbf16>
    %c0_7 = arith.constant 0 : index
    %c0_8 = arith.constant 0 : index
    %c0_9 = arith.constant 0 : index
    %c0_10 = arith.constant 0 : index
    %11 = vector.load %arg5[%c0_7, %c0_8, %c0_9, %c0_10] : memref<1x1x64x128xbf16, #tpu.memory_space<vmem>>, vector<1x1x64x128xbf16>
    %12 = vector.shape_cast %11 : vector<1x1x64x128xbf16> to vector<64x128xbf16>
    %13 = vector.shape_cast %10 : vector<64x128xbf16> to vector<1x1x64x128xbf16>
    tpu.vector_store %arg5[%c0_7, %c0_8, %c0_9, %c0_10], %13 {strides = array<i32>} : memref<1x1x64x128xbf16, #tpu.memory_space<vmem>>, vector<1x1x64x128xbf16>,
    return
  }
  func.func @transform_0(%arg0: i32, %arg1: i32) -> (i32, i32, i32, i32) {
    %c0_i32 = arith.constant 0 : i32
    %c0_i32_0 = arith.constant 0 : i32
    %c0_i32_1 = arith.constant 0 : i32
    return %arg0, %arg1, %c0_i32, %c0_i32_0 : i32, i32, i32, i32
  }
  func.func @transform_1(%arg0: i32, %arg1: i32) -> (i32, i32) {
    %c0_i32 = arith.constant 0 : i32
    %c0_i32_0 = arith.constant 0 : i32
    %c0_i32_1 = arith.constant 0 : i32
    return %c0_i32, %c0_i32_0 : i32, i32
  }
  func.func @transform_2(%arg0: i32, %arg1: i32) -> (i32, i32) {
    %c0_i32 = arith.constant 0 : i32
    %c0_i32_0 = arith.constant 0 : i32
    %c0_i32_1 = arith.constant 0 : i32
    return %c0_i32, %c0_i32_0 : i32, i32
  }
  func.func @transform_3(%arg0: i32, %arg1: i32) -> (i32, i32, i32, i32) {
    %c0_i32 = arith.constant 0 : i32
    %c0_i32_0 = arith.constant 0 : i32
    %c0_i32_1 = arith.constant 0 : i32
    return %arg0, %arg1, %c0_i32, %c0_i32_0 : i32, i32, i32, i32
  }
}

module attributes {stable_mosaic.version = 11 : i64} {
  func.func @_bn_relu_kernel(%arg0: i32, %arg1: i32, %arg2: memref<1x1x4x128xf32, #tpu.memory_space<vmem>>, %arg3: memref<1x128xf32, #tpu.memory_space<vmem>>, %arg4: memref<1x128xf32, #tpu.memory_space<vmem>>, %arg5: memref<1x1x4x128xbf16, #tpu.memory_space<vmem>>) attributes {dimension_semantics = [#tpu.dimension_semantics<parallel>, #tpu.dimension_semantics<parallel>], iteration_bounds = array<i64: 2, 4>, scalar_prefetch = 0 : i64, scratch_operands = 0 : i64, tpu.core_type = #tpu.core_type<tc>, window_params = [{transform_indices = @transform_0, window_bounds = array<i64: 1, 1, 4, 128>}, {pipeline_mode = #tpu.pipeline_mode<synchronous>, transform_indices = @transform_1, window_bounds = array<i64: 1, 128>}, {pipeline_mode = #tpu.pipeline_mode<synchronous>, transform_indices = @transform_2, window_bounds = array<i64: 1, 128>}, {transform_indices = @transform_3, window_bounds = array<i64: 1, 1, 4, 128>}]} {
    %c0 = arith.constant 0 : index
    %c0_0 = arith.constant 0 : index
    %c0_1 = arith.constant 0 : index
    %c0_2 = arith.constant 0 : index
    %0 = vector.load %arg2[%c0, %c0_0, %c0_1, %c0_2] : memref<1x1x4x128xf32, #tpu.memory_space<vmem>>, vector<1x1x4x128xf32>
    %1 = vector.shape_cast %0 : vector<1x1x4x128xf32> to vector<4x128xf32>
    %c0_3 = arith.constant 0 : index
    %c0_4 = arith.constant 0 : index
    %2 = vector.load %arg3[%c0_3, %c0_4] : memref<1x128xf32, #tpu.memory_space<vmem>>, vector<1x128xf32>
    %3 = vector.broadcast %2 : vector<1x128xf32> to vector<4x128xf32>
    %4 = arith.mulf %1, %3 : vector<4x128xf32>
    %c0_5 = arith.constant 0 : index
    %c0_6 = arith.constant 0 : index
    %5 = vector.load %arg4[%c0_5, %c0_6] : memref<1x128xf32, #tpu.memory_space<vmem>>, vector<1x128xf32>
    %6 = vector.broadcast %5 : vector<1x128xf32> to vector<4x128xf32>
    %7 = arith.addf %4, %6 : vector<4x128xf32>
    %cst = arith.constant 0.000000e+00 : f32
    %8 = vector.broadcast %cst : f32 to vector<4x128xf32>
    %9 = arith.maximumf %7, %8 : vector<4x128xf32>
    %10 = arith.truncf %9 : vector<4x128xf32> to vector<4x128xbf16>
    %c0_7 = arith.constant 0 : index
    %c0_8 = arith.constant 0 : index
    %c0_9 = arith.constant 0 : index
    %c0_10 = arith.constant 0 : index
    %11 = vector.load %arg5[%c0_7, %c0_8, %c0_9, %c0_10] : memref<1x1x4x128xbf16, #tpu.memory_space<vmem>>, vector<1x1x4x128xbf16>
    %12 = vector.shape_cast %11 : vector<1x1x4x128xbf16> to vector<4x128xbf16>
    %13 = vector.shape_cast %10 : vector<4x128xbf16> to vector<1x1x4x128xbf16>
    tpu.vector_store %arg5[%c0_7, %c0_8, %c0_9, %c0_10], %13 {strides = array<i32>} : memref<1x1x4x128xbf16, #tpu.memory_space<vmem>>, vector<1x1x4x128xbf16>,
    return
  }
  func.func @transform_0(%arg0: i32, %arg1: i32) -> (i32, i32, i32, i32) {
    %c0_i32 = arith.constant 0 : i32
    %c0_i32_0 = arith.constant 0 : i32
    %c0_i32_1 = arith.constant 0 : i32
    return %arg0, %arg1, %c0_i32, %c0_i32_0 : i32, i32, i32, i32
  }
  func.func @transform_1(%arg0: i32, %arg1: i32) -> (i32, i32) {
    %c0_i32 = arith.constant 0 : i32
    %c0_i32_0 = arith.constant 0 : i32
    %c0_i32_1 = arith.constant 0 : i32
    return %c0_i32, %c0_i32_0 : i32, i32
  }
  func.func @transform_2(%arg0: i32, %arg1: i32) -> (i32, i32) {
    %c0_i32 = arith.constant 0 : i32
    %c0_i32_0 = arith.constant 0 : i32
    %c0_i32_1 = arith.constant 0 : i32
    return %c0_i32, %c0_i32_0 : i32, i32
  }
  func.func @transform_3(%arg0: i32, %arg1: i32) -> (i32, i32, i32, i32) {
    %c0_i32 = arith.constant 0 : i32
    %c0_i32_0 = arith.constant 0 : i32
    %c0_i32_1 = arith.constant 0 : i32
    return %arg0, %arg1, %c0_i32, %c0_i32_0 : i32, i32, i32, i32
  }
}

module attributes {stable_mosaic.version = 11 : i64} {
  func.func @_conv_stats_kernel(%arg0: i32, %arg1: i32, %arg2: memref<1x20x5x128xbf16, #tpu.memory_space<vmem>>, %arg3: memref<9x128x128xbf16, #tpu.memory_space<vmem>>, %arg4: memref<1x1x4x128xf32, #tpu.memory_space<vmem>>, %arg5: memref<1x1x2x128xf32, #tpu.memory_space<vmem>>) attributes {dimension_semantics = [#tpu.dimension_semantics<parallel>, #tpu.dimension_semantics<parallel>], iteration_bounds = array<i64: 2, 4>, scalar_prefetch = 0 : i64, scratch_operands = 0 : i64, tpu.core_type = #tpu.core_type<tc>, window_params = [{transform_indices = @transform_0, window_bounds = array<i64: 1, 20, 5, 128>}, {pipeline_mode = #tpu.pipeline_mode<synchronous>, transform_indices = @transform_1, window_bounds = array<i64: 9, 128, 128>}, {transform_indices = @transform_2, window_bounds = array<i64: 1, 1, 4, 128>}, {transform_indices = @transform_3, window_bounds = array<i64: 1, 1, 2, 128>}]} {
    %c1_i32 = arith.constant 1 : i32
    %0 = arith.muli %arg1, %c1_i32 : i32
    %c0_i32 = arith.constant 0 : i32
    %1 = arith.addi %c0_i32, %0 : i32
    %c0_i32_0 = arith.constant 0 : i32
    %2 = arith.addi %1, %c0_i32_0 : i32
    %c0 = arith.constant 0 : index
    %3 = arith.index_cast %2 : i32 to index
    %c0_1 = arith.constant 0 : index
    %c0_2 = arith.constant 0 : index
    %4 = vector.load %arg2[%c0, %3, %c0_1, %c0_2] : memref<1x20x5x128xbf16, #tpu.memory_space<vmem>>, vector<1x1x4x128xbf16>
    %5 = vector.shape_cast %4 : vector<1x1x4x128xbf16> to vector<1x4x128xbf16>
    %6 = vector.shape_cast %5 : vector<1x4x128xbf16> to vector<4x128xbf16>
    %c0_3 = arith.constant 0 : index
    %c0_4 = arith.constant 0 : index
    %c0_5 = arith.constant 0 : index
    %7 = vector.load %arg3[%c0_3, %c0_4, %c0_5] : memref<9x128x128xbf16, #tpu.memory_space<vmem>>, vector<1x128x128xbf16>
    %8 = vector.shape_cast %7 : vector<1x128x128xbf16> to vector<128x128xbf16>
    %cst = arith.constant dense<0.000000e+00> : vector<4x128xf32>
    %9 = tpu.matmul %6, %8, %cst {dimension_numbers = #tpu.dot_dimension_numbers<[1], [0], [0], [1], [0, 0, 1, 1], [], []>} : vector<4x128xbf16>, vector<128x128xbf16>, vector<4x128xf32> -> vector<4x128xf32>
    %c0_6 = arith.constant 0 : index
    %c0_7 = arith.constant 0 : index
    %c0_8 = arith.constant 0 : index
    %c0_9 = arith.constant 0 : index
    %10 = vector.load %arg4[%c0_6, %c0_7, %c0_8, %c0_9] : memref<1x1x4x128xf32, #tpu.memory_space<vmem>>, vector<1x1x4x128xf32>
    %11 = vector.shape_cast %10 : vector<1x1x4x128xf32> to vector<4x128xf32>
    %12 = vector.shape_cast %9 : vector<4x128xf32> to vector<1x1x4x128xf32>
    tpu.vector_store %arg4[%c0_6, %c0_7, %c0_8, %c0_9], %12 {strides = array<i32>} : memref<1x1x4x128xf32, #tpu.memory_space<vmem>>, vector<1x1x4x128xf32>,
    %c0_10 = arith.constant 0 : index
    %c0_11 = arith.constant 0 : index
    %c0_12 = arith.constant 0 : index
    %c0_13 = arith.constant 0 : index
    %13 = vector.load %arg4[%c0_10, %c0_11, %c0_12, %c0_13] : memref<1x1x4x128xf32, #tpu.memory_space<vmem>>, vector<1x1x4x128xf32>
    %14 = vector.shape_cast %13 : vector<1x1x4x128xf32> to vector<4x128xf32>
    %c5_i32 = arith.constant 5 : i32
    %15 = arith.addi %c5_i32, %0 : i32
    %c0_i32_14 = arith.constant 0 : i32
    %16 = arith.addi %15, %c0_i32_14 : i32
    %c0_15 = arith.constant 0 : index
    %17 = arith.index_cast %16 : i32 to index
    %c0_16 = arith.constant 0 : index
    %c0_17 = arith.constant 0 : index
    %18 = vector.load %arg2[%c0_15, %17, %c0_16, %c0_17] : memref<1x20x5x128xbf16, #tpu.memory_space<vmem>>, vector<1x1x4x128xbf16>
    %19 = vector.shape_cast %18 : vector<1x1x4x128xbf16> to vector<1x4x128xbf16>
    %20 = vector.shape_cast %19 : vector<1x4x128xbf16> to vector<4x128xbf16>
    %c1 = arith.constant 1 : index
    %c0_18 = arith.constant 0 : index
    %c0_19 = arith.constant 0 : index
    %21 = vector.load %arg3[%c1, %c0_18, %c0_19] : memref<9x128x128xbf16, #tpu.memory_space<vmem>>, vector<1x128x128xbf16>
    %22 = vector.shape_cast %21 : vector<1x128x128xbf16> to vector<128x128xbf16>
    %cst_20 = arith.constant dense<0.000000e+00> : vector<4x128xf32>
    %23 = tpu.matmul %20, %22, %cst_20 {dimension_numbers = #tpu.dot_dimension_numbers<[1], [0], [0], [1], [0, 0, 1, 1], [], []>} : vector<4x128xbf16>, vector<128x128xbf16>, vector<4x128xf32> -> vector<4x128xf32>
    %24 = arith.addf %14, %23 : vector<4x128xf32>
    %c0_21 = arith.constant 0 : index
    %c0_22 = arith.constant 0 : index
    %c0_23 = arith.constant 0 : index
    %c0_24 = arith.constant 0 : index
    %25 = vector.load %arg4[%c0_21, %c0_22, %c0_23, %c0_24] : memref<1x1x4x128xf32, #tpu.memory_space<vmem>>, vector<1x1x4x128xf32>
    %26 = vector.shape_cast %25 : vector<1x1x4x128xf32> to vector<4x128xf32>
    %27 = vector.shape_cast %24 : vector<4x128xf32> to vector<1x1x4x128xf32>
    tpu.vector_store %arg4[%c0_21, %c0_22, %c0_23, %c0_24], %27 {strides = array<i32>} : memref<1x1x4x128xf32, #tpu.memory_space<vmem>>, vector<1x1x4x128xf32>,
    %c0_25 = arith.constant 0 : index
    %c0_26 = arith.constant 0 : index
    %c0_27 = arith.constant 0 : index
    %c0_28 = arith.constant 0 : index
    %28 = vector.load %arg4[%c0_25, %c0_26, %c0_27, %c0_28] : memref<1x1x4x128xf32, #tpu.memory_space<vmem>>, vector<1x1x4x128xf32>
    %29 = vector.shape_cast %28 : vector<1x1x4x128xf32> to vector<4x128xf32>
    %c0_i32_29 = arith.constant 0 : i32
    %30 = arith.addi %c0_i32_29, %0 : i32
    %c0_i32_30 = arith.constant 0 : i32
    %31 = arith.addi %30, %c0_i32_30 : i32
    %c0_31 = arith.constant 0 : index
    %32 = arith.index_cast %31 : i32 to index
    %c1_32 = arith.constant 1 : index
    %c0_33 = arith.constant 0 : index
    %33 = vector.load %arg2[%c0_31, %32, %c1_32, %c0_33] : memref<1x20x5x128xbf16, #tpu.memory_space<vmem>>, vector<1x1x4x128xbf16>
    %34 = vector.shape_cast %33 : vector<1x1x4x128xbf16> to vector<1x4x128xbf16>
    %35 = vector.shape_cast %34 : vector<1x4x128xbf16> to vector<4x128xbf16>
    %c2 = arith.constant 2 : index
    %c0_34 = arith.constant 0 : index
    %c0_35 = arith.constant 0 : index
    %36 = vector.load %arg3[%c2, %c0_34, %c0_35] : memref<9x128x128xbf16, #tpu.memory_space<vmem>>, vector<1x128x128xbf16>
    %37 = vector.shape_cast %36 : vector<1x128x128xbf16> to vector<128x128xbf16>
    %cst_36 = arith.constant dense<0.000000e+00> : vector<4x128xf32>
    %38 = tpu.matmul %35, %37, %cst_36 {dimension_numbers = #tpu.dot_dimension_numbers<[1], [0], [0], [1], [0, 0, 1, 1], [], []>} : vector<4x128xbf16>, vector<128x128xbf16>, vector<4x128xf32> -> vector<4x128xf32>
    %39 = arith.addf %29, %38 : vector<4x128xf32>
    %c0_37 = arith.constant 0 : index
    %c0_38 = arith.constant 0 : index
    %c0_39 = arith.constant 0 : index
    %c0_40 = arith.constant 0 : index
    %40 = vector.load %arg4[%c0_37, %c0_38, %c0_39, %c0_40] : memref<1x1x4x128xf32, #tpu.memory_space<vmem>>, vector<1x1x4x128xf32>
    %41 = vector.shape_cast %40 : vector<1x1x4x128xf32> to vector<4x128xf32>
    %42 = vector.shape_cast %39 : vector<4x128xf32> to vector<1x1x4x128xf32>
    tpu.vector_store %arg4[%c0_37, %c0_38, %c0_39, %c0_40], %42 {strides = array<i32>} : memref<1x1x4x128xf32, #tpu.memory_space<vmem>>, vector<1x1x4x128xf32>,
    %c0_41 = arith.constant 0 : index
    %c0_42 = arith.constant 0 : index
    %c0_43 = arith.constant 0 : index
    %c0_44 = arith.constant 0 : index
    %43 = vector.load %arg4[%c0_41, %c0_42, %c0_43, %c0_44] : memref<1x1x4x128xf32, #tpu.memory_space<vmem>>, vector<1x1x4x128xf32>
    %44 = vector.shape_cast %43 : vector<1x1x4x128xf32> to vector<4x128xf32>
    %c10_i32 = arith.constant 10 : i32
    %45 = arith.addi %c10_i32, %0 : i32
    %c0_i32_45 = arith.constant 0 : i32
    %46 = arith.addi %45, %c0_i32_45 : i32
    %c0_46 = arith.constant 0 : index
    %47 = arith.index_cast %46 : i32 to index
    %c0_47 = arith.constant 0 : index
    %c0_48 = arith.constant 0 : index
    %48 = vector.load %arg2[%c0_46, %47, %c0_47, %c0_48] : memref<1x20x5x128xbf16, #tpu.memory_space<vmem>>, vector<1x1x4x128xbf16>
    %49 = vector.shape_cast %48 : vector<1x1x4x128xbf16> to vector<1x4x128xbf16>
    %50 = vector.shape_cast %49 : vector<1x4x128xbf16> to vector<4x128xbf16>
    %c3 = arith.constant 3 : index
    %c0_49 = arith.constant 0 : index
    %c0_50 = arith.constant 0 : index
    %51 = vector.load %arg3[%c3, %c0_49, %c0_50] : memref<9x128x128xbf16, #tpu.memory_space<vmem>>, vector<1x128x128xbf16>
    %52 = vector.shape_cast %51 : vector<1x128x128xbf16> to vector<128x128xbf16>
    %cst_51 = arith.constant dense<0.000000e+00> : vector<4x128xf32>
    %53 = tpu.matmul %50, %52, %cst_51 {dimension_numbers = #tpu.dot_dimension_numbers<[1], [0], [0], [1], [0, 0, 1, 1], [], []>} : vector<4x128xbf16>, vector<128x128xbf16>, vector<4x128xf32> -> vector<4x128xf32>
    %54 = arith.addf %44, %53 : vector<4x128xf32>
    %c0_52 = arith.constant 0 : index
    %c0_53 = arith.constant 0 : index
    %c0_54 = arith.constant 0 : index
    %c0_55 = arith.constant 0 : index
    %55 = vector.load %arg4[%c0_52, %c0_53, %c0_54, %c0_55] : memref<1x1x4x128xf32, #tpu.memory_space<vmem>>, vector<1x1x4x128xf32>
    %56 = vector.shape_cast %55 : vector<1x1x4x128xf32> to vector<4x128xf32>
    %57 = vector.shape_cast %54 : vector<4x128xf32> to vector<1x1x4x128xf32>
    tpu.vector_store %arg4[%c0_52, %c0_53, %c0_54, %c0_55], %57 {strides = array<i32>} : memref<1x1x4x128xf32, #tpu.memory_space<vmem>>, vector<1x1x4x128xf32>,
    %c0_56 = arith.constant 0 : index
    %c0_57 = arith.constant 0 : index
    %c0_58 = arith.constant 0 : index
    %c0_59 = arith.constant 0 : index
    %58 = vector.load %arg4[%c0_56, %c0_57, %c0_58, %c0_59] : memref<1x1x4x128xf32, #tpu.memory_space<vmem>>, vector<1x1x4x128xf32>
    %59 = vector.shape_cast %58 : vector<1x1x4x128xf32> to vector<4x128xf32>
    %c15_i32 = arith.constant 15 : i32
    %60 = arith.addi %c15_i32, %0 : i32
    %c0_i32_60 = arith.constant 0 : i32
    %61 = arith.addi %60, %c0_i32_60 : i32
    %c0_61 = arith.constant 0 : index
    %62 = arith.index_cast %61 : i32 to index
    %c0_62 = arith.constant 0 : index
    %c0_63 = arith.constant 0 : index
    %63 = vector.load %arg2[%c0_61, %62, %c0_62, %c0_63] : memref<1x20x5x128xbf16, #tpu.memory_space<vmem>>, vector<1x1x4x128xbf16>
    %64 = vector.shape_cast %63 : vector<1x1x4x128xbf16> to vector<1x4x128xbf16>
    %65 = vector.shape_cast %64 : vector<1x4x128xbf16> to vector<4x128xbf16>
    %c4 = arith.constant 4 : index
    %c0_64 = arith.constant 0 : index
    %c0_65 = arith.constant 0 : index
    %66 = vector.load %arg3[%c4, %c0_64, %c0_65] : memref<9x128x128xbf16, #tpu.memory_space<vmem>>, vector<1x128x128xbf16>
    %67 = vector.shape_cast %66 : vector<1x128x128xbf16> to vector<128x128xbf16>
    %cst_66 = arith.constant dense<0.000000e+00> : vector<4x128xf32>
    %68 = tpu.matmul %65, %67, %cst_66 {dimension_numbers = #tpu.dot_dimension_numbers<[1], [0], [0], [1], [0, 0, 1, 1], [], []>} : vector<4x128xbf16>, vector<128x128xbf16>, vector<4x128xf32> -> vector<4x128xf32>
    %69 = arith.addf %59, %68 : vector<4x128xf32>
    %c0_67 = arith.constant 0 : index
    %c0_68 = arith.constant 0 : index
    %c0_69 = arith.constant 0 : index
    %c0_70 = arith.constant 0 : index
    %70 = vector.load %arg4[%c0_67, %c0_68, %c0_69, %c0_70] : memref<1x1x4x128xf32, #tpu.memory_space<vmem>>, vector<1x1x4x128xf32>
    %71 = vector.shape_cast %70 : vector<1x1x4x128xf32> to vector<4x128xf32>
    %72 = vector.shape_cast %69 : vector<4x128xf32> to vector<1x1x4x128xf32>
    tpu.vector_store %arg4[%c0_67, %c0_68, %c0_69, %c0_70], %72 {strides = array<i32>} : memref<1x1x4x128xf32, #tpu.memory_space<vmem>>, vector<1x1x4x128xf32>,
    %c0_71 = arith.constant 0 : index
    %c0_72 = arith.constant 0 : index
    %c0_73 = arith.constant 0 : index
    %c0_74 = arith.constant 0 : index
    %73 = vector.load %arg4[%c0_71, %c0_72, %c0_73, %c0_74] : memref<1x1x4x128xf32, #tpu.memory_space<vmem>>, vector<1x1x4x128xf32>
    %74 = vector.shape_cast %73 : vector<1x1x4x128xf32> to vector<4x128xf32>
    %c10_i32_75 = arith.constant 10 : i32
    %75 = arith.addi %c10_i32_75, %0 : i32
    %c0_i32_76 = arith.constant 0 : i32
    %76 = arith.addi %75, %c0_i32_76 : i32
    %c0_77 = arith.constant 0 : index
    %77 = arith.index_cast %76 : i32 to index
    %c1_78 = arith.constant 1 : index
    %c0_79 = arith.constant 0 : index
    %78 = vector.load %arg2[%c0_77, %77, %c1_78, %c0_79] : memref<1x20x5x128xbf16, #tpu.memory_space<vmem>>, vector<1x1x4x128xbf16>
    %79 = vector.shape_cast %78 : vector<1x1x4x128xbf16> to vector<1x4x128xbf16>
    %80 = vector.shape_cast %79 : vector<1x4x128xbf16> to vector<4x128xbf16>
    %c5 = arith.constant 5 : index
    %c0_80 = arith.constant 0 : index
    %c0_81 = arith.constant 0 : index
    %81 = vector.load %arg3[%c5, %c0_80, %c0_81] : memref<9x128x128xbf16, #tpu.memory_space<vmem>>, vector<1x128x128xbf16>
    %82 = vector.shape_cast %81 : vector<1x128x128xbf16> to vector<128x128xbf16>
    %cst_82 = arith.constant dense<0.000000e+00> : vector<4x128xf32>
    %83 = tpu.matmul %80, %82, %cst_82 {dimension_numbers = #tpu.dot_dimension_numbers<[1], [0], [0], [1], [0, 0, 1, 1], [], []>} : vector<4x128xbf16>, vector<128x128xbf16>, vector<4x128xf32> -> vector<4x128xf32>
    %84 = arith.addf %74, %83 : vector<4x128xf32>
    %c0_83 = arith.constant 0 : index
    %c0_84 = arith.constant 0 : index
    %c0_85 = arith.constant 0 : index
    %c0_86 = arith.constant 0 : index
    %85 = vector.load %arg4[%c0_83, %c0_84, %c0_85, %c0_86] : memref<1x1x4x128xf32, #tpu.memory_space<vmem>>, vector<1x1x4x128xf32>
    %86 = vector.shape_cast %85 : vector<1x1x4x128xf32> to vector<4x128xf32>
    %87 = vector.shape_cast %84 : vector<4x128xf32> to vector<1x1x4x128xf32>
    tpu.vector_store %arg4[%c0_83, %c0_84, %c0_85, %c0_86], %87 {strides = array<i32>} : memref<1x1x4x128xf32, #tpu.memory_space<vmem>>, vector<1x1x4x128xf32>,
    %c0_87 = arith.constant 0 : index
    %c0_88 = arith.constant 0 : index
    %c0_89 = arith.constant 0 : index
    %c0_90 = arith.constant 0 : index
    %88 = vector.load %arg4[%c0_87, %c0_88, %c0_89, %c0_90] : memref<1x1x4x128xf32, #tpu.memory_space<vmem>>, vector<1x1x4x128xf32>
    %89 = vector.shape_cast %88 : vector<1x1x4x128xf32> to vector<4x128xf32>
    %c0_i32_91 = arith.constant 0 : i32
    %90 = arith.addi %c0_i32_91, %0 : i32
    %c1_i32_92 = arith.constant 1 : i32
    %91 = arith.addi %90, %c1_i32_92 : i32
    %c0_93 = arith.constant 0 : index
    %92 = arith.index_cast %91 : i32 to index
    %c0_94 = arith.constant 0 : index
    %c0_95 = arith.constant 0 : index
    %93 = vector.load %arg2[%c0_93, %92, %c0_94, %c0_95] : memref<1x20x5x128xbf16, #tpu.memory_space<vmem>>, vector<1x1x4x128xbf16>
    %94 = vector.shape_cast %93 : vector<1x1x4x128xbf16> to vector<1x4x128xbf16>
    %95 = vector.shape_cast %94 : vector<1x4x128xbf16> to vector<4x128xbf16>
    %c6 = arith.constant 6 : index
    %c0_96 = arith.constant 0 : index
    %c0_97 = arith.constant 0 : index
    %96 = vector.load %arg3[%c6, %c0_96, %c0_97] : memref<9x128x128xbf16, #tpu.memory_space<vmem>>, vector<1x128x128xbf16>
    %97 = vector.shape_cast %96 : vector<1x128x128xbf16> to vector<128x128xbf16>
    %cst_98 = arith.constant dense<0.000000e+00> : vector<4x128xf32>
    %98 = tpu.matmul %95, %97, %cst_98 {dimension_numbers = #tpu.dot_dimension_numbers<[1], [0], [0], [1], [0, 0, 1, 1], [], []>} : vector<4x128xbf16>, vector<128x128xbf16>, vector<4x128xf32> -> vector<4x128xf32>
    %99 = arith.addf %89, %98 : vector<4x128xf32>
    %c0_99 = arith.constant 0 : index
    %c0_100 = arith.constant 0 : index
    %c0_101 = arith.constant 0 : index
    %c0_102 = arith.constant 0 : index
    %100 = vector.load %arg4[%c0_99, %c0_100, %c0_101, %c0_102] : memref<1x1x4x128xf32, #tpu.memory_space<vmem>>, vector<1x1x4x128xf32>
    %101 = vector.shape_cast %100 : vector<1x1x4x128xf32> to vector<4x128xf32>
    %102 = vector.shape_cast %99 : vector<4x128xf32> to vector<1x1x4x128xf32>
    tpu.vector_store %arg4[%c0_99, %c0_100, %c0_101, %c0_102], %102 {strides = array<i32>} : memref<1x1x4x128xf32, #tpu.memory_space<vmem>>, vector<1x1x4x128xf32>,
    %c0_103 = arith.constant 0 : index
    %c0_104 = arith.constant 0 : index
    %c0_105 = arith.constant 0 : index
    %c0_106 = arith.constant 0 : index
    %103 = vector.load %arg4[%c0_103, %c0_104, %c0_105, %c0_106] : memref<1x1x4x128xf32, #tpu.memory_space<vmem>>, vector<1x1x4x128xf32>
    %104 = vector.shape_cast %103 : vector<1x1x4x128xf32> to vector<4x128xf32>
    %c5_i32_107 = arith.constant 5 : i32
    %105 = arith.addi %c5_i32_107, %0 : i32
    %c1_i32_108 = arith.constant 1 : i32
    %106 = arith.addi %105, %c1_i32_108 : i32
    %c0_109 = arith.constant 0 : index
    %107 = arith.index_cast %106 : i32 to index
    %c0_110 = arith.constant 0 : index
    %c0_111 = arith.constant 0 : index
    %108 = vector.load %arg2[%c0_109, %107, %c0_110, %c0_111] : memref<1x20x5x128xbf16, #tpu.memory_space<vmem>>, vector<1x1x4x128xbf16>
    %109 = vector.shape_cast %108 : vector<1x1x4x128xbf16> to vector<1x4x128xbf16>
    %110 = vector.shape_cast %109 : vector<1x4x128xbf16> to vector<4x128xbf16>
    %c7 = arith.constant 7 : index
    %c0_112 = arith.constant 0 : index
    %c0_113 = arith.constant 0 : index
    %111 = vector.load %arg3[%c7, %c0_112, %c0_113] : memref<9x128x128xbf16, #tpu.memory_space<vmem>>, vector<1x128x128xbf16>
    %112 = vector.shape_cast %111 : vector<1x128x128xbf16> to vector<128x128xbf16>
    %cst_114 = arith.constant dense<0.000000e+00> : vector<4x128xf32>
    %113 = tpu.matmul %110, %112, %cst_114 {dimension_numbers = #tpu.dot_dimension_numbers<[1], [0], [0], [1], [0, 0, 1, 1], [], []>} : vector<4x128xbf16>, vector<128x128xbf16>, vector<4x128xf32> -> vector<4x128xf32>
    %114 = arith.addf %104, %113 : vector<4x128xf32>
    %c0_115 = arith.constant 0 : index
    %c0_116 = arith.constant 0 : index
    %c0_117 = arith.constant 0 : index
    %c0_118 = arith.constant 0 : index
    %115 = vector.load %arg4[%c0_115, %c0_116, %c0_117, %c0_118] : memref<1x1x4x128xf32, #tpu.memory_space<vmem>>, vector<1x1x4x128xf32>
    %116 = vector.shape_cast %115 : vector<1x1x4x128xf32> to vector<4x128xf32>
    %117 = vector.shape_cast %114 : vector<4x128xf32> to vector<1x1x4x128xf32>
    tpu.vector_store %arg4[%c0_115, %c0_116, %c0_117, %c0_118], %117 {strides = array<i32>} : memref<1x1x4x128xf32, #tpu.memory_space<vmem>>, vector<1x1x4x128xf32>,
    %c0_119 = arith.constant 0 : index
    %c0_120 = arith.constant 0 : index
    %c0_121 = arith.constant 0 : index
    %c0_122 = arith.constant 0 : index
    %118 = vector.load %arg4[%c0_119, %c0_120, %c0_121, %c0_122] : memref<1x1x4x128xf32, #tpu.memory_space<vmem>>, vector<1x1x4x128xf32>
    %119 = vector.shape_cast %118 : vector<1x1x4x128xf32> to vector<4x128xf32>
    %c0_i32_123 = arith.constant 0 : i32
    %120 = arith.addi %c0_i32_123, %0 : i32
    %c1_i32_124 = arith.constant 1 : i32
    %121 = arith.addi %120, %c1_i32_124 : i32
    %c0_125 = arith.constant 0 : index
    %122 = arith.index_cast %121 : i32 to index
    %c1_126 = arith.constant 1 : index
    %c0_127 = arith.constant 0 : index
    %123 = vector.load %arg2[%c0_125, %122, %c1_126, %c0_127] : memref<1x20x5x128xbf16, #tpu.memory_space<vmem>>, vector<1x1x4x128xbf16>
    %124 = vector.shape_cast %123 : vector<1x1x4x128xbf16> to vector<1x4x128xbf16>
    %125 = vector.shape_cast %124 : vector<1x4x128xbf16> to vector<4x128xbf16>
    %c8 = arith.constant 8 : index
    %c0_128 = arith.constant 0 : index
    %c0_129 = arith.constant 0 : index
    %126 = vector.load %arg3[%c8, %c0_128, %c0_129] : memref<9x128x128xbf16, #tpu.memory_space<vmem>>, vector<1x128x128xbf16>
    %127 = vector.shape_cast %126 : vector<1x128x128xbf16> to vector<128x128xbf16>
    %cst_130 = arith.constant dense<0.000000e+00> : vector<4x128xf32>
    %128 = tpu.matmul %125, %127, %cst_130 {dimension_numbers = #tpu.dot_dimension_numbers<[1], [0], [0], [1], [0, 0, 1, 1], [], []>} : vector<4x128xbf16>, vector<128x128xbf16>, vector<4x128xf32> -> vector<4x128xf32>
    %129 = arith.addf %119, %128 : vector<4x128xf32>
    %c0_131 = arith.constant 0 : index
    %c0_132 = arith.constant 0 : index
    %c0_133 = arith.constant 0 : index
    %c0_134 = arith.constant 0 : index
    %130 = vector.load %arg4[%c0_131, %c0_132, %c0_133, %c0_134] : memref<1x1x4x128xf32, #tpu.memory_space<vmem>>, vector<1x1x4x128xf32>
    %131 = vector.shape_cast %130 : vector<1x1x4x128xf32> to vector<4x128xf32>
    %132 = vector.shape_cast %129 : vector<4x128xf32> to vector<1x1x4x128xf32>
    tpu.vector_store %arg4[%c0_131, %c0_132, %c0_133, %c0_134], %132 {strides = array<i32>} : memref<1x1x4x128xf32, #tpu.memory_space<vmem>>, vector<1x1x4x128xf32>,
    %c0_135 = arith.constant 0 : index
    %c0_136 = arith.constant 0 : index
    %c0_137 = arith.constant 0 : index
    %c0_138 = arith.constant 0 : index
    %133 = vector.load %arg4[%c0_135, %c0_136, %c0_137, %c0_138] : memref<1x1x4x128xf32, #tpu.memory_space<vmem>>, vector<1x1x4x128xf32>
    %134 = vector.shape_cast %133 : vector<1x1x4x128xf32> to vector<4x128xf32>
    %cst_139 = arith.constant dense<0.000000e+00> : vector<128xf32>
    %135 = vector.multi_reduction <add>, %134, %cst_139 [0] : vector<4x128xf32> to vector<128xf32>
    %136 = vector.shape_cast %135 : vector<128xf32> to vector<1x128xf32>
    %c0_140 = arith.constant 0 : index
    %c0_141 = arith.constant 0 : index
    %c0_142 = arith.constant 0 : index
    %c0_143 = arith.constant 0 : index
    %137 = vector.load %arg5[%c0_140, %c0_141, %c0_142, %c0_143] : memref<1x1x2x128xf32, #tpu.memory_space<vmem>>, vector<1x1x1x128xf32>
    %138 = vector.shape_cast %137 : vector<1x1x1x128xf32> to vector<1x128xf32>
    %139 = vector.shape_cast %136 : vector<1x128xf32> to vector<1x1x1x128xf32>
    tpu.vector_store %arg5[%c0_140, %c0_141, %c0_142, %c0_143], %139 {strides = array<i32>} : memref<1x1x2x128xf32, #tpu.memory_space<vmem>>, vector<1x1x1x128xf32>,
    %140 = arith.mulf %134, %134 : vector<4x128xf32>
    %cst_144 = arith.constant dense<0.000000e+00> : vector<128xf32>
    %141 = vector.multi_reduction <add>, %140, %cst_144 [0] : vector<4x128xf32> to vector<128xf32>
    %142 = vector.shape_cast %141 : vector<128xf32> to vector<1x128xf32>
    %c0_145 = arith.constant 0 : index
    %c0_146 = arith.constant 0 : index
    %c1_147 = arith.constant 1 : index
    %c0_148 = arith.constant 0 : index
    %143 = vector.load %arg5[%c0_145, %c0_146, %c1_147, %c0_148] : memref<1x1x2x128xf32, #tpu.memory_space<vmem>>, vector<1x1x1x128xf32>
    %144 = vector.shape_cast %143 : vector<1x1x1x128xf32> to vector<1x128xf32>
    %145 = vector.shape_cast %142 : vector<1x128xf32> to vector<1x1x1x128xf32>
    tpu.vector_store %arg5[%c0_145, %c0_146, %c1_147, %c0_148], %145 {strides = array<i32>} : memref<1x1x2x128xf32, #tpu.memory_space<vmem>>, vector<1x1x1x128xf32>,
    return
  }
  func.func @transform_0(%arg0: i32, %arg1: i32) -> (i32, i32, i32, i32) {
    %c0_i32 = arith.constant 0 : i32
    %c0_i32_0 = arith.constant 0 : i32
    %c0_i32_1 = arith.constant 0 : i32
    %c0_i32_2 = arith.constant 0 : i32
    return %arg0, %c0_i32, %c0_i32_0, %c0_i32_1 : i32, i32, i32, i32
  }
  func.func @transform_1(%arg0: i32, %arg1: i32) -> (i32, i32, i32) {
    %c0_i32 = arith.constant 0 : i32
    %c0_i32_0 = arith.constant 0 : i32
    %c0_i32_1 = arith.constant 0 : i32
    %c0_i32_2 = arith.constant 0 : i32
    return %c0_i32, %c0_i32_0, %c0_i32_1 : i32, i32, i32
  }
  func.func @transform_2(%arg0: i32, %arg1: i32) -> (i32, i32, i32, i32) {
    %c0_i32 = arith.constant 0 : i32
    %c0_i32_0 = arith.constant 0 : i32
    %c0_i32_1 = arith.constant 0 : i32
    return %arg0, %arg1, %c0_i32, %c0_i32_0 : i32, i32, i32, i32
  }
  func.func @transform_3(%arg0: i32, %arg1: i32) -> (i32, i32, i32, i32) {
    %c0_i32 = arith.constant 0 : i32
    %c0_i32_0 = arith.constant 0 : i32
    %c0_i32_1 = arith.constant 0 : i32
    return %arg0, %arg1, %c0_i32, %c0_i32_0 : i32, i32, i32, i32
  }
}

module attributes {stable_mosaic.version = 11 : i64} {
  func.func @_conv_stats_kernel(%arg0: i32, %arg1: i32, %arg2: memref<1x6x6x128xbf16, #tpu.memory_space<vmem>>, %arg3: memref<9x128x256xbf16, #tpu.memory_space<vmem>>, %arg4: memref<1x1x4x256xf32, #tpu.memory_space<vmem>>, %arg5: memref<1x1x2x256xf32, #tpu.memory_space<vmem>>) attributes {dimension_semantics = [#tpu.dimension_semantics<parallel>, #tpu.dimension_semantics<parallel>], iteration_bounds = array<i64: 2, 4>, scalar_prefetch = 0 : i64, scratch_operands = 0 : i64, tpu.core_type = #tpu.core_type<tc>, window_params = [{transform_indices = @transform_0, window_bounds = array<i64: 1, 6, 6, 128>}, {pipeline_mode = #tpu.pipeline_mode<synchronous>, transform_indices = @transform_1, window_bounds = array<i64: 9, 128, 256>}, {transform_indices = @transform_2, window_bounds = array<i64: 1, 1, 4, 256>}, {transform_indices = @transform_3, window_bounds = array<i64: 1, 1, 2, 256>}]} {
    %c1_i32 = arith.constant 1 : i32
    %0 = arith.muli %arg1, %c1_i32 : i32
    %c0_i32 = arith.constant 0 : i32
    %1 = arith.addi %c0_i32, %0 : i32
    %c0_i32_0 = arith.constant 0 : i32
    %2 = arith.addi %1, %c0_i32_0 : i32
    %c0 = arith.constant 0 : index
    %3 = arith.index_cast %2 : i32 to index
    %c0_1 = arith.constant 0 : index
    %c0_2 = arith.constant 0 : index
    %4 = vector.load %arg2[%c0, %3, %c0_1, %c0_2] : memref<1x6x6x128xbf16, #tpu.memory_space<vmem>>, vector<1x1x4x128xbf16>
    %5 = vector.shape_cast %4 : vector<1x1x4x128xbf16> to vector<1x4x128xbf16>
    %6 = vector.shape_cast %5 : vector<1x4x128xbf16> to vector<4x128xbf16>
    %c0_3 = arith.constant 0 : index
    %c0_4 = arith.constant 0 : index
    %c0_5 = arith.constant 0 : index
    %7 = vector.load %arg3[%c0_3, %c0_4, %c0_5] : memref<9x128x256xbf16, #tpu.memory_space<vmem>>, vector<1x128x256xbf16>
    %8 = vector.shape_cast %7 : vector<1x128x256xbf16> to vector<128x256xbf16>
    %cst = arith.constant dense<0.000000e+00> : vector<4x256xf32>
    %9 = tpu.matmul %6, %8, %cst {dimension_numbers = #tpu.dot_dimension_numbers<[1], [0], [0], [1], [0, 0, 1, 1], [], []>} : vector<4x128xbf16>, vector<128x256xbf16>, vector<4x256xf32> -> vector<4x256xf32>
    %c0_6 = arith.constant 0 : index
    %c0_7 = arith.constant 0 : index
    %c0_8 = arith.constant 0 : index
    %c0_9 = arith.constant 0 : index
    %10 = vector.load %arg4[%c0_6, %c0_7, %c0_8, %c0_9] : memref<1x1x4x256xf32, #tpu.memory_space<vmem>>, vector<1x1x4x256xf32>
    %11 = vector.shape_cast %10 : vector<1x1x4x256xf32> to vector<4x256xf32>
    %12 = vector.shape_cast %9 : vector<4x256xf32> to vector<1x1x4x256xf32>
    tpu.vector_store %arg4[%c0_6, %c0_7, %c0_8, %c0_9], %12 {strides = array<i32>} : memref<1x1x4x256xf32, #tpu.memory_space<vmem>>, vector<1x1x4x256xf32>,
    %c0_10 = arith.constant 0 : index
    %c0_11 = arith.constant 0 : index
    %c0_12 = arith.constant 0 : index
    %c0_13 = arith.constant 0 : index
    %13 = vector.load %arg4[%c0_10, %c0_11, %c0_12, %c0_13] : memref<1x1x4x256xf32, #tpu.memory_space<vmem>>, vector<1x1x4x256xf32>
    %14 = vector.shape_cast %13 : vector<1x1x4x256xf32> to vector<4x256xf32>
    %c0_i32_14 = arith.constant 0 : i32
    %15 = arith.addi %c0_i32_14, %0 : i32
    %c0_i32_15 = arith.constant 0 : i32
    %16 = arith.addi %15, %c0_i32_15 : i32
    %c0_16 = arith.constant 0 : index
    %17 = arith.index_cast %16 : i32 to index
    %c1 = arith.constant 1 : index
    %c0_17 = arith.constant 0 : index
    %18 = vector.load %arg2[%c0_16, %17, %c1, %c0_17] : memref<1x6x6x128xbf16, #tpu.memory_space<vmem>>, vector<1x1x4x128xbf16>
    %19 = vector.shape_cast %18 : vector<1x1x4x128xbf16> to vector<1x4x128xbf16>
    %20 = vector.shape_cast %19 : vector<1x4x128xbf16> to vector<4x128xbf16>
    %c1_18 = arith.constant 1 : index
    %c0_19 = arith.constant 0 : index
    %c0_20 = arith.constant 0 : index
    %21 = vector.load %arg3[%c1_18, %c0_19, %c0_20] : memref<9x128x256xbf16, #tpu.memory_space<vmem>>, vector<1x128x256xbf16>
    %22 = vector.shape_cast %21 : vector<1x128x256xbf16> to vector<128x256xbf16>
    %cst_21 = arith.constant dense<0.000000e+00> : vector<4x256xf32>
    %23 = tpu.matmul %20, %22, %cst_21 {dimension_numbers = #tpu.dot_dimension_numbers<[1], [0], [0], [1], [0, 0, 1, 1], [], []>} : vector<4x128xbf16>, vector<128x256xbf16>, vector<4x256xf32> -> vector<4x256xf32>
    %24 = arith.addf %14, %23 : vector<4x256xf32>
    %c0_22 = arith.constant 0 : index
    %c0_23 = arith.constant 0 : index
    %c0_24 = arith.constant 0 : index
    %c0_25 = arith.constant 0 : index
    %25 = vector.load %arg4[%c0_22, %c0_23, %c0_24, %c0_25] : memref<1x1x4x256xf32, #tpu.memory_space<vmem>>, vector<1x1x4x256xf32>
    %26 = vector.shape_cast %25 : vector<1x1x4x256xf32> to vector<4x256xf32>
    %27 = vector.shape_cast %24 : vector<4x256xf32> to vector<1x1x4x256xf32>
    tpu.vector_store %arg4[%c0_22, %c0_23, %c0_24, %c0_25], %27 {strides = array<i32>} : memref<1x1x4x256xf32, #tpu.memory_space<vmem>>, vector<1x1x4x256xf32>,
    %c0_26 = arith.constant 0 : index
    %c0_27 = arith.constant 0 : index
    %c0_28 = arith.constant 0 : index
    %c0_29 = arith.constant 0 : index
    %28 = vector.load %arg4[%c0_26, %c0_27, %c0_28, %c0_29] : memref<1x1x4x256xf32, #tpu.memory_space<vmem>>, vector<1x1x4x256xf32>
    %29 = vector.shape_cast %28 : vector<1x1x4x256xf32> to vector<4x256xf32>
    %c0_i32_30 = arith.constant 0 : i32
    %30 = arith.addi %c0_i32_30, %0 : i32
    %c0_i32_31 = arith.constant 0 : i32
    %31 = arith.addi %30, %c0_i32_31 : i32
    %c0_32 = arith.constant 0 : index
    %32 = arith.index_cast %31 : i32 to index
    %c2 = arith.constant 2 : index
    %c0_33 = arith.constant 0 : index
    %33 = vector.load %arg2[%c0_32, %32, %c2, %c0_33] : memref<1x6x6x128xbf16, #tpu.memory_space<vmem>>, vector<1x1x4x128xbf16>
    %34 = vector.shape_cast %33 : vector<1x1x4x128xbf16> to vector<1x4x128xbf16>
    %35 = vector.shape_cast %34 : vector<1x4x128xbf16> to vector<4x128xbf16>
    %c2_34 = arith.constant 2 : index
    %c0_35 = arith.constant 0 : index
    %c0_36 = arith.constant 0 : index
    %36 = vector.load %arg3[%c2_34, %c0_35, %c0_36] : memref<9x128x256xbf16, #tpu.memory_space<vmem>>, vector<1x128x256xbf16>
    %37 = vector.shape_cast %36 : vector<1x128x256xbf16> to vector<128x256xbf16>
    %cst_37 = arith.constant dense<0.000000e+00> : vector<4x256xf32>
    %38 = tpu.matmul %35, %37, %cst_37 {dimension_numbers = #tpu.dot_dimension_numbers<[1], [0], [0], [1], [0, 0, 1, 1], [], []>} : vector<4x128xbf16>, vector<128x256xbf16>, vector<4x256xf32> -> vector<4x256xf32>
    %39 = arith.addf %29, %38 : vector<4x256xf32>
    %c0_38 = arith.constant 0 : index
    %c0_39 = arith.constant 0 : index
    %c0_40 = arith.constant 0 : index
    %c0_41 = arith.constant 0 : index
    %40 = vector.load %arg4[%c0_38, %c0_39, %c0_40, %c0_41] : memref<1x1x4x256xf32, #tpu.memory_space<vmem>>, vector<1x1x4x256xf32>
    %41 = vector.shape_cast %40 : vector<1x1x4x256xf32> to vector<4x256xf32>
    %42 = vector.shape_cast %39 : vector<4x256xf32> to vector<1x1x4x256xf32>
    tpu.vector_store %arg4[%c0_38, %c0_39, %c0_40, %c0_41], %42 {strides = array<i32>} : memref<1x1x4x256xf32, #tpu.memory_space<vmem>>, vector<1x1x4x256xf32>,
    %c0_42 = arith.constant 0 : index
    %c0_43 = arith.constant 0 : index
    %c0_44 = arith.constant 0 : index
    %c0_45 = arith.constant 0 : index
    %43 = vector.load %arg4[%c0_42, %c0_43, %c0_44, %c0_45] : memref<1x1x4x256xf32, #tpu.memory_space<vmem>>, vector<1x1x4x256xf32>
    %44 = vector.shape_cast %43 : vector<1x1x4x256xf32> to vector<4x256xf32>
    %c0_i32_46 = arith.constant 0 : i32
    %45 = arith.addi %c0_i32_46, %0 : i32
    %c1_i32_47 = arith.constant 1 : i32
    %46 = arith.addi %45, %c1_i32_47 : i32
    %c0_48 = arith.constant 0 : index
    %47 = arith.index_cast %46 : i32 to index
    %c0_49 = arith.constant 0 : index
    %c0_50 = arith.constant 0 : index
    %48 = vector.load %arg2[%c0_48, %47, %c0_49, %c0_50] : memref<1x6x6x128xbf16, #tpu.memory_space<vmem>>, vector<1x1x4x128xbf16>
    %49 = vector.shape_cast %48 : vector<1x1x4x128xbf16> to vector<1x4x128xbf16>
    %50 = vector.shape_cast %49 : vector<1x4x128xbf16> to vector<4x128xbf16>
    %c3 = arith.constant 3 : index
    %c0_51 = arith.constant 0 : index
    %c0_52 = arith.constant 0 : index
    %51 = vector.load %arg3[%c3, %c0_51, %c0_52] : memref<9x128x256xbf16, #tpu.memory_space<vmem>>, vector<1x128x256xbf16>
    %52 = vector.shape_cast %51 : vector<1x128x256xbf16> to vector<128x256xbf16>
    %cst_53 = arith.constant dense<0.000000e+00> : vector<4x256xf32>
    %53 = tpu.matmul %50, %52, %cst_53 {dimension_numbers = #tpu.dot_dimension_numbers<[1], [0], [0], [1], [0, 0, 1, 1], [], []>} : vector<4x128xbf16>, vector<128x256xbf16>, vector<4x256xf32> -> vector<4x256xf32>
    %54 = arith.addf %44, %53 : vector<4x256xf32>
    %c0_54 = arith.constant 0 : index
    %c0_55 = arith.constant 0 : index
    %c0_56 = arith.constant 0 : index
    %c0_57 = arith.constant 0 : index
    %55 = vector.load %arg4[%c0_54, %c0_55, %c0_56, %c0_57] : memref<1x1x4x256xf32, #tpu.memory_space<vmem>>, vector<1x1x4x256xf32>
    %56 = vector.shape_cast %55 : vector<1x1x4x256xf32> to vector<4x256xf32>
    %57 = vector.shape_cast %54 : vector<4x256xf32> to vector<1x1x4x256xf32>
    tpu.vector_store %arg4[%c0_54, %c0_55, %c0_56, %c0_57], %57 {strides = array<i32>} : memref<1x1x4x256xf32, #tpu.memory_space<vmem>>, vector<1x1x4x256xf32>,
    %c0_58 = arith.constant 0 : index
    %c0_59 = arith.constant 0 : index
    %c0_60 = arith.constant 0 : index
    %c0_61 = arith.constant 0 : index
    %58 = vector.load %arg4[%c0_58, %c0_59, %c0_60, %c0_61] : memref<1x1x4x256xf32, #tpu.memory_space<vmem>>, vector<1x1x4x256xf32>
    %59 = vector.shape_cast %58 : vector<1x1x4x256xf32> to vector<4x256xf32>
    %c0_i32_62 = arith.constant 0 : i32
    %60 = arith.addi %c0_i32_62, %0 : i32
    %c1_i32_63 = arith.constant 1 : i32
    %61 = arith.addi %60, %c1_i32_63 : i32
    %c0_64 = arith.constant 0 : index
    %62 = arith.index_cast %61 : i32 to index
    %c1_65 = arith.constant 1 : index
    %c0_66 = arith.constant 0 : index
    %63 = vector.load %arg2[%c0_64, %62, %c1_65, %c0_66] : memref<1x6x6x128xbf16, #tpu.memory_space<vmem>>, vector<1x1x4x128xbf16>
    %64 = vector.shape_cast %63 : vector<1x1x4x128xbf16> to vector<1x4x128xbf16>
    %65 = vector.shape_cast %64 : vector<1x4x128xbf16> to vector<4x128xbf16>
    %c4 = arith.constant 4 : index
    %c0_67 = arith.constant 0 : index
    %c0_68 = arith.constant 0 : index
    %66 = vector.load %arg3[%c4, %c0_67, %c0_68] : memref<9x128x256xbf16, #tpu.memory_space<vmem>>, vector<1x128x256xbf16>
    %67 = vector.shape_cast %66 : vector<1x128x256xbf16> to vector<128x256xbf16>
    %cst_69 = arith.constant dense<0.000000e+00> : vector<4x256xf32>
    %68 = tpu.matmul %65, %67, %cst_69 {dimension_numbers = #tpu.dot_dimension_numbers<[1], [0], [0], [1], [0, 0, 1, 1], [], []>} : vector<4x128xbf16>, vector<128x256xbf16>, vector<4x256xf32> -> vector<4x256xf32>
    %69 = arith.addf %59, %68 : vector<4x256xf32>
    %c0_70 = arith.constant 0 : index
    %c0_71 = arith.constant 0 : index
    %c0_72 = arith.constant 0 : index
    %c0_73 = arith.constant 0 : index
    %70 = vector.load %arg4[%c0_70, %c0_71, %c0_72, %c0_73] : memref<1x1x4x256xf32, #tpu.memory_space<vmem>>, vector<1x1x4x256xf32>
    %71 = vector.shape_cast %70 : vector<1x1x4x256xf32> to vector<4x256xf32>
    %72 = vector.shape_cast %69 : vector<4x256xf32> to vector<1x1x4x256xf32>
    tpu.vector_store %arg4[%c0_70, %c0_71, %c0_72, %c0_73], %72 {strides = array<i32>} : memref<1x1x4x256xf32, #tpu.memory_space<vmem>>, vector<1x1x4x256xf32>,
    %c0_74 = arith.constant 0 : index
    %c0_75 = arith.constant 0 : index
    %c0_76 = arith.constant 0 : index
    %c0_77 = arith.constant 0 : index
    %73 = vector.load %arg4[%c0_74, %c0_75, %c0_76, %c0_77] : memref<1x1x4x256xf32, #tpu.memory_space<vmem>>, vector<1x1x4x256xf32>
    %74 = vector.shape_cast %73 : vector<1x1x4x256xf32> to vector<4x256xf32>
    %c0_i32_78 = arith.constant 0 : i32
    %75 = arith.addi %c0_i32_78, %0 : i32
    %c1_i32_79 = arith.constant 1 : i32
    %76 = arith.addi %75, %c1_i32_79 : i32
    %c0_80 = arith.constant 0 : index
    %77 = arith.index_cast %76 : i32 to index
    %c2_81 = arith.constant 2 : index
    %c0_82 = arith.constant 0 : index
    %78 = vector.load %arg2[%c0_80, %77, %c2_81, %c0_82] : memref<1x6x6x128xbf16, #tpu.memory_space<vmem>>, vector<1x1x4x128xbf16>
    %79 = vector.shape_cast %78 : vector<1x1x4x128xbf16> to vector<1x4x128xbf16>
    %80 = vector.shape_cast %79 : vector<1x4x128xbf16> to vector<4x128xbf16>
    %c5 = arith.constant 5 : index
    %c0_83 = arith.constant 0 : index
    %c0_84 = arith.constant 0 : index
    %81 = vector.load %arg3[%c5, %c0_83, %c0_84] : memref<9x128x256xbf16, #tpu.memory_space<vmem>>, vector<1x128x256xbf16>
    %82 = vector.shape_cast %81 : vector<1x128x256xbf16> to vector<128x256xbf16>
    %cst_85 = arith.constant dense<0.000000e+00> : vector<4x256xf32>
    %83 = tpu.matmul %80, %82, %cst_85 {dimension_numbers = #tpu.dot_dimension_numbers<[1], [0], [0], [1], [0, 0, 1, 1], [], []>} : vector<4x128xbf16>, vector<128x256xbf16>, vector<4x256xf32> -> vector<4x256xf32>
    %84 = arith.addf %74, %83 : vector<4x256xf32>
    %c0_86 = arith.constant 0 : index
    %c0_87 = arith.constant 0 : index
    %c0_88 = arith.constant 0 : index
    %c0_89 = arith.constant 0 : index
    %85 = vector.load %arg4[%c0_86, %c0_87, %c0_88, %c0_89] : memref<1x1x4x256xf32, #tpu.memory_space<vmem>>, vector<1x1x4x256xf32>
    %86 = vector.shape_cast %85 : vector<1x1x4x256xf32> to vector<4x256xf32>
    %87 = vector.shape_cast %84 : vector<4x256xf32> to vector<1x1x4x256xf32>
    tpu.vector_store %arg4[%c0_86, %c0_87, %c0_88, %c0_89], %87 {strides = array<i32>} : memref<1x1x4x256xf32, #tpu.memory_space<vmem>>, vector<1x1x4x256xf32>,
    %c0_90 = arith.constant 0 : index
    %c0_91 = arith.constant 0 : index
    %c0_92 = arith.constant 0 : index
    %c0_93 = arith.constant 0 : index
    %88 = vector.load %arg4[%c0_90, %c0_91, %c0_92, %c0_93] : memref<1x1x4x256xf32, #tpu.memory_space<vmem>>, vector<1x1x4x256xf32>
    %89 = vector.shape_cast %88 : vector<1x1x4x256xf32> to vector<4x256xf32>
    %c0_i32_94 = arith.constant 0 : i32
    %90 = arith.addi %c0_i32_94, %0 : i32
    %c2_i32 = arith.constant 2 : i32
    %91 = arith.addi %90, %c2_i32 : i32
    %c0_95 = arith.constant 0 : index
    %92 = arith.index_cast %91 : i32 to index
    %c0_96 = arith.constant 0 : index
    %c0_97 = arith.constant 0 : index
    %93 = vector.load %arg2[%c0_95, %92, %c0_96, %c0_97] : memref<1x6x6x128xbf16, #tpu.memory_space<vmem>>, vector<1x1x4x128xbf16>
    %94 = vector.shape_cast %93 : vector<1x1x4x128xbf16> to vector<1x4x128xbf16>
    %95 = vector.shape_cast %94 : vector<1x4x128xbf16> to vector<4x128xbf16>
    %c6 = arith.constant 6 : index
    %c0_98 = arith.constant 0 : index
    %c0_99 = arith.constant 0 : index
    %96 = vector.load %arg3[%c6, %c0_98, %c0_99] : memref<9x128x256xbf16, #tpu.memory_space<vmem>>, vector<1x128x256xbf16>
    %97 = vector.shape_cast %96 : vector<1x128x256xbf16> to vector<128x256xbf16>
    %cst_100 = arith.constant dense<0.000000e+00> : vector<4x256xf32>
    %98 = tpu.matmul %95, %97, %cst_100 {dimension_numbers = #tpu.dot_dimension_numbers<[1], [0], [0], [1], [0, 0, 1, 1], [], []>} : vector<4x128xbf16>, vector<128x256xbf16>, vector<4x256xf32> -> vector<4x256xf32>
    %99 = arith.addf %89, %98 : vector<4x256xf32>
    %c0_101 = arith.constant 0 : index
    %c0_102 = arith.constant 0 : index
    %c0_103 = arith.constant 0 : index
    %c0_104 = arith.constant 0 : index
    %100 = vector.load %arg4[%c0_101, %c0_102, %c0_103, %c0_104] : memref<1x1x4x256xf32, #tpu.memory_space<vmem>>, vector<1x1x4x256xf32>
    %101 = vector.shape_cast %100 : vector<1x1x4x256xf32> to vector<4x256xf32>
    %102 = vector.shape_cast %99 : vector<4x256xf32> to vector<1x1x4x256xf32>
    tpu.vector_store %arg4[%c0_101, %c0_102, %c0_103, %c0_104], %102 {strides = array<i32>} : memref<1x1x4x256xf32, #tpu.memory_space<vmem>>, vector<1x1x4x256xf32>,
    %c0_105 = arith.constant 0 : index
    %c0_106 = arith.constant 0 : index
    %c0_107 = arith.constant 0 : index
    %c0_108 = arith.constant 0 : index
    %103 = vector.load %arg4[%c0_105, %c0_106, %c0_107, %c0_108] : memref<1x1x4x256xf32, #tpu.memory_space<vmem>>, vector<1x1x4x256xf32>
    %104 = vector.shape_cast %103 : vector<1x1x4x256xf32> to vector<4x256xf32>
    %c0_i32_109 = arith.constant 0 : i32
    %105 = arith.addi %c0_i32_109, %0 : i32
    %c2_i32_110 = arith.constant 2 : i32
    %106 = arith.addi %105, %c2_i32_110 : i32
    %c0_111 = arith.constant 0 : index
    %107 = arith.index_cast %106 : i32 to index
    %c1_112 = arith.constant 1 : index
    %c0_113 = arith.constant 0 : index
    %108 = vector.load %arg2[%c0_111, %107, %c1_112, %c0_113] : memref<1x6x6x128xbf16, #tpu.memory_space<vmem>>, vector<1x1x4x128xbf16>
    %109 = vector.shape_cast %108 : vector<1x1x4x128xbf16> to vector<1x4x128xbf16>
    %110 = vector.shape_cast %109 : vector<1x4x128xbf16> to vector<4x128xbf16>
    %c7 = arith.constant 7 : index
    %c0_114 = arith.constant 0 : index
    %c0_115 = arith.constant 0 : index
    %111 = vector.load %arg3[%c7, %c0_114, %c0_115] : memref<9x128x256xbf16, #tpu.memory_space<vmem>>, vector<1x128x256xbf16>
    %112 = vector.shape_cast %111 : vector<1x128x256xbf16> to vector<128x256xbf16>
    %cst_116 = arith.constant dense<0.000000e+00> : vector<4x256xf32>
    %113 = tpu.matmul %110, %112, %cst_116 {dimension_numbers = #tpu.dot_dimension_numbers<[1], [0], [0], [1], [0, 0, 1, 1], [], []>} : vector<4x128xbf16>, vector<128x256xbf16>, vector<4x256xf32> -> vector<4x256xf32>
    %114 = arith.addf %104, %113 : vector<4x256xf32>
    %c0_117 = arith.constant 0 : index
    %c0_118 = arith.constant 0 : index
    %c0_119 = arith.constant 0 : index
    %c0_120 = arith.constant 0 : index
    %115 = vector.load %arg4[%c0_117, %c0_118, %c0_119, %c0_120] : memref<1x1x4x256xf32, #tpu.memory_space<vmem>>, vector<1x1x4x256xf32>
    %116 = vector.shape_cast %115 : vector<1x1x4x256xf32> to vector<4x256xf32>
    %117 = vector.shape_cast %114 : vector<4x256xf32> to vector<1x1x4x256xf32>
    tpu.vector_store %arg4[%c0_117, %c0_118, %c0_119, %c0_120], %117 {strides = array<i32>} : memref<1x1x4x256xf32, #tpu.memory_space<vmem>>, vector<1x1x4x256xf32>,
    %c0_121 = arith.constant 0 : index
    %c0_122 = arith.constant 0 : index
    %c0_123 = arith.constant 0 : index
    %c0_124 = arith.constant 0 : index
    %118 = vector.load %arg4[%c0_121, %c0_122, %c0_123, %c0_124] : memref<1x1x4x256xf32, #tpu.memory_space<vmem>>, vector<1x1x4x256xf32>
    %119 = vector.shape_cast %118 : vector<1x1x4x256xf32> to vector<4x256xf32>
    %c0_i32_125 = arith.constant 0 : i32
    %120 = arith.addi %c0_i32_125, %0 : i32
    %c2_i32_126 = arith.constant 2 : i32
    %121 = arith.addi %120, %c2_i32_126 : i32
    %c0_127 = arith.constant 0 : index
    %122 = arith.index_cast %121 : i32 to index
    %c2_128 = arith.constant 2 : index
    %c0_129 = arith.constant 0 : index
    %123 = vector.load %arg2[%c0_127, %122, %c2_128, %c0_129] : memref<1x6x6x128xbf16, #tpu.memory_space<vmem>>, vector<1x1x4x128xbf16>
    %124 = vector.shape_cast %123 : vector<1x1x4x128xbf16> to vector<1x4x128xbf16>
    %125 = vector.shape_cast %124 : vector<1x4x128xbf16> to vector<4x128xbf16>
    %c8 = arith.constant 8 : index
    %c0_130 = arith.constant 0 : index
    %c0_131 = arith.constant 0 : index
    %126 = vector.load %arg3[%c8, %c0_130, %c0_131] : memref<9x128x256xbf16, #tpu.memory_space<vmem>>, vector<1x128x256xbf16>
    %127 = vector.shape_cast %126 : vector<1x128x256xbf16> to vector<128x256xbf16>
    %cst_132 = arith.constant dense<0.000000e+00> : vector<4x256xf32>
    %128 = tpu.matmul %125, %127, %cst_132 {dimension_numbers = #tpu.dot_dimension_numbers<[1], [0], [0], [1], [0, 0, 1, 1], [], []>} : vector<4x128xbf16>, vector<128x256xbf16>, vector<4x256xf32> -> vector<4x256xf32>
    %129 = arith.addf %119, %128 : vector<4x256xf32>
    %c0_133 = arith.constant 0 : index
    %c0_134 = arith.constant 0 : index
    %c0_135 = arith.constant 0 : index
    %c0_136 = arith.constant 0 : index
    %130 = vector.load %arg4[%c0_133, %c0_134, %c0_135, %c0_136] : memref<1x1x4x256xf32, #tpu.memory_space<vmem>>, vector<1x1x4x256xf32>
    %131 = vector.shape_cast %130 : vector<1x1x4x256xf32> to vector<4x256xf32>
    %132 = vector.shape_cast %129 : vector<4x256xf32> to vector<1x1x4x256xf32>
    tpu.vector_store %arg4[%c0_133, %c0_134, %c0_135, %c0_136], %132 {strides = array<i32>} : memref<1x1x4x256xf32, #tpu.memory_space<vmem>>, vector<1x1x4x256xf32>,
    %c0_137 = arith.constant 0 : index
    %c0_138 = arith.constant 0 : index
    %c0_139 = arith.constant 0 : index
    %c0_140 = arith.constant 0 : index
    %133 = vector.load %arg4[%c0_137, %c0_138, %c0_139, %c0_140] : memref<1x1x4x256xf32, #tpu.memory_space<vmem>>, vector<1x1x4x256xf32>
    %134 = vector.shape_cast %133 : vector<1x1x4x256xf32> to vector<4x256xf32>
    %cst_141 = arith.constant dense<0.000000e+00> : vector<256xf32>
    %135 = vector.multi_reduction <add>, %134, %cst_141 [0] : vector<4x256xf32> to vector<256xf32>
    %136 = vector.shape_cast %135 : vector<256xf32> to vector<1x256xf32>
    %c0_142 = arith.constant 0 : index
    %c0_143 = arith.constant 0 : index
    %c0_144 = arith.constant 0 : index
    %c0_145 = arith.constant 0 : index
    %137 = vector.load %arg5[%c0_142, %c0_143, %c0_144, %c0_145] : memref<1x1x2x256xf32, #tpu.memory_space<vmem>>, vector<1x1x1x256xf32>
    %138 = vector.shape_cast %137 : vector<1x1x1x256xf32> to vector<1x256xf32>
    %139 = vector.shape_cast %136 : vector<1x256xf32> to vector<1x1x1x256xf32>
    tpu.vector_store %arg5[%c0_142, %c0_143, %c0_144, %c0_145], %139 {strides = array<i32>} : memref<1x1x2x256xf32, #tpu.memory_space<vmem>>, vector<1x1x1x256xf32>,
    %140 = arith.mulf %134, %134 : vector<4x256xf32>
    %cst_146 = arith.constant dense<0.000000e+00> : vector<256xf32>
    %141 = vector.multi_reduction <add>, %140, %cst_146 [0] : vector<4x256xf32> to vector<256xf32>
    %142 = vector.shape_cast %141 : vector<256xf32> to vector<1x256xf32>
    %c0_147 = arith.constant 0 : index
    %c0_148 = arith.constant 0 : index
    %c1_149 = arith.constant 1 : index
    %c0_150 = arith.constant 0 : index
    %143 = vector.load %arg5[%c0_147, %c0_148, %c1_149, %c0_150] : memref<1x1x2x256xf32, #tpu.memory_space<vmem>>, vector<1x1x1x256xf32>
    %144 = vector.shape_cast %143 : vector<1x1x1x256xf32> to vector<1x256xf32>
    %145 = vector.shape_cast %142 : vector<1x256xf32> to vector<1x1x1x256xf32>
    tpu.vector_store %arg5[%c0_147, %c0_148, %c1_149, %c0_150], %145 {strides = array<i32>} : memref<1x1x2x256xf32, #tpu.memory_space<vmem>>, vector<1x1x1x256xf32>,
    return
  }
  func.func @transform_0(%arg0: i32, %arg1: i32) -> (i32, i32, i32, i32) {
    %c0_i32 = arith.constant 0 : i32
    %c0_i32_0 = arith.constant 0 : i32
    %c0_i32_1 = arith.constant 0 : i32
    %c0_i32_2 = arith.constant 0 : i32
    return %arg0, %c0_i32, %c0_i32_0, %c0_i32_1 : i32, i32, i32, i32
  }
  func.func @transform_1(%arg0: i32, %arg1: i32) -> (i32, i32, i32) {
    %c0_i32 = arith.constant 0 : i32
    %c0_i32_0 = arith.constant 0 : i32
    %c0_i32_1 = arith.constant 0 : i32
    %c0_i32_2 = arith.constant 0 : i32
    return %c0_i32, %c0_i32_0, %c0_i32_1 : i32, i32, i32
  }
  func.func @transform_2(%arg0: i32, %arg1: i32) -> (i32, i32, i32, i32) {
    %c0_i32 = arith.constant 0 : i32
    %c0_i32_0 = arith.constant 0 : i32
    %c0_i32_1 = arith.constant 0 : i32
    return %arg0, %arg1, %c0_i32, %c0_i32_0 : i32, i32, i32, i32
  }
  func.func @transform_3(%arg0: i32, %arg1: i32) -> (i32, i32, i32, i32) {
    %c0_i32 = arith.constant 0 : i32
    %c0_i32_0 = arith.constant 0 : i32
    %c0_i32_1 = arith.constant 0 : i32
    return %arg0, %arg1, %c0_i32, %c0_i32_0 : i32, i32, i32, i32
  }
}

module attributes {stable_mosaic.version = 11 : i64} {
  func.func @_bn_relu_kernel(%arg0: i32, %arg1: i32, %arg2: memref<1x1x4x256xf32, #tpu.memory_space<vmem>>, %arg3: memref<1x256xf32, #tpu.memory_space<vmem>>, %arg4: memref<1x256xf32, #tpu.memory_space<vmem>>, %arg5: memref<1x1x4x256xf32, #tpu.memory_space<vmem>>) attributes {dimension_semantics = [#tpu.dimension_semantics<parallel>, #tpu.dimension_semantics<parallel>], iteration_bounds = array<i64: 2, 4>, scalar_prefetch = 0 : i64, scratch_operands = 0 : i64, tpu.core_type = #tpu.core_type<tc>, window_params = [{transform_indices = @transform_0, window_bounds = array<i64: 1, 1, 4, 256>}, {pipeline_mode = #tpu.pipeline_mode<synchronous>, transform_indices = @transform_1, window_bounds = array<i64: 1, 256>}, {pipeline_mode = #tpu.pipeline_mode<synchronous>, transform_indices = @transform_2, window_bounds = array<i64: 1, 256>}, {transform_indices = @transform_3, window_bounds = array<i64: 1, 1, 4, 256>}]} {
    %c0 = arith.constant 0 : index
    %c0_0 = arith.constant 0 : index
    %c0_1 = arith.constant 0 : index
    %c0_2 = arith.constant 0 : index
    %0 = vector.load %arg2[%c0, %c0_0, %c0_1, %c0_2] : memref<1x1x4x256xf32, #tpu.memory_space<vmem>>, vector<1x1x4x256xf32>
    %1 = vector.shape_cast %0 : vector<1x1x4x256xf32> to vector<4x256xf32>
    %c0_3 = arith.constant 0 : index
    %c0_4 = arith.constant 0 : index
    %2 = vector.load %arg3[%c0_3, %c0_4] : memref<1x256xf32, #tpu.memory_space<vmem>>, vector<1x256xf32>
    %3 = vector.broadcast %2 : vector<1x256xf32> to vector<4x256xf32>
    %4 = arith.mulf %1, %3 : vector<4x256xf32>
    %c0_5 = arith.constant 0 : index
    %c0_6 = arith.constant 0 : index
    %5 = vector.load %arg4[%c0_5, %c0_6] : memref<1x256xf32, #tpu.memory_space<vmem>>, vector<1x256xf32>
    %6 = vector.broadcast %5 : vector<1x256xf32> to vector<4x256xf32>
    %7 = arith.addf %4, %6 : vector<4x256xf32>
    %cst = arith.constant 0.000000e+00 : f32
    %8 = vector.broadcast %cst : f32 to vector<4x256xf32>
    %9 = arith.maximumf %7, %8 : vector<4x256xf32>
    %c0_7 = arith.constant 0 : index
    %c0_8 = arith.constant 0 : index
    %c0_9 = arith.constant 0 : index
    %c0_10 = arith.constant 0 : index
    %10 = vector.load %arg5[%c0_7, %c0_8, %c0_9, %c0_10] : memref<1x1x4x256xf32, #tpu.memory_space<vmem>>, vector<1x1x4x256xf32>
    %11 = vector.shape_cast %10 : vector<1x1x4x256xf32> to vector<4x256xf32>
    %12 = vector.shape_cast %9 : vector<4x256xf32> to vector<1x1x4x256xf32>
    tpu.vector_store %arg5[%c0_7, %c0_8, %c0_9, %c0_10], %12 {strides = array<i32>} : memref<1x1x4x256xf32, #tpu.memory_space<vmem>>, vector<1x1x4x256xf32>,
    return
  }
  func.func @transform_0(%arg0: i32, %arg1: i32) -> (i32, i32, i32, i32) {
    %c0_i32 = arith.constant 0 : i32
    %c0_i32_0 = arith.constant 0 : i32
    %c0_i32_1 = arith.constant 0 : i32
    return %arg0, %arg1, %c0_i32, %c0_i32_0 : i32, i32, i32, i32
  }
  func.func @transform_1(%arg0: i32, %arg1: i32) -> (i32, i32) {
    %c0_i32 = arith.constant 0 : i32
    %c0_i32_0 = arith.constant 0 : i32
    %c0_i32_1 = arith.constant 0 : i32
    return %c0_i32, %c0_i32_0 : i32, i32
  }
  func.func @transform_2(%arg0: i32, %arg1: i32) -> (i32, i32) {
    %c0_i32 = arith.constant 0 : i32
    %c0_i32_0 = arith.constant 0 : i32
    %c0_i32_1 = arith.constant 0 : i32
    return %c0_i32, %c0_i32_0 : i32, i32
  }
  func.func @transform_3(%arg0: i32, %arg1: i32) -> (i32, i32, i32, i32) {
    %c0_i32 = arith.constant 0 : i32
    %c0_i32_0 = arith.constant 0 : i32
    %c0_i32_1 = arith.constant 0 : i32
    return %arg0, %arg1, %c0_i32, %c0_i32_0 : i32, i32, i32, i32
  }
}

</mosaic_0001>

<llo_original>
// kernel: hrnet_forward.7
$region0: #{hrnet_forward.7}
  #allocation0 [shape = 'u32[]', space=smem, size = 0x4, offset = 0x4, fixed_abs, tag = 'smem constant byte address 0x4 - core index']
  #allocation1 [shape = 'u32[72,128]{1,0:T(1,128)}', space=vmem, size = 0x9000, scoped, tag = 'internal scratch']
  %s0 = inlined_call_operand.vmem [shape: f32[2,1,64,128], index: 0, kind: input, shape index: {}]
  %s1 = inlined_call_operand.vmem [shape: f32[1,128], index: 1, kind: input, shape index: {}]
  %s2 = inlined_call_operand.vmem [shape: f32[1,128], index: 2, kind: input, shape index: {}]
  %s3 = inlined_call_operand.vmem [shape: bf16[2,1,64,128], index: 3, kind: output, shape index: {}]
  %s4 = sld [smem:[#allocation0]]
  $region45: #{hrnet_forward.7} parent=0
    _
  %s6 = ssub.s32 1, %s4
  %s7 = scalar_select 0, %s6, %s4
  loop: start=0, step=1, limit=4
  $region2: #{hrnet_forward.7} parent=0 // loop_pre_header
    _
  $region3: #{hrnet_forward.7} parent=0 // loop_header
    %s9 = sphi 0, %s13
    %p10 = scmp.ge.s32.totalorder %s9, 4
    %s16 = sphi 0, %s28
    %s17 = sphi 0, %s24
    %s18 = sphi 0, %s16
    %s19 = sphi 0, %s17
    %s20 = sphi 0, %s18
    %s21 = sphi 0, %s19
    %s33 = sphi 0, %s35
    %s36 = sphi 0, %s33
    %s37 = sphi 0, %s36
    %s53 = sphi 0, %s37
    %s57 = sphi 0, %s57
    %s59 = sphi 0, %s57
    %s60 = sphi 0, %s59
    %s74 = sphi 0, %s60
    %s78 = sphi 0, %s78
    %s80 = sphi 0, %s78
    %s81 = sphi 0, %s80
    %s95 = sphi 0, %s81
    %s103 = sphi 0, %s105
    %s106 = sphi 0, %s103
    %s107 = sphi 0, %s106
    %s123 = sphi 0, %s107
  $region4: #{hrnet_forward.7} parent=0 // loop_header_branch
    %12 = sbr.rel (%p10) target = $region8
  $region5: #{hrnet_forward.7} parent=0 // loop_body
    %s14 = ssub.s32 %s9, 1
    %s15 = ssub.s32 %s9, 2
    %s22 = sadd.s32 1, %s17
    %p23 = scmp.ge.s32.totalorder %s22, 1
    %s24 = scalar_select %p23, 0, %s22
    %s25 = sadd.s32 1, %s16
    %s26 = scalar_select %p23, %s25, %s16
    %p27 = scmp.ge.s32.totalorder %s26, 2
    %s28 = scalar_select %p27, 0, %s26
    %s29 = ssub.s32 %s16, %s28
    %s30 = ssub.s32 %s17, %s24
    %s31 = sor.u32 %s29, %s30
    %p32 = scmp.eq.s32.totalorder %s31, 0
    %s34 = sadd.s32 %s33, 1
    %s35 = scalar_select %p32, %s33, %s34
    %p38 = pneg %p32
    %p39 = scmp.eq.s32.totalorder %s9, 1
    %p40 = por %p38, %p39
    %p41 = scmp.ne.s32.totalorder %s33, %s36
    %p42 = scmp.eq.s32.totalorder %s9, 0
    %p43 = por %p41, %p42
    %p44 = scmp.ne.s32.totalorder %s33, %s36
    %p45 = scmp.eq.s32.totalorder %s14, 1
    %p46 = por %p44, %p45
    %p47 = scmp.ne.s32.totalorder %s36, %s37
    %p48 = scmp.eq.s32.totalorder %s14, 0
    %p49 = por %p47, %p48
    %p50 = scmp.ne.s32.totalorder %s36, %s37
    %p51 = scmp.eq.s32.totalorder %s15, 1
    %p52 = por %p50, %p51
    %p54 = scmp.ne.s32.totalorder %s37, %s53
    %p55 = scmp.eq.s32.totalorder %s15, 0
    %p56 = por %p54, %p55
    %s58 = sadd.s32 %s57, 1
    %p61 = scmp.eq.s32.totalorder %s9, 1
    %p62 = scmp.ne.s32.totalorder %s57, %s59
    %p63 = scmp.eq.s32.totalorder %s9, 0
    %p64 = por %p62, %p63
    %p65 = scmp.ne.s32.totalorder %s57, %s59
    %p66 = scmp.eq.s32.totalorder %s14, 1
    %p67 = por %p65, %p66
    %p68 = scmp.ne.s32.totalorder %s59, %s60
    %p69 = scmp.eq.s32.totalorder %s14, 0
    %p70 = por %p68, %p69
    %p71 = scmp.ne.s32.totalorder %s59, %s60
    %p72 = scmp.eq.s32.totalorder %s15, 1
    %p73 = por %p71, %p72
    %p75 = scmp.ne.s32.totalorder %s60, %s74
    %p76 = scmp.eq.s32.totalorder %s15, 0
    %p77 = por %p75, %p76
    %s79 = sadd.s32 %s78, 1
    %p82 = scmp.eq.s32.totalorder %s9, 1
    %p83 = scmp.ne.s32.totalorder %s78, %s80
    %p84 = scmp.eq.s32.totalorder %s9, 0
    %p85 = por %p83, %p84
    %p86 = scmp.ne.s32.totalorder %s78, %s80
    %p87 = scmp.eq.s32.totalorder %s14, 1
    %p88 = por %p86, %p87
    %p89 = scmp.ne.s32.totalorder %s80, %s81
    %p90 = scmp.eq.s32.totalorder %s14, 0
    %p91 = por %p89, %p90
    %p92 = scmp.ne.s32.totalorder %s80, %s81
    %p93 = scmp.eq.s32.totalorder %s15, 1
    %p94 = por %p92, %p93
    %p96 = scmp.ne.s32.totalorder %s81, %s95
    %p97 = scmp.eq.s32.totalorder %s15, 0
    %p98 = por %p96, %p97
    %s99 = ssub.s32 %s16, %s28
    %s100 = ssub.s32 %s17, %s24
    %s101 = sor.u32 %s99, %s100
    %p102 = scmp.eq.s32.totalorder %s101, 0
    %s104 = sadd.s32 %s103, 1
    %s105 = scalar_select %p102, %s103, %s104
    %p108 = pneg %p102
    %p109 = scmp.eq.s32.totalorder %s9, 1
    %p110 = por %p108, %p109
    %p111 = scmp.ne.s32.totalorder %s103, %s106
    %p112 = scmp.eq.s32.totalorder %s9, 0
    %p113 = por %p111, %p112
    %p114 = scmp.ne.s32.totalorder %s103, %s106
    %p115 = scmp.eq.s32.totalorder %s14, 1
    %p116 = por %p114, %p115
    %p117 = scmp.ne.s32.totalorder %s106, %s107
    %p118 = scmp.eq.s32.totalorder %s14, 0
    %p119 = por %p117, %p118
    %p120 = scmp.ne.s32.totalorder %s106, %s107
    %p121 = scmp.eq.s32.totalorder %s15, 1
    %p122 = por %p120, %p121
    %p124 = scmp.ne.s32.totalorder %s107, %s123
    %p125 = scmp.eq.s32.totalorder %s15, 0
    %p126 = por %p124, %p125
    %p127 = scmp.le.s32.totalorder 1, %s9
    %p128 = scmp.lt.s32.totalorder %s9, 3
    %p129 = pnand %p127, %p128
    %p130 = pneg %p129
    // Predicated region
    $region9: #{hrnet_forward.7} parent=5 // pred_check
      _
    $region10: #{hrnet_forward.7} parent=5 // pred_check_branch
      %132 = sbr.rel (%p129) target = $region12
    $region11: #{hrnet_forward.7} parent=5 // pred_region
      %s133 = ssub.s32 %s9, 1
      // Predicated region
      $region13: #{hrnet_forward.7} parent=11 // pred_check
        %p134 = pneg %p70
      $region14: #{hrnet_forward.7} parent=11 // pred_check_branch
        %136 = sbr.rel (%p134) target = $region16
      $region15: #{hrnet_forward.7} parent=11 // pred_region
        _
      $region16: #{hrnet_forward.7} parent=11 // pred_fallthru
        _
      // Predicated region
      $region17: #{hrnet_forward.7} parent=11 // pred_check
        %p137 = pneg %p91
      $region18: #{hrnet_forward.7} parent=11 // pred_check_branch
        %139 = sbr.rel (%p137) target = $region20
      $region19: #{hrnet_forward.7} parent=11 // pred_region
        _
      $region20: #{hrnet_forward.7} parent=11 // pred_fallthru
        _
    $region12: #{hrnet_forward.7} parent=5 // pred_fallthru
      _
    %p140 = scmp.lt.s32.totalorder %s9, 2
    // Predicated region
    $region21: #{hrnet_forward.7} parent=5 // pred_check
      %p141 = pneg %p140
    $region22: #{hrnet_forward.7} parent=5 // pred_check_branch
      %143 = sbr.rel (%p141) target = $region24
    $region23: #{hrnet_forward.7} parent=5 // pred_region
      // Predicated region
      $region25: #{hrnet_forward.7} parent=23 // pred_check
        %p144 = pneg %p43
      $region26: #{hrnet_forward.7} parent=23 // pred_check_branch
        %146 = sbr.rel (%p144) target = $region28
      $region27: #{hrnet_forward.7} parent=23 // pred_region
        %p147 = scmp.lt.s32.totalorder %s16, 1
        %s148 = scalar_select %p147, %s16, 1
        %p149 = scmp.lt.s32.totalorder %s17, 0
        %s150 = scalar_select %p149, %s17, 0
        %s151 = smul.addr %s150, 8
        %s152 = smul.addr %s148, 8
        %s153 = sadd.s32 %s151, %s152
        %s154 = smul.addr %s153, 8
        %s155 = scalar_lea.vmem %s0, %s154
      $region28: #{hrnet_forward.7} parent=23 // pred_fallthru
        _
    $region24: #{hrnet_forward.7} parent=5 // pred_fallthru
      _
    %p156 = scmp.le.s32.totalorder 1, %s9
    %p157 = scmp.lt.s32.totalorder %s9, 3
    %p158 = pnand %p156, %p157
    %p159 = pneg %p158
    // Predicated region
    $region29: #{hrnet_forward.7} parent=5 // pred_check
      _
    $region30: #{hrnet_forward.7} parent=5 // pred_check_branch
      %161 = sbr.rel (%p158) target = $region32
    $region31: #{hrnet_forward.7} parent=5 // pred_region
      %s162 = ssub.s32 %s9, 1
      %p163 = scmp.lt.s32.totalorder %s18, 1
      %s164 = scalar_select %p163, %s18, 1
      %p165 = scmp.lt.s32.totalorder %s19, 0
      %s166 = scalar_select %p165, %s19, 0
      %s167 = smul.addr %s166, 8
      %s168 = smul.addr %s164, 8
      %s169 = sadd.s32 %s167, %s168
      %s170 = smul.addr %s169, 8
      %s171 = scalar_lea.vmem %s0, %s170
      %p172 = pneg %p49
      %p173 = pneg %p46
      %p174 = pneg %p70
      %p175 = pneg %p67
      %p176 = pneg %p91
      %p177 = pneg %p88
      %p178 = pneg %p119
      %p179 = pneg %p116
      %p180 = scmp.lt.s32.totalorder %s18, 1
      %s181 = scalar_select %p180, %s18, 1
      %p182 = scmp.lt.s32.totalorder %s19, 0
      %s183 = scalar_select %p182, %s19, 0
      %s184 = smul.addr %s183, 8
      %s185 = smul.addr %s181, 8
      %s186 = sadd.s32 %s184, %s185
      %s187 = smul.addr %s186, 4
      %s188 = scalar_lea.vmem %s3, %s187
      %p189 = scmp.lt.s32.totalorder %s18, 1
      %s190 = scalar_select %p189, %s18, 1
      %p191 = scmp.lt.s32.totalorder %s19, 0
      %s192 = scalar_select %p191, %s19, 0
      %s193 = smul.addr %s192, 8
      %s194 = smul.addr %s190, 8
      %s195 = sadd.s32 %s193, %s194
      %s196 = smul.addr %s195, 8
      %s197 = scalar_lea.vmem %s0, %s196
      %p198 = scmp.lt.s32.totalorder %s18, 1
      %s199 = scalar_select %p198, %s18, 1
      %p200 = scmp.lt.s32.totalorder %s19, 0
      %s201 = scalar_select %p200, %s19, 0
      %s202 = smul.addr %s201, 8
      %s203 = smul.addr %s199, 8
      %s204 = sadd.s32 %s202, %s203
      %s205 = smul.addr %s204, 4
      %s206 = scalar_lea.vmem %s3, %s205
      %v207 = vld [vmem:[%s197] sm:$0xff]
      %v208 = vld [vmem:[%s197 + $0x8] sm:$0xff]
      %v209 = vld [vmem:[%s197 + $0x10] sm:$0xff]
      %v210 = vld [vmem:[%s197 + $0x18] sm:$0xff]
      %v211 = vld [vmem:[%s197 + $0x20] sm:$0xff]
      %v212 = vld [vmem:[%s197 + $0x28] sm:$0xff]
      %v213 = vld [vmem:[%s197 + $0x30] sm:$0xff]
      %v214 = vld [vmem:[%s197 + $0x38] sm:$0xff]
      %v215 = vld [vmem:[%s1] sm:$0x1]
      %v217 = vperm.slane %v215, 0
      %v219 = vmul.f32 %v207, %v217
      %v220 = vmul.f32 %v208, %v217
      %v221 = vmul.f32 %v209, %v217
      %v222 = vmul.f32 %v210, %v217
      %v223 = vmul.f32 %v211, %v217
      %v224 = vmul.f32 %v212, %v217
      %v225 = vmul.f32 %v213, %v217
      %v226 = vmul.f32 %v214, %v217
      %v227 = vld [vmem:[%s2] sm:$0x1]
      %v229 = vperm.slane %v227, 0
      %v231 = vadd.f32 %v219, %v229
      %v232 = vadd.f32 %v220, %v229
      %v233 = vadd.f32 %v221, %v229
      %v234 = vadd.f32 %v222, %v229
      %v235 = vadd.f32 %v223, %v229
      %v236 = vadd.f32 %v224, %v229
      %v237 = vadd.f32 %v225, %v229
      %v238 = vadd.f32 %v226, %v229
      %v239 = vmax.f32 %v231, 0.0
      %v240 = vmax.f32 %v232, 0.0
      %v241 = vmax.f32 %v233, 0.0
      %v242 = vmax.f32 %v234, 0.0
      %v243 = vmax.f32 %v235, 0.0
      %v244 = vmax.f32 %v236, 0.0
      %v245 = vmax.f32 %v237, 0.0
      %v246 = vmax.f32 %v238, 0.0
      %v247 = vpack.c.bf16 %v239, %v239
      %v248 = vpack.c.bf16 %v240, %v240
      %v249 = vpack.c.bf16 %v241, %v241
      %v250 = vpack.c.bf16 %v242, %v242
      %v251 = vpack.c.bf16 %v243, %v243
      %v252 = vpack.c.bf16 %v244, %v244
      %v253 = vpack.c.bf16 %v245, %v245
      %v254 = vpack.c.bf16 %v246, %v246
      %255 = vst [vmem:[%s206] sm:$0xf] %v247
      %256 = vst [vmem:[%s206 + $0x4] sm:$0xf] %v248
      %257 = vst [vmem:[%s206 + $0x8] sm:$0xf] %v249
      %258 = vst [vmem:[%s206 + $0xc] sm:$0xf] %v250
      %259 = vst [vmem:[%s206 + $0x10] sm:$0xf] %v251
      %260 = vst [vmem:[%s206 + $0x14] sm:$0xf] %v252
      %261 = vst [vmem:[%s206 + $0x18] sm:$0xf] %v253
      %262 = vst [vmem:[%s206 + $0x1c] sm:$0xf] %v254
      %p263 = scmp.lt.s32.totalorder %s18, 1
      %s264 = scalar_select %p263, %s18, 1
      %p265 = scmp.lt.s32.totalorder %s19, 0
      %s266 = scalar_select %p265, %s19, 0
      %s267 = smul.addr %s266, 8
      %s268 = smul.addr %s264, 8
      %s269 = sadd.s32 %s267, %s268
      %s270 = smul.addr %s269, 4
      %s271 = scalar_lea.vmem %s3, %s270
      // Predicated region
      $region33: #{hrnet_forward.7} parent=31 // pred_check
        %p272 = pneg %p116
      $region34: #{hrnet_forward.7} parent=31 // pred_check_branch
        %274 = sbr.rel (%p272) target = $region36
      $region35: #{hrnet_forward.7} parent=31 // pred_region
        _
      $region36: #{hrnet_forward.7} parent=31 // pred_fallthru
        _
    $region32: #{hrnet_forward.7} parent=5 // pred_fallthru
      _
    %p275 = scmp.le.s32.totalorder 2, %s9
    // Predicated region
    $region37: #{hrnet_forward.7} parent=5 // pred_check
      %p276 = pneg %p275
    $region38: #{hrnet_forward.7} parent=5 // pred_check_branch
      %278 = sbr.rel (%p276) target = $region40
    $region39: #{hrnet_forward.7} parent=5 // pred_region
      %s279 = ssub.s32 %s9, 2
      // Predicated region
      $region41: #{hrnet_forward.7} parent=39 // pred_check
        %p280 = pneg %p122
      $region42: #{hrnet_forward.7} parent=39 // pred_check_branch
        %282 = sbr.rel (%p280) target = $region44
      $region43: #{hrnet_forward.7} parent=39 // pred_region
        %p283 = scmp.lt.s32.totalorder %s20, 1
        %s284 = scalar_select %p283, %s20, 1
        %p285 = scmp.lt.s32.totalorder %s21, 0
        %s286 = scalar_select %p285, %s21, 0
        %s287 = smul.addr %s286, 8
        %s288 = smul.addr %s284, 8
        %s289 = sadd.s32 %s287, %s288
        %s290 = smul.addr %s289, 4
        %s291 = scalar_lea.vmem %s3, %s290
      $region44: #{hrnet_forward.7} parent=39 // pred_fallthru
        _
    $region40: #{hrnet_forward.7} parent=5 // pred_fallthru
      _
  $region6: #{hrnet_forward.7} parent=0 // loop_footer
    %s13 = sadd.s32 1, %s9
  $region7: #{hrnet_forward.7} parent=0 // loop_footer_branch
    %8 = sbr.rel target = $region3
  $region8: #{hrnet_forward.7} parent=0 // loop_exit
    _

// kernel: hrnet_forward.9
$region0: #{hrnet_forward.9}
  #allocation0 [shape = 'u32[]', space=smem, size = 0x4, offset = 0x4, fixed_abs, tag = 'smem constant byte address 0x4 - core index']
  #allocation1 [shape = 'u32[72,128]{1,0:T(1,128)}', space=vmem, size = 0x9000, scoped, tag = 'internal scratch']
  %s0 = inlined_call_operand.vmem [shape: f32[2,4,4,128], index: 0, kind: input, shape index: {}]
  %s1 = inlined_call_operand.vmem [shape: f32[1,128], index: 1, kind: input, shape index: {}]
  %s2 = inlined_call_operand.vmem [shape: f32[1,128], index: 2, kind: input, shape index: {}]
  %s3 = inlined_call_operand.vmem [shape: bf16[2,4,4,128], index: 3, kind: output, shape index: {}]
  %s4 = sld [smem:[#allocation0]]
  $region45: #{hrnet_forward.9} parent=0
    _
  %s6 = ssub.s32 1, %s4
  %s7 = scalar_select 0, %s6, %s4
  loop: start=0, step=1, limit=10
  $region2: #{hrnet_forward.9} parent=0 // loop_pre_header
    _
  $region3: #{hrnet_forward.9} parent=0 // loop_header
    %s9 = sphi 0, %s13
    %p10 = scmp.ge.s32.totalorder %s9, 10
    %s16 = sphi 0, %s28
    %s17 = sphi 0, %s24
    %s18 = sphi 0, %s16
    %s19 = sphi 0, %s17
    %s20 = sphi 0, %s18
    %s21 = sphi 0, %s19
    %s33 = sphi 0, %s35
    %s36 = sphi 0, %s33
    %s37 = sphi 0, %s36
    %s53 = sphi 0, %s37
    %s57 = sphi 0, %s57
    %s59 = sphi 0, %s57
    %s60 = sphi 0, %s59
    %s74 = sphi 0, %s60
    %s78 = sphi 0, %s78
    %s80 = sphi 0, %s78
    %s81 = sphi 0, %s80
    %s95 = sphi 0, %s81
    %s103 = sphi 0, %s105
    %s106 = sphi 0, %s103
    %s107 = sphi 0, %s106
    %s123 = sphi 0, %s107
  $region4: #{hrnet_forward.9} parent=0 // loop_header_branch
    %12 = sbr.rel (%p10) target = $region8
  $region5: #{hrnet_forward.9} parent=0 // loop_body
    %s14 = ssub.s32 %s9, 1
    %s15 = ssub.s32 %s9, 2
    %s22 = sadd.s32 1, %s17
    %p23 = scmp.ge.s32.totalorder %s22, 4
    %s24 = scalar_select %p23, 0, %s22
    %s25 = sadd.s32 1, %s16
    %s26 = scalar_select %p23, %s25, %s16
    %p27 = scmp.ge.s32.totalorder %s26, 2
    %s28 = scalar_select %p27, 0, %s26
    %s29 = ssub.s32 %s16, %s28
    %s30 = ssub.s32 %s17, %s24
    %s31 = sor.u32 %s29, %s30
    %p32 = scmp.eq.s32.totalorder %s31, 0
    %s34 = sadd.s32 %s33, 1
    %s35 = scalar_select %p32, %s33, %s34
    %p38 = pneg %p32
    %p39 = scmp.eq.s32.totalorder %s9, 7
    %p40 = por %p38, %p39
    %p41 = scmp.ne.s32.totalorder %s33, %s36
    %p42 = scmp.eq.s32.totalorder %s9, 0
    %p43 = por %p41, %p42
    %p44 = scmp.ne.s32.totalorder %s33, %s36
    %p45 = scmp.eq.s32.totalorder %s14, 7
    %p46 = por %p44, %p45
    %p47 = scmp.ne.s32.totalorder %s36, %s37
    %p48 = scmp.eq.s32.totalorder %s14, 0
    %p49 = por %p47, %p48
    %p50 = scmp.ne.s32.totalorder %s36, %s37
    %p51 = scmp.eq.s32.totalorder %s15, 7
    %p52 = por %p50, %p51
    %p54 = scmp.ne.s32.totalorder %s37, %s53
    %p55 = scmp.eq.s32.totalorder %s15, 0
    %p56 = por %p54, %p55
    %s58 = sadd.s32 %s57, 1
    %p61 = scmp.eq.s32.totalorder %s9, 7
    %p62 = scmp.ne.s32.totalorder %s57, %s59
    %p63 = scmp.eq.s32.totalorder %s9, 0
    %p64 = por %p62, %p63
    %p65 = scmp.ne.s32.totalorder %s57, %s59
    %p66 = scmp.eq.s32.totalorder %s14, 7
    %p67 = por %p65, %p66
    %p68 = scmp.ne.s32.totalorder %s59, %s60
    %p69 = scmp.eq.s32.totalorder %s14, 0
    %p70 = por %p68, %p69
    %p71 = scmp.ne.s32.totalorder %s59, %s60
    %p72 = scmp.eq.s32.totalorder %s15, 7
    %p73 = por %p71, %p72
    %p75 = scmp.ne.s32.totalorder %s60, %s74
    %p76 = scmp.eq.s32.totalorder %s15, 0
    %p77 = por %p75, %p76
    %s79 = sadd.s32 %s78, 1
    %p82 = scmp.eq.s32.totalorder %s9, 7
    %p83 = scmp.ne.s32.totalorder %s78, %s80
    %p84 = scmp.eq.s32.totalorder %s9, 0
    %p85 = por %p83, %p84
    %p86 = scmp.ne.s32.totalorder %s78, %s80
    %p87 = scmp.eq.s32.totalorder %s14, 7
    %p88 = por %p86, %p87
    %p89 = scmp.ne.s32.totalorder %s80, %s81
    %p90 = scmp.eq.s32.totalorder %s14, 0
    %p91 = por %p89, %p90
    %p92 = scmp.ne.s32.totalorder %s80, %s81
    %p93 = scmp.eq.s32.totalorder %s15, 7
    %p94 = por %p92, %p93
    %p96 = scmp.ne.s32.totalorder %s81, %s95
    %p97 = scmp.eq.s32.totalorder %s15, 0
    %p98 = por %p96, %p97
    %s99 = ssub.s32 %s16, %s28
    %s100 = ssub.s32 %s17, %s24
    %s101 = sor.u32 %s99, %s100
    %p102 = scmp.eq.s32.totalorder %s101, 0
    %s104 = sadd.s32 %s103, 1
    %s105 = scalar_select %p102, %s103, %s104
    %p108 = pneg %p102
    %p109 = scmp.eq.s32.totalorder %s9, 7
    %p110 = por %p108, %p109
    %p111 = scmp.ne.s32.totalorder %s103, %s106
    %p112 = scmp.eq.s32.totalorder %s9, 0
    %p113 = por %p111, %p112
    %p114 = scmp.ne.s32.totalorder %s103, %s106
    %p115 = scmp.eq.s32.totalorder %s14, 7
    %p116 = por %p114, %p115
    %p117 = scmp.ne.s32.totalorder %s106, %s107
    %p118 = scmp.eq.s32.totalorder %s14, 0
    %p119 = por %p117, %p118
    %p120 = scmp.ne.s32.totalorder %s106, %s107
    %p121 = scmp.eq.s32.totalorder %s15, 7
    %p122 = por %p120, %p121
    %p124 = scmp.ne.s32.totalorder %s107, %s123
    %p125 = scmp.eq.s32.totalorder %s15, 0
    %p126 = por %p124, %p125
    %p127 = scmp.le.s32.totalorder 1, %s9
    %p128 = scmp.lt.s32.totalorder %s9, 9
    %p129 = pnand %p127, %p128
    %p130 = pneg %p129
    // Predicated region
    $region9: #{hrnet_forward.9} parent=5 // pred_check
      _
    $region10: #{hrnet_forward.9} parent=5 // pred_check_branch
      %132 = sbr.rel (%p129) target = $region12
    $region11: #{hrnet_forward.9} parent=5 // pred_region
      %s133 = ssub.s32 %s9, 1
      // Predicated region
      $region13: #{hrnet_forward.9} parent=11 // pred_check
        %p134 = pneg %p70
      $region14: #{hrnet_forward.9} parent=11 // pred_check_branch
        %136 = sbr.rel (%p134) target = $region16
      $region15: #{hrnet_forward.9} parent=11 // pred_region
        _
      $region16: #{hrnet_forward.9} parent=11 // pred_fallthru
        _
      // Predicated region
      $region17: #{hrnet_forward.9} parent=11 // pred_check
        %p137 = pneg %p91
      $region18: #{hrnet_forward.9} parent=11 // pred_check_branch
        %139 = sbr.rel (%p137) target = $region20
      $region19: #{hrnet_forward.9} parent=11 // pred_region
        _
      $region20: #{hrnet_forward.9} parent=11 // pred_fallthru
        _
    $region12: #{hrnet_forward.9} parent=5 // pred_fallthru
      _
    %p140 = scmp.lt.s32.totalorder %s9, 8
    // Predicated region
    $region21: #{hrnet_forward.9} parent=5 // pred_check
      %p141 = pneg %p140
    $region22: #{hrnet_forward.9} parent=5 // pred_check_branch
      %143 = sbr.rel (%p141) target = $region24
    $region23: #{hrnet_forward.9} parent=5 // pred_region
      // Predicated region
      $region25: #{hrnet_forward.9} parent=23 // pred_check
        %p144 = pneg %p43
      $region26: #{hrnet_forward.9} parent=23 // pred_check_branch
        %146 = sbr.rel (%p144) target = $region28
      $region27: #{hrnet_forward.9} parent=23 // pred_region
        %p147 = scmp.lt.s32.totalorder %s16, 1
        %s148 = scalar_select %p147, %s16, 1
        %p149 = scmp.lt.s32.totalorder %s17, 3
        %s150 = scalar_select %p149, %s17, 3
        %s151 = smul.addr %s148, 4
        %s152 = sadd.s32 %s150, %s151
        %s153 = smul.addr %s152, 4
        %s154 = scalar_lea.vmem %s0, %s153
      $region28: #{hrnet_forward.9} parent=23 // pred_fallthru
        _
    $region24: #{hrnet_forward.9} parent=5 // pred_fallthru
      _
    %p155 = scmp.le.s32.totalorder 1, %s9
    %p156 = scmp.lt.s32.totalorder %s9, 9
    %p157 = pnand %p155, %p156
    %p158 = pneg %p157
    // Predicated region
    $region29: #{hrnet_forward.9} parent=5 // pred_check
      _
    $region30: #{hrnet_forward.9} parent=5 // pred_check_branch
      %160 = sbr.rel (%p157) target = $region32
    $region31: #{hrnet_forward.9} parent=5 // pred_region
      %s161 = ssub.s32 %s9, 1
      %p162 = scmp.lt.s32.totalorder %s18, 1
      %s163 = scalar_select %p162, %s18, 1
      %p164 = scmp.lt.s32.totalorder %s19, 3
      %s165 = scalar_select %p164, %s19, 3
      %s166 = smul.addr %s163, 4
      %s167 = sadd.s32 %s165, %s166
      %s168 = smul.addr %s167, 4
      %s169 = scalar_lea.vmem %s0, %s168
      %p170 = pneg %p49
      %p171 = pneg %p46
      %p172 = pneg %p70
      %p173 = pneg %p67
      %p174 = pneg %p91
      %p175 = pneg %p88
      %p176 = pneg %p119
      %p177 = pneg %p116
      %p178 = scmp.lt.s32.totalorder %s18, 1
      %s179 = scalar_select %p178, %s18, 1
      %p180 = scmp.lt.s32.totalorder %s19, 3
      %s181 = scalar_select %p180, %s19, 3
      %s182 = smul.addr %s179, 4
      %s183 = sadd.s32 %s181, %s182
      %s184 = smul.addr %s183, 2
      %s185 = scalar_lea.vmem %s3, %s184
      %p186 = scmp.lt.s32.totalorder %s18, 1
      %s187 = scalar_select %p186, %s18, 1
      %p188 = scmp.lt.s32.totalorder %s19, 3
      %s189 = scalar_select %p188, %s19, 3
      %s190 = smul.addr %s187, 4
      %s191 = sadd.s32 %s189, %s190
      %s192 = smul.addr %s191, 4
      %s193 = scalar_lea.vmem %s0, %s192
      %p194 = scmp.lt.s32.totalorder %s18, 1
      %s195 = scalar_select %p194, %s18, 1
      %p196 = scmp.lt.s32.totalorder %s19, 3
      %s197 = scalar_select %p196, %s19, 3
      %s198 = smul.addr %s195, 4
      %s199 = sadd.s32 %s197, %s198
      %s200 = smul.addr %s199, 2
      %s201 = scalar_lea.vmem %s3, %s200
      %v202 = vld [vmem:[%s193] sm:$0xf]
      %v203 = vld [vmem:[%s1] sm:$0x1]
      %v205 = vperm.slane %v203, 0
      %v207 = vmul.f32 %v202, %v205
      %v208 = vld [vmem:[%s2] sm:$0x1]
      %v210 = vperm.slane %v208, 0
      %v212 = vadd.f32 %v207, %v210
      %v213 = vmax.f32 %v212, 0.0
      %v214 = vpack.c.bf16 %v213, %v213
      %215 = vst [vmem:[%s201] sm:$0x3] %v214
      %p216 = scmp.lt.s32.totalorder %s18, 1
      %s217 = scalar_select %p216, %s18, 1
      %p218 = scmp.lt.s32.totalorder %s19, 3
      %s219 = scalar_select %p218, %s19, 3
      %s220 = smul.addr %s217, 4
      %s221 = sadd.s32 %s219, %s220
      %s222 = smul.addr %s221, 2
      %s223 = scalar_lea.vmem %s3, %s222
      // Predicated region
      $region33: #{hrnet_forward.9} parent=31 // pred_check
        %p224 = pneg %p116
      $region34: #{hrnet_forward.9} parent=31 // pred_check_branch
        %226 = sbr.rel (%p224) target = $region36
      $region35: #{hrnet_forward.9} parent=31 // pred_region
        _
      $region36: #{hrnet_forward.9} parent=31 // pred_fallthru
        _
    $region32: #{hrnet_forward.9} parent=5 // pred_fallthru
      _
    %p227 = scmp.le.s32.totalorder 2, %s9
    // Predicated region
    $region37: #{hrnet_forward.9} parent=5 // pred_check
      %p228 = pneg %p227
    $region38: #{hrnet_forward.9} parent=5 // pred_check_branch
      %230 = sbr.rel (%p228) target = $region40
    $region39: #{hrnet_forward.9} parent=5 // pred_region
      %s231 = ssub.s32 %s9, 2
      // Predicated region
      $region41: #{hrnet_forward.9} parent=39 // pred_check
        %p232 = pneg %p122
      $region42: #{hrnet_forward.9} parent=39 // pred_check_branch
        %234 = sbr.rel (%p232) target = $region44
      $region43: #{hrnet_forward.9} parent=39 // pred_region
        %p235 = scmp.lt.s32.totalorder %s20, 1
        %s236 = scalar_select %p235, %s20, 1
        %p237 = scmp.lt.s32.totalorder %s21, 3
        %s238 = scalar_select %p237, %s21, 3
        %s239 = smul.addr %s236, 4
        %s240 = sadd.s32 %s238, %s239
        %s241 = smul.addr %s240, 2
        %s242 = scalar_lea.vmem %s3, %s241
      $region44: #{hrnet_forward.9} parent=39 // pred_fallthru
        _
    $region40: #{hrnet_forward.9} parent=5 // pred_fallthru
      _
  $region6: #{hrnet_forward.9} parent=0 // loop_footer
    %s13 = sadd.s32 1, %s9
  $region7: #{hrnet_forward.9} parent=0 // loop_footer_branch
    %8 = sbr.rel target = $region3
  $region8: #{hrnet_forward.9} parent=0 // loop_exit
    _

// kernel: hrnet_forward.6
$region0: #{hrnet_forward.6}
  #allocation0 [shape = 'u32[]', space=smem, size = 0x4, offset = 0x4, fixed_abs, tag = 'smem constant byte address 0x4 - core index']
  #allocation1 [shape = 'u32[72,128]{1,0:T(1,128)}', space=vmem, size = 0x9000, scoped, tag = 'internal scratch']
  %s0 = inlined_call_operand.vmem [shape: bf16[2,36,9,8], index: 0, kind: input, shape index: {}]
  %s1 = inlined_call_operand.vmem [shape: bf16[9,8,128], index: 1, kind: input, shape index: {}]
  %s2 = inlined_call_operand.vmem [shape: f32[2,1,64,128], index: 2, kind: output, shape index: {0}]
  %s3 = inlined_call_operand.vmem [shape: f32[2,1,2,128], index: 3, kind: output, shape index: {1}]
  %4 = xla_tuple %s2, %s3
  %s5 = sld [smem:[#allocation0]]
  $region49: #{hrnet_forward.6} parent=0
    _
  %s7 = ssub.s32 1, %s5
  %s8 = scalar_select 0, %s7, %s5
  loop: start=0, step=1, limit=4
  $region2: #{hrnet_forward.6} parent=0 // loop_pre_header
    _
  $region3: #{hrnet_forward.6} parent=0 // loop_header
    %s10 = sphi 0, %s14
    %p11 = scmp.ge.s32.totalorder %s10, 4
    %s17 = sphi 0, %s29
    %s18 = sphi 0, %s25
    %s19 = sphi 0, %s17
    %s20 = sphi 0, %s18
    %s21 = sphi 0, %s19
    %s22 = sphi 0, %s20
    %s32 = sphi 0, %s34
    %s35 = sphi 0, %s32
    %s36 = sphi 0, %s35
    %s52 = sphi 0, %s36
    %s56 = sphi 0, %s56
    %s58 = sphi 0, %s56
    %s59 = sphi 0, %s58
    %s73 = sphi 0, %s59
    %s81 = sphi 0, %s83
    %s84 = sphi 0, %s81
    %s85 = sphi 0, %s84
    %s101 = sphi 0, %s85
    %s109 = sphi 0, %s111
    %s112 = sphi 0, %s109
    %s113 = sphi 0, %s112
    %s129 = sphi 0, %s113
  $region4: #{hrnet_forward.6} parent=0 // loop_header_branch
    %13 = sbr.rel (%p11) target = $region8
  $region5: #{hrnet_forward.6} parent=0 // loop_body
    %s15 = ssub.s32 %s10, 1
    %s16 = ssub.s32 %s10, 2
    %s23 = sadd.s32 1, %s18
    %p24 = scmp.ge.s32.totalorder %s23, 1
    %s25 = scalar_select %p24, 0, %s23
    %s26 = sadd.s32 1, %s17
    %s27 = scalar_select %p24, %s26, %s17
    %p28 = scmp.ge.s32.totalorder %s27, 2
    %s29 = scalar_select %p28, 0, %s27
    %s30 = ssub.s32 %s17, %s29
    %p31 = scmp.eq.s32.totalorder %s30, 0
    %s33 = sadd.s32 %s32, 1
    %s34 = scalar_select %p31, %s32, %s33
    %p37 = pneg %p31
    %p38 = scmp.eq.s32.totalorder %s10, 1
    %p39 = por %p37, %p38
    %p40 = scmp.ne.s32.totalorder %s32, %s35
    %p41 = scmp.eq.s32.totalorder %s10, 0
    %p42 = por %p40, %p41
    %p43 = scmp.ne.s32.totalorder %s32, %s35
    %p44 = scmp.eq.s32.totalorder %s15, 1
    %p45 = por %p43, %p44
    %p46 = scmp.ne.s32.totalorder %s35, %s36
    %p47 = scmp.eq.s32.totalorder %s15, 0
    %p48 = por %p46, %p47
    %p49 = scmp.ne.s32.totalorder %s35, %s36
    %p50 = scmp.eq.s32.totalorder %s16, 1
    %p51 = por %p49, %p50
    %p53 = scmp.ne.s32.totalorder %s36, %s52
    %p54 = scmp.eq.s32.totalorder %s16, 0
    %p55 = por %p53, %p54
    %s57 = sadd.s32 %s56, 1
    %p60 = scmp.eq.s32.totalorder %s10, 1
    %p61 = scmp.ne.s32.totalorder %s56, %s58
    %p62 = scmp.eq.s32.totalorder %s10, 0
    %p63 = por %p61, %p62
    %p64 = scmp.ne.s32.totalorder %s56, %s58
    %p65 = scmp.eq.s32.totalorder %s15, 1
    %p66 = por %p64, %p65
    %p67 = scmp.ne.s32.totalorder %s58, %s59
    %p68 = scmp.eq.s32.totalorder %s15, 0
    %p69 = por %p67, %p68
    %p70 = scmp.ne.s32.totalorder %s58, %s59
    %p71 = scmp.eq.s32.totalorder %s16, 1
    %p72 = por %p70, %p71
    %p74 = scmp.ne.s32.totalorder %s59, %s73
    %p75 = scmp.eq.s32.totalorder %s16, 0
    %p76 = por %p74, %p75
    %s77 = ssub.s32 %s17, %s29
    %s78 = ssub.s32 %s18, %s25
    %s79 = sor.u32 %s77, %s78
    %p80 = scmp.eq.s32.totalorder %s79, 0
    %s82 = sadd.s32 %s81, 1
    %s83 = scalar_select %p80, %s81, %s82
    %p86 = pneg %p80
    %p87 = scmp.eq.s32.totalorder %s10, 1
    %p88 = por %p86, %p87
    %p89 = scmp.ne.s32.totalorder %s81, %s84
    %p90 = scmp.eq.s32.totalorder %s10, 0
    %p91 = por %p89, %p90
    %p92 = scmp.ne.s32.totalorder %s81, %s84
    %p93 = scmp.eq.s32.totalorder %s15, 1
    %p94 = por %p92, %p93
    %p95 = scmp.ne.s32.totalorder %s84, %s85
    %p96 = scmp.eq.s32.totalorder %s15, 0
    %p97 = por %p95, %p96
    %p98 = scmp.ne.s32.totalorder %s84, %s85
    %p99 = scmp.eq.s32.totalorder %s16, 1
    %p100 = por %p98, %p99
    %p102 = scmp.ne.s32.totalorder %s85, %s101
    %p103 = scmp.eq.s32.totalorder %s16, 0
    %p104 = por %p102, %p103
    %s105 = ssub.s32 %s17, %s29
    %s106 = ssub.s32 %s18, %s25
    %s107 = sor.u32 %s105, %s106
    %p108 = scmp.eq.s32.totalorder %s107, 0
    %s110 = sadd.s32 %s109, 1
    %s111 = scalar_select %p108, %s109, %s110
    %p114 = pneg %p108
    %p115 = scmp.eq.s32.totalorder %s10, 1
    %p116 = por %p114, %p115
    %p117 = scmp.ne.s32.totalorder %s109, %s112
    %p118 = scmp.eq.s32.totalorder %s10, 0
    %p119 = por %p117, %p118
    %p120 = scmp.ne.s32.totalorder %s109, %s112
    %p121 = scmp.eq.s32.totalorder %s15, 1
    %p122 = por %p120, %p121
    %p123 = scmp.ne.s32.totalorder %s112, %s113
    %p124 = scmp.eq.s32.totalorder %s15, 0
    %p125 = por %p123, %p124
    %p126 = scmp.ne.s32.totalorder %s112, %s113
    %p127 = scmp.eq.s32.totalorder %s16, 1
    %p128 = por %p126, %p127
    %p130 = scmp.ne.s32.totalorder %s113, %s129
    %p131 = scmp.eq.s32.totalorder %s16, 0
    %p132 = por %p130, %p131
    %p133 = scmp.le.s32.totalorder 1, %s10
    %p134 = scmp.lt.s32.totalorder %s10, 3
    %p135 = pnand %p133, %p134
    %p136 = pneg %p135
    // Predicated region
    $region9: #{hrnet_forward.6} parent=5 // pred_check
      _
    $region10: #{hrnet_forward.6} parent=5 // pred_check_branch
      %138 = sbr.rel (%p135) target = $region12
    $region11: #{hrnet_forward.6} parent=5 // pred_region
      %s139 = ssub.s32 %s10, 1
      // Predicated region
      $region13: #{hrnet_forward.6} parent=11 // pred_check
        %p140 = pneg %p69
      $region14: #{hrnet_forward.6} parent=11 // pred_check_branch
        %142 = sbr.rel (%p140) target = $region16
      $region15: #{hrnet_forward.6} parent=11 // pred_region
        _
      $region16: #{hrnet_forward.6} parent=11 // pred_fallthru
        _
    $region12: #{hrnet_forward.6} parent=5 // pred_fallthru
      _
    %p143 = scmp.lt.s32.totalorder %s10, 2
    // Predicated region
    $region17: #{hrnet_forward.6} parent=5 // pred_check
      %p144 = pneg %p143
    $region18: #{hrnet_forward.6} parent=5 // pred_check_branch
      %146 = sbr.rel (%p144) target = $region20
    $region19: #{hrnet_forward.6} parent=5 // pred_region
      // Predicated region
      $region21: #{hrnet_forward.6} parent=19 // pred_check
        %p147 = pneg %p42
      $region22: #{hrnet_forward.6} parent=19 // pred_check_branch
        %149 = sbr.rel (%p147) target = $region24
      $region23: #{hrnet_forward.6} parent=19 // pred_region
        %p150 = scmp.lt.s32.totalorder %s17, 1
        %s151 = scalar_select %p150, %s17, 1
        %s152 = smul.addr %s151, 72
        %s153 = smul.addr %s152, 4
        %s154 = scalar_lea.vmem %s0, %s153
      $region24: #{hrnet_forward.6} parent=19 // pred_fallthru
        _
    $region20: #{hrnet_forward.6} parent=5 // pred_fallthru
      _
    %p155 = scmp.le.s32.totalorder 1, %s10
    %p156 = scmp.lt.s32.totalorder %s10, 3
    %p157 = pnand %p155, %p156
    %p158 = pneg %p157
    // Predicated region
    $region25: #{hrnet_forward.6} parent=5 // pred_check
      _
    $region26: #{hrnet_forward.6} parent=5 // pred_check_branch
      %160 = sbr.rel (%p157) target = $region28
    $region27: #{hrnet_forward.6} parent=5 // pred_region
      %s161 = ssub.s32 %s10, 1
      %p162 = scmp.lt.s32.totalorder %s19, 1
      %s163 = scalar_select %p162, %s19, 1
      %s164 = smul.addr %s163, 72
      %s165 = smul.addr %s164, 4
      %s166 = scalar_lea.vmem %s0, %s165
      %p167 = pneg %p48
      %p168 = pneg %p45
      %p169 = pneg %p69
      %p170 = pneg %p66
      %p171 = pneg %p97
      %p172 = pneg %p94
      %p173 = scmp.lt.s32.totalorder %s19, 1
      %s174 = scalar_select %p173, %s19, 1
      %p175 = scmp.lt.s32.totalorder %s20, 0
      %s176 = scalar_select %p175, %s20, 0
      %s177 = smul.addr %s176, 8
      %s178 = smul.addr %s174, 8
      %s179 = sadd.s32 %s177, %s178
      %s180 = smul.addr %s179, 8
      %s181 = scalar_lea.vmem %s2, %s180
      %p182 = pneg %p125
      %p183 = pneg %p122
      %p184 = scmp.lt.s32.totalorder %s19, 1
      %s185 = scalar_select %p184, %s19, 1
      %p186 = scmp.lt.s32.totalorder %s20, 0
      %s187 = scalar_select %p186, %s20, 0
      %s188 = sadd.s32 %s187, %s185
      %s189 = smul.addr %s188, 2
      %s190 = scalar_lea.vmem %s3, %s189
      %p191 = scmp.lt.s32.totalorder %s19, 1
      %s192 = scalar_select %p191, %s19, 1
      %s193 = smul.addr %s192, 72
      %s194 = smul.addr %s193, 4
      %s195 = scalar_lea.vmem %s0, %s194
      %p196 = scmp.lt.s32.totalorder %s19, 1
      %s197 = scalar_select %p196, %s19, 1
      %p198 = scmp.lt.s32.totalorder %s20, 0
      %s199 = scalar_select %p198, %s20, 0
      %s200 = smul.addr %s199, 8
      %s201 = smul.addr %s197, 8
      %s202 = sadd.s32 %s200, %s201
      %s203 = smul.addr %s202, 8
      %s204 = scalar_lea.vmem %s2, %s203
      %p205 = scmp.lt.s32.totalorder %s19, 1
      %s206 = scalar_select %p205, %s19, 1
      %p207 = scmp.lt.s32.totalorder %s20, 0
      %s208 = scalar_select %p207, %s20, 0
      %s209 = sadd.s32 %s208, %s206
      %s210 = smul.addr %s209, 2
      %s211 = scalar_lea.vmem %s3, %s210
      %s213 = smul.u32 %s20, 8
      %s214 = smul.u32 %s213, 2
      %s215 = smul.addr %s214, 4
      %s216 = scalar_lea.vmem %s195, %s215
      %v217 = vld [vmem:[%s216] sm:$0xf]
      %v218 = vld [vmem:[%s216 + $0x8] sm:$0xf]
      %v219 = vld [vmem:[%s216 + $0x10] sm:$0xf]
      %v220 = vld [vmem:[%s216 + $0x18] sm:$0xf]
      %v221 = vld [vmem:[%s216 + $0x20] sm:$0xf]
      %v222 = vld [vmem:[%s216 + $0x28] sm:$0xf]
      %v223 = vld [vmem:[%s216 + $0x30] sm:$0xf]
      %v224 = vld [vmem:[%s216 + $0x38] sm:$0xf]
      %v225 = vld [vmem:[%s1] sm:$0xf]
      %v234 = vunpack.c.l.b16 %v217
      %v235 = vunpack.c.l.b16 %v218
      %v236 = vunpack.c.l.b16 %v219
      %v237 = vunpack.c.l.b16 %v220
      %v238 = vunpack.c.l.b16 %v221
      %v239 = vunpack.c.l.b16 %v222
      %v240 = vunpack.c.l.b16 %v223
      %v241 = vunpack.c.l.b16 %v224
      %v242 = vpack.c.b16 %v235, %v234
      %v243 = vpack.c.b16 %v237, %v236
      %v244 = vpack.c.b16 %v239, %v238
      %v245 = vpack.c.b16 %v241, %v240
      %vm246 = vcmask 64512
      %v248 = vsel %vm246, %v242, 0
      %v251 = vsel %vm246, %v243, 0
      %v254 = vsel %vm246, %v244, 0
      %v257 = vsel %vm246, %v245, 0
      %vm259 = vcmask 1043456
      %v261 = vsel %vm259, %v225, 0
      %263 = vmatpush.bf16.msra.mxu0 0
      %264 = vmatpush.bf16.msra.mxu0 0
      %265 = vmatpush.bf16.msra.mxu0 0
      %266 = vmatpush.bf16.msra.mxu0 0
      %267 = vmatpush.bf16.msra.mxu0 0
      %268 = vmatpush.bf16.msra.mxu0 0
      %269 = vmatpush.bf16.msra.mxu0 0
      %270 = vmatpush.bf16.msra.mxu0 %v261
      %271 = vmatmul.bf16.gmra.mxu0 %v248
      %v272 = vpop.f32.mrf.mxu0
      %v273 = vadd.f32 0.0, %v272
      %v274 = vpop.f32.mrf.mxu0
      %v275 = vadd.f32 0.0, %v274
      %276 = vmatmul.bf16.gmra.mxu0 %v251
      %v277 = vpop.f32.mrf.mxu0
      %v278 = vadd.f32 0.0, %v277
      %v279 = vpop.f32.mrf.mxu0
      %v280 = vadd.f32 0.0, %v279
      %281 = vmatmul.bf16.gmra.mxu0 %v254
      %v282 = vpop.f32.mrf.mxu0
      %v283 = vadd.f32 0.0, %v282
      %v284 = vpop.f32.mrf.mxu0
      %v285 = vadd.f32 0.0, %v284
      %286 = vmatmul.bf16.gmra.mxu0 %v257
      %v287 = vpop.f32.mrf.mxu0
      %v288 = vadd.f32 0.0, %v287
      %v289 = vpop.f32.mrf.mxu0
      %v290 = vadd.f32 0.0, %v289
      %291 = vdwg.mxu0
      %292 = vst [vmem:[%s204] sm:$0xff] %v273
      %293 = vst [vmem:[%s204 + $0x8] sm:$0xff] %v275
      %294 = vst [vmem:[%s204 + $0x10] sm:$0xff] %v278
      %295 = vst [vmem:[%s204 + $0x18] sm:$0xff] %v280
      %296 = vst [vmem:[%s204 + $0x20] sm:$0xff] %v283
      %297 = vst [vmem:[%s204 + $0x28] sm:$0xff] %v285
      %298 = vst [vmem:[%s204 + $0x30] sm:$0xff] %v288
      %299 = vst [vmem:[%s204 + $0x38] sm:$0xff] %v290
      %v300 = vld [vmem:[%s204] sm:$0xff]
      %v301 = vld [vmem:[%s204 + $0x8] sm:$0xff]
      %v302 = vld [vmem:[%s204 + $0x10] sm:$0xff]
      %v303 = vld [vmem:[%s204 + $0x18] sm:$0xff]
      %v304 = vld [vmem:[%s204 + $0x20] sm:$0xff]
      %v305 = vld [vmem:[%s204 + $0x28] sm:$0xff]
      %v306 = vld [vmem:[%s204 + $0x30] sm:$0xff]
      %v307 = vld [vmem:[%s204 + $0x38] sm:$0xff]
      %s308 = sadd.s32 %s213, 9
      %s309 = smul.u32 %s308, 2
      %s310 = smul.addr %s309, 4
      %s311 = scalar_lea.vmem %s195, %s310
      %v312 = vld [vmem:[%s311] sm:$0xf]
      %v313 = vld [vmem:[%s311 + $0x8] sm:$0xf]
      %v314 = vld [vmem:[%s311 + $0x10] sm:$0xf]
      %v315 = vld [vmem:[%s311 + $0x18] sm:$0xf]
      %v316 = vld [vmem:[%s311 + $0x20] sm:$0xf]
      %v317 = vld [vmem:[%s311 + $0x28] sm:$0xf]
      %v318 = vld [vmem:[%s311 + $0x30] sm:$0xf]
      %v319 = vld [vmem:[%s311 + $0x38] sm:$0xf]
      %s320 = scalar_lea.vmem %s1, 4
      %v321 = vld [vmem:[%s320] sm:$0xf]
      %v330 = vunpack.c.l.b16 %v312
      %v331 = vunpack.c.l.b16 %v313
      %v332 = vunpack.c.l.b16 %v314
      %v333 = vunpack.c.l.b16 %v315
      %v334 = vunpack.c.l.b16 %v316
      %v335 = vunpack.c.l.b16 %v317
      %v336 = vunpack.c.l.b16 %v318
      %v337 = vunpack.c.l.b16 %v319
      %v338 = vpack.c.b16 %v331, %v330
      %v339 = vpack.c.b16 %v333, %v332
      %v340 = vpack.c.b16 %v335, %v334
      %v341 = vpack.c.b16 %v337, %v336
      %v343 = vsel %vm246, %v338, 0
      %v346 = vsel %vm246, %v339, 0
      %v349 = vsel %vm246, %v340, 0
      %v352 = vsel %vm246, %v341, 0
      %v355 = vsel %vm259, %v321, 0
      %357 = vmatpush.bf16.msra.mxu0 0
      %358 = vmatpush.bf16.msra.mxu0 0
      %359 = vmatpush.bf16.msra.mxu0 0
      %360 = vmatpush.bf16.msra.mxu0 0
      %361 = vmatpush.bf16.msra.mxu0 0
      %362 = vmatpush.bf16.msra.mxu0 0
      %363 = vmatpush.bf16.msra.mxu0 0
      %364 = vmatpush.bf16.msra.mxu0 %v355
      %365 = vmatmul.bf16.gmra.mxu0 %v343
      %v366 = vpop.f32.mrf.mxu0
      %v367 = vadd.f32 0.0, %v366
      %v368 = vpop.f32.mrf.mxu0
      %v369 = vadd.f32 0.0, %v368
      %370 = vmatmul.bf16.gmra.mxu0 %v346
      %v371 = vpop.f32.mrf.mxu0
      %v372 = vadd.f32 0.0, %v371
      %v373 = vpop.f32.mrf.mxu0
      %v374 = vadd.f32 0.0, %v373
      %375 = vmatmul.bf16.gmra.mxu0 %v349
      %v376 = vpop.f32.mrf.mxu0
      %v377 = vadd.f32 0.0, %v376
      %v378 = vpop.f32.mrf.mxu0
      %v379 = vadd.f32 0.0, %v378
      %380 = vmatmul.bf16.gmra.mxu0 %v352
      %v381 = vpop.f32.mrf.mxu0
      %v382 = vadd.f32 0.0, %v381
      %v383 = vpop.f32.mrf.mxu0
      %v384 = vadd.f32 0.0, %v383
      %385 = vdwg.mxu0
      %v386 = vadd.f32 %v300, %v367
      %v387 = vadd.f32 %v301, %v369
      %v388 = vadd.f32 %v302, %v372
      %v389 = vadd.f32 %v303, %v374
      %v390 = vadd.f32 %v304, %v377
      %v391 = vadd.f32 %v305, %v379
      %v392 = vadd.f32 %v306, %v382
      %v393 = vadd.f32 %v307, %v384
      %394 = vst [vmem:[%s204] sm:$0xff] %v386
      %395 = vst [vmem:[%s204 + $0x8] sm:$0xff] %v387
      %396 = vst [vmem:[%s204 + $0x10] sm:$0xff] %v388
      %397 = vst [vmem:[%s204 + $0x18] sm:$0xff] %v389
      %398 = vst [vmem:[%s204 + $0x20] sm:$0xff] %v390
      %399 = vst [vmem:[%s204 + $0x28] sm:$0xff] %v391
      %400 = vst [vmem:[%s204 + $0x30] sm:$0xff] %v392
      %401 = vst [vmem:[%s204 + $0x38] sm:$0xff] %v393
      %v402 = vld [vmem:[%s204] sm:$0xff]
      %v403 = vld [vmem:[%s204 + $0x8] sm:$0xff]
      %v404 = vld [vmem:[%s204 + $0x10] sm:$0xff]
      %v405 = vld [vmem:[%s204 + $0x18] sm:$0xff]
      %v406 = vld [vmem:[%s204 + $0x20] sm:$0xff]
      %v407 = vld [vmem:[%s204 + $0x28] sm:$0xff]
      %v408 = vld [vmem:[%s204 + $0x30] sm:$0xff]
      %v409 = vld [vmem:[%s204 + $0x38] sm:$0xff]
      %v410 = vld [vmem:[%s216] sm:$0xf]
      %v411 = vld [vmem:[%s216 + $0x4] sm:$0x1]
      %v412 = vld [vmem:[%s216 + $0x8] sm:$0xf]
      %v413 = vld [vmem:[%s216 + $0xc] sm:$0x1]
      %v414 = vld [vmem:[%s216 + $0x10] sm:$0xf]
      %v415 = vld [vmem:[%s216 + $0x14] sm:$0x1]
      %v416 = vld [vmem:[%s216 + $0x18] sm:$0xf]
      %v417 = vld [vmem:[%s216 + $0x1c] sm:$0x1]
      %v418 = vld [vmem:[%s216 + $0x20] sm:$0xf]
      %v419 = vld [vmem:[%s216 + $0x24] sm:$0x1]
      %v420 = vld [vmem:[%s216 + $0x28] sm:$0xf]
      %v421 = vld [vmem:[%s216 + $0x2c] sm:$0x1]
      %v422 = vld [vmem:[%s216 + $0x30] sm:$0xf]
      %v423 = vld [vmem:[%s216 + $0x34] sm:$0x1]
      %v424 = vld [vmem:[%s216 + $0x38] sm:$0xf]
      %v425 = vld [vmem:[%s216 + $0x3c] sm:$0x1]
      %vm426 = vsmask.f32 3328
      %vm427 = vsmask.f32 7440
      %vm428 = vmor %vm426, %vm427
      %v430 = vshrl.u32 %v410, 16
      %v432 = vrot.slane %v430, 4
      %v433 = vshll.u32 %v410, 16
      %v435 = vrot.slane %v433, 5
      %v436 = vor.u32 %v432, %v435
      %v437 = vrot.slane %v436, 4
      %v439 = vshll.u32 %v411, 16
      %v441 = vrot.slane %v439, 5
      %v442 = vsel %vm428, %v437, %v441
      %v444 = vshrl.u32 %v412, 16
      %v446 = vrot.slane %v444, 4
      %v447 = vshll.u32 %v412, 16
      %v449 = vrot.slane %v447, 5
      %v450 = vor.u32 %v446, %v449
      %v451 = vrot.slane %v450, 4
      %v453 = vshll.u32 %v413, 16
      %v455 = vrot.slane %v453, 5
      %v456 = vsel %vm428, %v451, %v455
      %v458 = vshrl.u32 %v414, 16
      %v460 = vrot.slane %v458, 4
      %v461 = vshll.u32 %v414, 16
      %v463 = vrot.slane %v461, 5
      %v464 = vor.u32 %v460, %v463
      %v465 = vrot.slane %v464, 4
      %v467 = vshll.u32 %v415, 16
      %v469 = vrot.slane %v467, 5
      %v470 = vsel %vm428, %v465, %v469
      %v472 = vshrl.u32 %v416, 16
      %v474 = vrot.slane %v472, 4
      %v475 = vshll.u32 %v416, 16
      %v477 = vrot.slane %v475, 5
      %v478 = vor.u32 %v474, %v477
      %v479 = vrot.slane %v478, 4
      %v481 = vshll.u32 %v417, 16
      %v483 = vrot.slane %v481, 5
      %v484 = vsel %vm428, %v479, %v483
      %v486 = vshrl.u32 %v418, 16
      %v488 = vrot.slane %v486, 4
      %v489 = vshll.u32 %v418, 16
      %v491 = vrot.slane %v489, 5
      %v492 = vor.u32 %v488, %v491
      %v493 = vrot.slane %v492, 4
      %v495 = vshll.u32 %v419, 16
      %v497 = vrot.slane %v495, 5
      %v498 = vsel %vm428, %v493, %v497
      %v500 = vshrl.u32 %v420, 16
      %v502 = vrot.slane %v500, 4
      %v503 = vshll.u32 %v420, 16
      %v505 = vrot.slane %v503, 5
      %v506 = vor.u32 %v502, %v505
      %v507 = vrot.slane %v506, 4
      %v509 = vshll.u32 %v421, 16
      %v511 = vrot.slane %v509, 5
      %v512 = vsel %vm428, %v507, %v511
      %v514 = vshrl.u32 %v422, 16
      %v516 = vrot.slane %v514, 4
      %v517 = vshll.u32 %v422, 16
      %v519 = vrot.slane %v517, 5
      %v520 = vor.u32 %v516, %v519
      %v521 = vrot.slane %v520, 4
      %v523 = vshll.u32 %v423, 16
      %v525 = vrot.slane %v523, 5
      %v526 = vsel %vm428, %v521, %v525
      %v528 = vshrl.u32 %v424, 16
      %v530 = vrot.slane %v528, 4
      %v531 = vshll.u32 %v424, 16
      %v533 = vrot.slane %v531, 5
      %v534 = vor.u32 %v530, %v533
      %v535 = vrot.slane %v534, 4
      %v537 = vshll.u32 %v425, 16
      %v539 = vrot.slane %v537, 5
      %v540 = vsel %vm428, %v535, %v539
      %s541 = scalar_lea.vmem %s1, 8
      %v542 = vld [vmem:[%s541] sm:$0xf]
      %v543 = vunpack.c.l.b16 %v442
      %v544 = vunpack.c.l.b16 %v456
      %v545 = vunpack.c.l.b16 %v470
      %v546 = vunpack.c.l.b16 %v484
      %v547 = vunpack.c.l.b16 %v498
      %v548 = vunpack.c.l.b16 %v512
      %v549 = vunpack.c.l.b16 %v526
      %v550 = vunpack.c.l.b16 %v540
      %v551 = vpack.c.b16 %v544, %v543
      %v552 = vpack.c.b16 %v546, %v545
      %v553 = vpack.c.b16 %v548, %v547
      %v554 = vpack.c.b16 %v550, %v549
      %v556 = vsel %vm246, %v551, 0
      %v559 = vsel %vm246, %v552, 0
      %v562 = vsel %vm246, %v553, 0
      %v565 = vsel %vm246, %v554, 0
      %v568 = vsel %vm259, %v542, 0
      %570 = vmatpush.bf16.msra.mxu0 0
      %571 = vmatpush.bf16.msra.mxu0 0
      %572 = vmatpush.bf16.msra.mxu0 0
      %573 = vmatpush.bf16.msra.mxu0 0
      %574 = vmatpush.bf16.msra.mxu0 0
      %575 = vmatpush.bf16.msra.mxu0 0
      %576 = vmatpush.bf16.msra.mxu0 0
      %577 = vmatpush.bf16.msra.mxu0 %v568
      %578 = vmatmul.bf16.gmra.mxu0 %v556
      %v579 = vpop.f32.mrf.mxu0
      %v580 = vadd.f32 0.0, %v579
      %v581 = vpop.f32.mrf.mxu0
      %v582 = vadd.f32 0.0, %v581
      %583 = vmatmul.bf16.gmra.mxu0 %v559
      %v584 = vpop.f32.mrf.mxu0
      %v585 = vadd.f32 0.0, %v584
      %v586 = vpop.f32.mrf.mxu0
      %v587 = vadd.f32 0.0, %v586
      %588 = vmatmul.bf16.gmra.mxu0 %v562
      %v589 = vpop.f32.mrf.mxu0
      %v590 = vadd.f32 0.0, %v589
      %v591 = vpop.f32.mrf.mxu0
      %v592 = vadd.f32 0.0, %v591
      %593 = vmatmul.bf16.gmra.mxu0 %v565
      %v594 = vpop.f32.mrf.mxu0
      %v595 = vadd.f32 0.0, %v594
      %v596 = vpop.f32.mrf.mxu0
      %v597 = vadd.f32 0.0, %v596
      %598 = vdwg.mxu0
      %v599 = vadd.f32 %v402, %v580
      %v600 = vadd.f32 %v403, %v582
      %v601 = vadd.f32 %v404, %v585
      %v602 = vadd.f32 %v405, %v587
      %v603 = vadd.f32 %v406, %v590
      %v604 = vadd.f32 %v407, %v592
      %v605 = vadd.f32 %v408, %v595
      %v606 = vadd.f32 %v409, %v597
      %607 = vst [vmem:[%s204] sm:$0xff] %v599
      %608 = vst [vmem:[%s204 + $0x8] sm:$0xff] %v600
      %609 = vst [vmem:[%s204 + $0x10] sm:$0xff] %v601
      %610 = vst [vmem:[%s204 + $0x18] sm:$0xff] %v602
      %611 = vst [vmem:[%s204 + $0x20] sm:$0xff] %v603
      %612 = vst [vmem:[%s204 + $0x28] sm:$0xff] %v604
      %613 = vst [vmem:[%s204 + $0x30] sm:$0xff] %v605
      %614 = vst [vmem:[%s204 + $0x38] sm:$0xff] %v606
      %v615 = vld [vmem:[%s204] sm:$0xff]
      %v616 = vld [vmem:[%s204 + $0x8] sm:$0xff]
      %v617 = vld [vmem:[%s204 + $0x10] sm:$0xff]
      %v618 = vld [vmem:[%s204 + $0x18] sm:$0xff]
      %v619 = vld [vmem:[%s204 + $0x20] sm:$0xff]
      %v620 = vld [vmem:[%s204 + $0x28] sm:$0xff]
      %v621 = vld [vmem:[%s204 + $0x30] sm:$0xff]
      %v622 = vld [vmem:[%s204 + $0x38] sm:$0xff]
      %s623 = sadd.s32 %s213, 18
      %s624 = smul.u32 %s623, 2
      %s625 = smul.addr %s624, 4
      %s626 = scalar_lea.vmem %s195, %s625
      %v627 = vld [vmem:[%s626] sm:$0xf]
      %v628 = vld [vmem:[%s626 + $0x8] sm:$0xf]
      %v629 = vld [vmem:[%s626 + $0x10] sm:$0xf]
      %v630 = vld [vmem:[%s626 + $0x18] sm:$0xf]
      %v631 = vld [vmem:[%s626 + $0x20] sm:$0xf]
      %v632 = vld [vmem:[%s626 + $0x28] sm:$0xf]
      %v633 = vld [vmem:[%s626 + $0x30] sm:$0xf]
      %v634 = vld [vmem:[%s626 + $0x38] sm:$0xf]
      %s635 = scalar_lea.vmem %s1, 12
      %v636 = vld [vmem:[%s635] sm:$0xf]
      %v645 = vunpack.c.l.b16 %v627
      %v646 = vunpack.c.l.b16 %v628
      %v647 = vunpack.c.l.b16 %v629
      %v648 = vunpack.c.l.b16 %v630
      %v649 = vunpack.c.l.b16 %v631
      %v650 = vunpack.c.l.b16 %v632
      %v651 = vunpack.c.l.b16 %v633
      %v652 = vunpack.c.l.b16 %v634
      %v653 = vpack.c.b16 %v646, %v645
      %v654 = vpack.c.b16 %v648, %v647
      %v655 = vpack.c.b16 %v650, %v649
      %v656 = vpack.c.b16 %v652, %v651
      %v658 = vsel %vm246, %v653, 0
      %v661 = vsel %vm246, %v654, 0
      %v664 = vsel %vm246, %v655, 0
      %v667 = vsel %vm246, %v656, 0
      %v670 = vsel %vm259, %v636, 0
      %672 = vmatpush.bf16.msra.mxu0 0
      %673 = vmatpush.bf16.msra.mxu0 0
      %674 = vmatpush.bf16.msra.mxu0 0
      %675 = vmatpush.bf16.msra.mxu0 0
      %676 = vmatpush.bf16.msra.mxu0 0
      %677 = vmatpush.bf16.msra.mxu0 0
      %678 = vmatpush.bf16.msra.mxu0 0
      %679 = vmatpush.bf16.msra.mxu0 %v670
      %680 = vmatmul.bf16.gmra.mxu0 %v658
      %v681 = vpop.f32.mrf.mxu0
      %v682 = vadd.f32 0.0, %v681
      %v683 = vpop.f32.mrf.mxu0
      %v684 = vadd.f32 0.0, %v683
      %685 = vmatmul.bf16.gmra.mxu0 %v661
      %v686 = vpop.f32.mrf.mxu0
      %v687 = vadd.f32 0.0, %v686
      %v688 = vpop.f32.mrf.mxu0
      %v689 = vadd.f32 0.0, %v688
      %690 = vmatmul.bf16.gmra.mxu0 %v664
      %v691 = vpop.f32.mrf.mxu0
      %v692 = vadd.f32 0.0, %v691
      %v693 = vpop.f32.mrf.mxu0
      %v694 = vadd.f32 0.0, %v693
      %695 = vmatmul.bf16.gmra.mxu0 %v667
      %v696 = vpop.f32.mrf.mxu0
      %v697 = vadd.f32 0.0, %v696
      %v698 = vpop.f32.mrf.mxu0
      %v699 = vadd.f32 0.0, %v698
      %700 = vdwg.mxu0
      %v701 = vadd.f32 %v615, %v682
      %v702 = vadd.f32 %v616, %v684
      %v703 = vadd.f32 %v617, %v687
      %v704 = vadd.f32 %v618, %v689
      %v705 = vadd.f32 %v619, %v692
      %v706 = vadd.f32 %v620, %v694
      %v707 = vadd.f32 %v621, %v697
      %v708 = vadd.f32 %v622, %v699
      %709 = vst [vmem:[%s204] sm:$0xff] %v701
      %710 = vst [vmem:[%s204 + $0x8] sm:$0xff] %v702
      %711 = vst [vmem:[%s204 + $0x10] sm:$0xff] %v703
      %712 = vst [vmem:[%s204 + $0x18] sm:$0xff] %v704
      %713 = vst [vmem:[%s204 + $0x20] sm:$0xff] %v705
      %714 = vst [vmem:[%s204 + $0x28] sm:$0xff] %v706
      %715 = vst [vmem:[%s204 + $0x30] sm:$0xff] %v707
      %716 = vst [vmem:[%s204 + $0x38] sm:$0xff] %v708
      %v717 = vld [vmem:[%s204] sm:$0xff]
      %v718 = vld [vmem:[%s204 + $0x8] sm:$0xff]
      %v719 = vld [vmem:[%s204 + $0x10] sm:$0xff]
      %v720 = vld [vmem:[%s204 + $0x18] sm:$0xff]
      %v721 = vld [vmem:[%s204 + $0x20] sm:$0xff]
      %v722 = vld [vmem:[%s204 + $0x28] sm:$0xff]
      %v723 = vld [vmem:[%s204 + $0x30] sm:$0xff]
      %v724 = vld [vmem:[%s204 + $0x38] sm:$0xff]
      %s725 = sadd.s32 %s213, 27
      %s726 = smul.u32 %s725, 2
      %s727 = smul.addr %s726, 4
      %s728 = scalar_lea.vmem %s195, %s727
      %v729 = vld [vmem:[%s728] sm:$0xf]
      %v730 = vld [vmem:[%s728 + $0x8] sm:$0xf]
      %v731 = vld [vmem:[%s728 + $0x10] sm:$0xf]
      %v732 = vld [vmem:[%s728 + $0x18] sm:$0xf]
      %v733 = vld [vmem:[%s728 + $0x20] sm:$0xf]
      %v734 = vld [vmem:[%s728 + $0x28] sm:$0xf]
      %v735 = vld [vmem:[%s728 + $0x30] sm:$0xf]
      %v736 = vld [vmem:[%s728 + $0x38] sm:$0xf]
      %s737 = scalar_lea.vmem %s1, 16
      %v738 = vld [vmem:[%s737] sm:$0xf]
      %v747 = vunpack.c.l.b16 %v729
      %v748 = vunpack.c.l.b16 %v730
      %v749 = vunpack.c.l.b16 %v731
      %v750 = vunpack.c.l.b16 %v732
      %v751 = vunpack.c.l.b16 %v733
      %v752 = vunpack.c.l.b16 %v734
      %v753 = vunpack.c.l.b16 %v735
      %v754 = vunpack.c.l.b16 %v736
      %v755 = vpack.c.b16 %v748, %v747
      %v756 = vpack.c.b16 %v750, %v749
      %v757 = vpack.c.b16 %v752, %v751
      %v758 = vpack.c.b16 %v754, %v753
      %v760 = vsel %vm246, %v755, 0
      %v763 = vsel %vm246, %v756, 0
      %v766 = vsel %vm246, %v757, 0
      %v769 = vsel %vm246, %v758, 0
      %v772 = vsel %vm259, %v738, 0
      %774 = vmatpush.bf16.msra.mxu0 0
      %775 = vmatpush.bf16.msra.mxu0 0
      %776 = vmatpush.bf16.msra.mxu0 0
      %777 = vmatpush.bf16.msra.mxu0 0
      %778 = vmatpush.bf16.msra.mxu0 0
      %779 = vmatpush.bf16.msra.mxu0 0
      %780 = vmatpush.bf16.msra.mxu0 0
      %781 = vmatpush.bf16.msra.mxu0 %v772
      %782 = vmatmul.bf16.gmra.mxu0 %v760
      %v783 = vpop.f32.mrf.mxu0
      %v784 = vadd.f32 0.0, %v783
      %v785 = vpop.f32.mrf.mxu0
      %v786 = vadd.f32 0.0, %v785
      %787 = vmatmul.bf16.gmra.mxu0 %v763
      %v788 = vpop.f32.mrf.mxu0
      %v789 = vadd.f32 0.0, %v788
      %v790 = vpop.f32.mrf.mxu0
      %v791 = vadd.f32 0.0, %v790
      %792 = vmatmul.bf16.gmra.mxu0 %v766
      %v793 = vpop.f32.mrf.mxu0
      %v794 = vadd.f32 0.0, %v793
      %v795 = vpop.f32.mrf.mxu0
      %v796 = vadd.f32 0.0, %v795
      %797 = vmatmul.bf16.gmra.mxu0 %v769
      %v798 = vpop.f32.mrf.mxu0
      %v799 = vadd.f32 0.0, %v798
      %v800 = vpop.f32.mrf.mxu0
      %v801 = vadd.f32 0.0, %v800
      %802 = vdwg.mxu0
      %v803 = vadd.f32 %v717, %v784
      %v804 = vadd.f32 %v718, %v786
      %v805 = vadd.f32 %v719, %v789
      %v806 = vadd.f32 %v720, %v791
      %v807 = vadd.f32 %v721, %v794
      %v808 = vadd.f32 %v722, %v796
      %v809 = vadd.f32 %v723, %v799
      %v810 = vadd.f32 %v724, %v801
      %811 = vst [vmem:[%s204] sm:$0xff] %v803
      %812 = vst [vmem:[%s204 + $0x8] sm:$0xff] %v804
      %813 = vst [vmem:[%s204 + $0x10] sm:$0xff] %v805
      %814 = vst [vmem:[%s204 + $0x18] sm:$0xff] %v806
      %815 = vst [vmem:[%s204 + $0x20] sm:$0xff] %v807
      %816 = vst [vmem:[%s204 + $0x28] sm:$0xff] %v808
      %817 = vst [vmem:[%s204 + $0x30] sm:$0xff] %v809
      %818 = vst [vmem:[%s204 + $0x38] sm:$0xff] %v810
      %v819 = vld [vmem:[%s204] sm:$0xff]
      %v820 = vld [vmem:[%s204 + $0x8] sm:$0xff]
      %v821 = vld [vmem:[%s204 + $0x10] sm:$0xff]
      %v822 = vld [vmem:[%s204 + $0x18] sm:$0xff]
      %v823 = vld [vmem:[%s204 + $0x20] sm:$0xff]
      %v824 = vld [vmem:[%s204 + $0x28] sm:$0xff]
      %v825 = vld [vmem:[%s204 + $0x30] sm:$0xff]
      %v826 = vld [vmem:[%s204 + $0x38] sm:$0xff]
      %v827 = vld [vmem:[%s626] sm:$0xf]
      %v828 = vld [vmem:[%s626 + $0x4] sm:$0x1]
      %v829 = vld [vmem:[%s626 + $0x8] sm:$0xf]
      %v830 = vld [vmem:[%s626 + $0xc] sm:$0x1]
      %v831 = vld [vmem:[%s626 + $0x10] sm:$0xf]
      %v832 = vld [vmem:[%s626 + $0x14] sm:$0x1]
      %v833 = vld [vmem:[%s626 + $0x18] sm:$0xf]
      %v834 = vld [vmem:[%s626 + $0x1c] sm:$0x1]
      %v835 = vld [vmem:[%s626 + $0x20] sm:$0xf]
      %v836 = vld [vmem:[%s626 + $0x24] sm:$0x1]
      %v837 = vld [vmem:[%s626 + $0x28] sm:$0xf]
      %v838 = vld [vmem:[%s626 + $0x2c] sm:$0x1]
      %v839 = vld [vmem:[%s626 + $0x30] sm:$0xf]
      %v840 = vld [vmem:[%s626 + $0x34] sm:$0x1]
      %v841 = vld [vmem:[%s626 + $0x38] sm:$0xf]
      %v842 = vld [vmem:[%s626 + $0x3c] sm:$0x1]
      %v844 = vshrl.u32 %v827, 16
      %v846 = vrot.slane %v844, 4
      %v847 = vshll.u32 %v827, 16
      %v849 = vrot.slane %v847, 5
      %v850 = vor.u32 %v846, %v849
      %v851 = vrot.slane %v850, 4
      %v853 = vshll.u32 %v828, 16
      %v855 = vrot.slane %v853, 5
      %v856 = vsel %vm428, %v851, %v855
      %v858 = vshrl.u32 %v829, 16
      %v860 = vrot.slane %v858, 4
      %v861 = vshll.u32 %v829, 16
      %v863 = vrot.slane %v861, 5
      %v864 = vor.u32 %v860, %v863
      %v865 = vrot.slane %v864, 4
      %v867 = vshll.u32 %v830, 16
      %v869 = vrot.slane %v867, 5
      %v870 = vsel %vm428, %v865, %v869
      %v872 = vshrl.u32 %v831, 16
      %v874 = vrot.slane %v872, 4
      %v875 = vshll.u32 %v831, 16
      %v877 = vrot.slane %v875, 5
      %v878 = vor.u32 %v874, %v877
      %v879 = vrot.slane %v878, 4
      %v881 = vshll.u32 %v832, 16
      %v883 = vrot.slane %v881, 5
      %v884 = vsel %vm428, %v879, %v883
      %v886 = vshrl.u32 %v833, 16
      %v888 = vrot.slane %v886, 4
      %v889 = vshll.u32 %v833, 16
      %v891 = vrot.slane %v889, 5
      %v892 = vor.u32 %v888, %v891
      %v893 = vrot.slane %v892, 4
      %v895 = vshll.u32 %v834, 16
      %v897 = vrot.slane %v895, 5
      %v898 = vsel %vm428, %v893, %v897
      %v900 = vshrl.u32 %v835, 16
      %v902 = vrot.slane %v900, 4
      %v903 = vshll.u32 %v835, 16
      %v905 = vrot.slane %v903, 5
      %v906 = vor.u32 %v902, %v905
      %v907 = vrot.slane %v906, 4
      %v909 = vshll.u32 %v836, 16
      %v911 = vrot.slane %v909, 5
      %v912 = vsel %vm428, %v907, %v911
      %v914 = vshrl.u32 %v837, 16
      %v916 = vrot.slane %v914, 4
      %v917 = vshll.u32 %v837, 16
      %v919 = vrot.slane %v917, 5
      %v920 = vor.u32 %v916, %v919
      %v921 = vrot.slane %v920, 4
      %v923 = vshll.u32 %v838, 16
      %v925 = vrot.slane %v923, 5
      %v926 = vsel %vm428, %v921, %v925
      %v928 = vshrl.u32 %v839, 16
      %v930 = vrot.slane %v928, 4
      %v931 = vshll.u32 %v839, 16
      %v933 = vrot.slane %v931, 5
      %v934 = vor.u32 %v930, %v933
      %v935 = vrot.slane %v934, 4
      %v937 = vshll.u32 %v840, 16
      %v939 = vrot.slane %v937, 5
      %v940 = vsel %vm428, %v935, %v939
      %v942 = vshrl.u32 %v841, 16
      %v944 = vrot.slane %v942, 4
      %v945 = vshll.u32 %v841, 16
      %v947 = vrot.slane %v945, 5
      %v948 = vor.u32 %v944, %v947
      %v949 = vrot.slane %v948, 4
      %v951 = vshll.u32 %v842, 16
      %v953 = vrot.slane %v951, 5
      %v954 = vsel %vm428, %v949, %v953
      %s955 = scalar_lea.vmem %s1, 20
      %v956 = vld [vmem:[%s955] sm:$0xf]
      %v957 = vunpack.c.l.b16 %v856
      %v958 = vunpack.c.l.b16 %v870
      %v959 = vunpack.c.l.b16 %v884
      %v960 = vunpack.c.l.b16 %v898
      %v961 = vunpack.c.l.b16 %v912
      %v962 = vunpack.c.l.b16 %v926
      %v963 = vunpack.c.l.b16 %v940
      %v964 = vunpack.c.l.b16 %v954
      %v965 = vpack.c.b16 %v958, %v957
      %v966 = vpack.c.b16 %v960, %v959
      %v967 = vpack.c.b16 %v962, %v961
      %v968 = vpack.c.b16 %v964, %v963
      %v970 = vsel %vm246, %v965, 0
      %v973 = vsel %vm246, %v966, 0
      %v976 = vsel %vm246, %v967, 0
      %v979 = vsel %vm246, %v968, 0
      %v982 = vsel %vm259, %v956, 0
      %984 = vmatpush.bf16.msra.mxu0 0
      %985 = vmatpush.bf16.msra.mxu0 0
      %986 = vmatpush.bf16.msra.mxu0 0
      %987 = vmatpush.bf16.msra.mxu0 0
      %988 = vmatpush.bf16.msra.mxu0 0
      %989 = vmatpush.bf16.msra.mxu0 0
      %990 = vmatpush.bf16.msra.mxu0 0
      %991 = vmatpush.bf16.msra.mxu0 %v982
      %992 = vmatmul.bf16.gmra.mxu0 %v970
      %v993 = vpop.f32.mrf.mxu0
      %v994 = vadd.f32 0.0, %v993
      %v995 = vpop.f32.mrf.mxu0
      %v996 = vadd.f32 0.0, %v995
      %997 = vmatmul.bf16.gmra.mxu0 %v973
      %v998 = vpop.f32.mrf.mxu0
      %v999 = vadd.f32 0.0, %v998
      %v1000 = vpop.f32.mrf.mxu0
      %v1001 = vadd.f32 0.0, %v1000
      %1002 = vmatmul.bf16.gmra.mxu0 %v976
      %v1003 = vpop.f32.mrf.mxu0
      %v1004 = vadd.f32 0.0, %v1003
      %v1005 = vpop.f32.mrf.mxu0
      %v1006 = vadd.f32 0.0, %v1005
      %1007 = vmatmul.bf16.gmra.mxu0 %v979
      %v1008 = vpop.f32.mrf.mxu0
      %v1009 = vadd.f32 0.0, %v1008
      %v1010 = vpop.f32.mrf.mxu0
      %v1011 = vadd.f32 0.0, %v1010
      %1012 = vdwg.mxu0
      %v1013 = vadd.f32 %v819, %v994
      %v1014 = vadd.f32 %v820, %v996
      %v1015 = vadd.f32 %v821, %v999
      %v1016 = vadd.f32 %v822, %v1001
      %v1017 = vadd.f32 %v823, %v1004
      %v1018 = vadd.f32 %v824, %v1006
      %v1019 = vadd.f32 %v825, %v1009
      %v1020 = vadd.f32 %v826, %v1011
      %1021 = vst [vmem:[%s204] sm:$0xff] %v1013
      %1022 = vst [vmem:[%s204 + $0x8] sm:$0xff] %v1014
      %1023 = vst [vmem:[%s204 + $0x10] sm:$0xff] %v1015
      %1024 = vst [vmem:[%s204 + $0x18] sm:$0xff] %v1016
      %1025 = vst [vmem:[%s204 + $0x20] sm:$0xff] %v1017
      %1026 = vst [vmem:[%s204 + $0x28] sm:$0xff] %v1018
      %1027 = vst [vmem:[%s204 + $0x30] sm:$0xff] %v1019
      %1028 = vst [vmem:[%s204 + $0x38] sm:$0xff] %v1020
      %v1029 = vld [vmem:[%s204] sm:$0xff]
      %v1030 = vld [vmem:[%s204 + $0x8] sm:$0xff]
      %v1031 = vld [vmem:[%s204 + $0x10] sm:$0xff]
      %v1032 = vld [vmem:[%s204 + $0x18] sm:$0xff]
      %v1033 = vld [vmem:[%s204 + $0x20] sm:$0xff]
      %v1034 = vld [vmem:[%s204 + $0x28] sm:$0xff]
      %v1035 = vld [vmem:[%s204 + $0x30] sm:$0xff]
      %v1036 = vld [vmem:[%s204 + $0x38] sm:$0xff]
      %s1037 = sadd.s32 %s213, 1
      %s1038 = smul.u32 %s1037, 2
      %s1039 = smul.addr %s1038, 4
      %s1040 = scalar_lea.vmem %s195, %s1039
      %v1041 = vld [vmem:[%s1040] sm:$0xf]
      %v1042 = vld [vmem:[%s1040 + $0x8] sm:$0xf]
      %v1043 = vld [vmem:[%s1040 + $0x10] sm:$0xf]
      %v1044 = vld [vmem:[%s1040 + $0x18] sm:$0xf]
      %v1045 = vld [vmem:[%s1040 + $0x20] sm:$0xf]
      %v1046 = vld [vmem:[%s1040 + $0x28] sm:$0xf]
      %v1047 = vld [vmem:[%s1040 + $0x30] sm:$0xf]
      %v1048 = vld [vmem:[%s1040 + $0x38] sm:$0xf]
      %s1049 = scalar_lea.vmem %s1, 24
      %v1050 = vld [vmem:[%s1049] sm:$0xf]
      %v1059 = vunpack.c.l.b16 %v1041
      %v1060 = vunpack.c.l.b16 %v1042
      %v1061 = vunpack.c.l.b16 %v1043
      %v1062 = vunpack.c.l.b16 %v1044
      %v1063 = vunpack.c.l.b16 %v1045
      %v1064 = vunpack.c.l.b16 %v1046
      %v1065 = vunpack.c.l.b16 %v1047
      %v1066 = vunpack.c.l.b16 %v1048
      %v1067 = vpack.c.b16 %v1060, %v1059
      %v1068 = vpack.c.b16 %v1062, %v1061
      %v1069 = vpack.c.b16 %v1064, %v1063
      %v1070 = vpack.c.b16 %v1066, %v1065
      %v1072 = vsel %vm246, %v1067, 0
      %v1075 = vsel %vm246, %v1068, 0
      %v1078 = vsel %vm246, %v1069, 0
      %v1081 = vsel %vm246, %v1070, 0
      %v1084 = vsel %vm259, %v1050, 0
      %1086 = vmatpush.bf16.msra.mxu0 0
      %1087 = vmatpush.bf16.msra.mxu0 0
      %1088 = vmatpush.bf16.msra.mxu0 0
      %1089 = vmatpush.bf16.msra.mxu0 0
      %1090 = vmatpush.bf16.msra.mxu0 0
      %1091 = vmatpush.bf16.msra.mxu0 0
      %1092 = vmatpush.bf16.msra.mxu0 0
      %1093 = vmatpush.bf16.msra.mxu0 %v1084
      %1094 = vmatmul.bf16.gmra.mxu0 %v1072
      %v1095 = vpop.f32.mrf.mxu0
      %v1096 = vadd.f32 0.0, %v1095
      %v1097 = vpop.f32.mrf.mxu0
      %v1098 = vadd.f32 0.0, %v1097
      %1099 = vmatmul.bf16.gmra.mxu0 %v1075
      %v1100 = vpop.f32.mrf.mxu0
      %v1101 = vadd.f32 0.0, %v1100
      %v1102 = vpop.f32.mrf.mxu0
      %v1103 = vadd.f32 0.0, %v1102
      %1104 = vmatmul.bf16.gmra.mxu0 %v1078
      %v1105 = vpop.f32.mrf.mxu0
      %v1106 = vadd.f32 0.0, %v1105
      %v1107 = vpop.f32.mrf.mxu0
      %v1108 = vadd.f32 0.0, %v1107
      %1109 = vmatmul.bf16.gmra.mxu0 %v1081
      %v1110 = vpop.f32.mrf.mxu0
      %v1111 = vadd.f32 0.0, %v1110
      %v1112 = vpop.f32.mrf.mxu0
      %v1113 = vadd.f32 0.0, %v1112
      %1114 = vdwg.mxu0
      %v1115 = vadd.f32 %v1029, %v1096
      %v1116 = vadd.f32 %v1030, %v1098
      %v1117 = vadd.f32 %v1031, %v1101
      %v1118 = vadd.f32 %v1032, %v1103
      %v1119 = vadd.f32 %v1033, %v1106
      %v1120 = vadd.f32 %v1034, %v1108
      %v1121 = vadd.f32 %v1035, %v1111
      %v1122 = vadd.f32 %v1036, %v1113
      %1123 = vst [vmem:[%s204] sm:$0xff] %v1115
      %1124 = vst [vmem:[%s204 + $0x8] sm:$0xff] %v1116
      %1125 = vst [vmem:[%s204 + $0x10] sm:$0xff] %v1117
      %1126 = vst [vmem:[%s204 + $0x18] sm:$0xff] %v1118
      %1127 = vst [vmem:[%s204 + $0x20] sm:$0xff] %v1119
      %1128 = vst [vmem:[%s204 + $0x28] sm:$0xff] %v1120
      %1129 = vst [vmem:[%s204 + $0x30] sm:$0xff] %v1121
      %1130 = vst [vmem:[%s204 + $0x38] sm:$0xff] %v1122
      %v1131 = vld [vmem:[%s204] sm:$0xff]
      %v1132 = vld [vmem:[%s204 + $0x8] sm:$0xff]
      %v1133 = vld [vmem:[%s204 + $0x10] sm:$0xff]
      %v1134 = vld [vmem:[%s204 + $0x18] sm:$0xff]
      %v1135 = vld [vmem:[%s204 + $0x20] sm:$0xff]
      %v1136 = vld [vmem:[%s204 + $0x28] sm:$0xff]
      %v1137 = vld [vmem:[%s204 + $0x30] sm:$0xff]
      %v1138 = vld [vmem:[%s204 + $0x38] sm:$0xff]
      %s1139 = sadd.s32 %s213, 10
      %s1140 = smul.u32 %s1139, 2
      %s1141 = smul.addr %s1140, 4
      %s1142 = scalar_lea.vmem %s195, %s1141
      %v1143 = vld [vmem:[%s1142] sm:$0xf]
      %v1144 = vld [vmem:[%s1142 + $0x8] sm:$0xf]
      %v1145 = vld [vmem:[%s1142 + $0x10] sm:$0xf]
      %v1146 = vld [vmem:[%s1142 + $0x18] sm:$0xf]
      %v1147 = vld [vmem:[%s1142 + $0x20] sm:$0xf]
      %v1148 = vld [vmem:[%s1142 + $0x28] sm:$0xf]
      %v1149 = vld [vmem:[%s1142 + $0x30] sm:$0xf]
      %v1150 = vld [vmem:[%s1142 + $0x38] sm:$0xf]
      %s1151 = scalar_lea.vmem %s1, 28
      %v1152 = vld [vmem:[%s1151] sm:$0xf]
      %v1161 = vunpack.c.l.b16 %v1143
      %v1162 = vunpack.c.l.b16 %v1144
      %v1163 = vunpack.c.l.b16 %v1145
      %v1164 = vunpack.c.l.b16 %v1146
      %v1165 = vunpack.c.l.b16 %v1147
      %v1166 = vunpack.c.l.b16 %v1148
      %v1167 = vunpack.c.l.b16 %v1149
      %v1168 = vunpack.c.l.b16 %v1150
      %v1169 = vpack.c.b16 %v1162, %v1161
      %v1170 = vpack.c.b16 %v1164, %v1163
      %v1171 = vpack.c.b16 %v1166, %v1165
      %v1172 = vpack.c.b16 %v1168, %v1167
      %v1174 = vsel %vm246, %v1169, 0
      %v1177 = vsel %vm246, %v1170, 0
      %v1180 = vsel %vm246, %v1171, 0
      %v1183 = vsel %vm246, %v1172, 0
      %v1186 = vsel %vm259, %v1152, 0
      %1188 = vmatpush.bf16.msra.mxu0 0
      %1189 = vmatpush.bf16.msra.mxu0 0
      %1190 = vmatpush.bf16.msra.mxu0 0
      %1191 = vmatpush.bf16.msra.mxu0 0
      %1192 = vmatpush.bf16.msra.mxu0 0
      %1193 = vmatpush.bf16.msra.mxu0 0
      %1194 = vmatpush.bf16.msra.mxu0 0
      %1195 = vmatpush.bf16.msra.mxu0 %v1186
      %1196 = vmatmul.bf16.gmra.mxu0 %v1174
      %v1197 = vpop.f32.mrf.mxu0
      %v1198 = vadd.f32 0.0, %v1197
      %v1199 = vpop.f32.mrf.mxu0
      %v1200 = vadd.f32 0.0, %v1199
      %1201 = vmatmul.bf16.gmra.mxu0 %v1177
      %v1202 = vpop.f32.mrf.mxu0
      %v1203 = vadd.f32 0.0, %v1202
      %v1204 = vpop.f32.mrf.mxu0
      %v1205 = vadd.f32 0.0, %v1204
      %1206 = vmatmul.bf16.gmra.mxu0 %v1180
      %v1207 = vpop.f32.mrf.mxu0
      %v1208 = vadd.f32 0.0, %v1207
      %v1209 = vpop.f32.mrf.mxu0
      %v1210 = vadd.f32 0.0, %v1209
      %1211 = vmatmul.bf16.gmra.mxu0 %v1183
      %v1212 = vpop.f32.mrf.mxu0
      %v1213 = vadd.f32 0.0, %v1212
      %v1214 = vpop.f32.mrf.mxu0
      %v1215 = vadd.f32 0.0, %v1214
      %1216 = vdwg.mxu0
      %v1217 = vadd.f32 %v1131, %v1198
      %v1218 = vadd.f32 %v1132, %v1200
      %v1219 = vadd.f32 %v1133, %v1203
      %v1220 = vadd.f32 %v1134, %v1205
      %v1221 = vadd.f32 %v1135, %v1208
      %v1222 = vadd.f32 %v1136, %v1210
      %v1223 = vadd.f32 %v1137, %v1213
      %v1224 = vadd.f32 %v1138, %v1215
      %1225 = vst [vmem:[%s204] sm:$0xff] %v1217
      %1226 = vst [vmem:[%s204 + $0x8] sm:$0xff] %v1218
      %1227 = vst [vmem:[%s204 + $0x10] sm:$0xff] %v1219
      %1228 = vst [vmem:[%s204 + $0x18] sm:$0xff] %v1220
      %1229 = vst [vmem:[%s204 + $0x20] sm:$0xff] %v1221
      %1230 = vst [vmem:[%s204 + $0x28] sm:$0xff] %v1222
      %1231 = vst [vmem:[%s204 + $0x30] sm:$0xff] %v1223
      %1232 = vst [vmem:[%s204 + $0x38] sm:$0xff] %v1224
      %v1233 = vld [vmem:[%s204] sm:$0xff]
      %v1234 = vld [vmem:[%s204 + $0x8] sm:$0xff]
      %v1235 = vld [vmem:[%s204 + $0x10] sm:$0xff]
      %v1236 = vld [vmem:[%s204 + $0x18] sm:$0xff]
      %v1237 = vld [vmem:[%s204 + $0x20] sm:$0xff]
      %v1238 = vld [vmem:[%s204 + $0x28] sm:$0xff]
      %v1239 = vld [vmem:[%s204 + $0x30] sm:$0xff]
      %v1240 = vld [vmem:[%s204 + $0x38] sm:$0xff]
      %v1241 = vld [vmem:[%s1040] sm:$0xf]
      %v1242 = vld [vmem:[%s1040 + $0x4] sm:$0x1]
      %v1243 = vld [vmem:[%s1040 + $0x8] sm:$0xf]
      %v1244 = vld [vmem:[%s1040 + $0xc] sm:$0x1]
      %v1245 = vld [vmem:[%s1040 + $0x10] sm:$0xf]
      %v1246 = vld [vmem:[%s1040 + $0x14] sm:$0x1]
      %v1247 = vld [vmem:[%s1040 + $0x18] sm:$0xf]
      %v1248 = vld [vmem:[%s1040 + $0x1c] sm:$0x1]
      %v1249 = vld [vmem:[%s1040 + $0x20] sm:$0xf]
      %v1250 = vld [vmem:[%s1040 + $0x24] sm:$0x1]
      %v1251 = vld [vmem:[%s1040 + $0x28] sm:$0xf]
      %v1252 = vld [vmem:[%s1040 + $0x2c] sm:$0x1]
      %v1253 = vld [vmem:[%s1040 + $0x30] sm:$0xf]
      %v1254 = vld [vmem:[%s1040 + $0x34] sm:$0x1]
      %v1255 = vld [vmem:[%s1040 + $0x38] sm:$0xf]
      %v1256 = vld [vmem:[%s1040 + $0x3c] sm:$0x1]
      %v1258 = vshrl.u32 %v1241, 16
      %v1260 = vrot.slane %v1258, 4
      %v1261 = vshll.u32 %v1241, 16
      %v1263 = vrot.slane %v1261, 5
      %v1264 = vor.u32 %v1260, %v1263
      %v1265 = vrot.slane %v1264, 4
      %v1267 = vshll.u32 %v1242, 16
      %v1269 = vrot.slane %v1267, 5
      %v1270 = vsel %vm428, %v1265, %v1269
      %v1272 = vshrl.u32 %v1243, 16
      %v1274 = vrot.slane %v1272, 4
      %v1275 = vshll.u32 %v1243, 16
      %v1277 = vrot.slane %v1275, 5
      %v1278 = vor.u32 %v1274, %v1277
      %v1279 = vrot.slane %v1278, 4
      %v1281 = vshll.u32 %v1244, 16
      %v1283 = vrot.slane %v1281, 5
      %v1284 = vsel %vm428, %v1279, %v1283
      %v1286 = vshrl.u32 %v1245, 16
      %v1288 = vrot.slane %v1286, 4
      %v1289 = vshll.u32 %v1245, 16
      %v1291 = vrot.slane %v1289, 5
      %v1292 = vor.u32 %v1288, %v1291
      %v1293 = vrot.slane %v1292, 4
      %v1295 = vshll.u32 %v1246, 16
      %v1297 = vrot.slane %v1295, 5
      %v1298 = vsel %vm428, %v1293, %v1297
      %v1300 = vshrl.u32 %v1247, 16
      %v1302 = vrot.slane %v1300, 4
      %v1303 = vshll.u32 %v1247, 16
      %v1305 = vrot.slane %v1303, 5
      %v1306 = vor.u32 %v1302, %v1305
      %v1307 = vrot.slane %v1306, 4
      %v1309 = vshll.u32 %v1248, 16
      %v1311 = vrot.slane %v1309, 5
      %v1312 = vsel %vm428, %v1307, %v1311
      %v1314 = vshrl.u32 %v1249, 16
      %v1316 = vrot.slane %v1314, 4
      %v1317 = vshll.u32 %v1249, 16
      %v1319 = vrot.slane %v1317, 5
      %v1320 = vor.u32 %v1316, %v1319
      %v1321 = vrot.slane %v1320, 4
      %v1323 = vshll.u32 %v1250, 16
      %v1325 = vrot.slane %v1323, 5
      %v1326 = vsel %vm428, %v1321, %v1325
      %v1328 = vshrl.u32 %v1251, 16
      %v1330 = vrot.slane %v1328, 4
      %v1331 = vshll.u32 %v1251, 16
      %v1333 = vrot.slane %v1331, 5
      %v1334 = vor.u32 %v1330, %v1333
      %v1335 = vrot.slane %v1334, 4
      %v1337 = vshll.u32 %v1252, 16
      %v1339 = vrot.slane %v1337, 5
      %v1340 = vsel %vm428, %v1335, %v1339
      %v1342 = vshrl.u32 %v1253, 16
      %v1344 = vrot.slane %v1342, 4
      %v1345 = vshll.u32 %v1253, 16
      %v1347 = vrot.slane %v1345, 5
      %v1348 = vor.u32 %v1344, %v1347
      %v1349 = vrot.slane %v1348, 4
      %v1351 = vshll.u32 %v1254, 16
      %v1353 = vrot.slane %v1351, 5
      %v1354 = vsel %vm428, %v1349, %v1353
      %v1356 = vshrl.u32 %v1255, 16
      %v1358 = vrot.slane %v1356, 4
      %v1359 = vshll.u32 %v1255, 16
      %v1361 = vrot.slane %v1359, 5
      %v1362 = vor.u32 %v1358, %v1361
      %v1363 = vrot.slane %v1362, 4
      %v1365 = vshll.u32 %v1256, 16
      %v1367 = vrot.slane %v1365, 5
      %v1368 = vsel %vm428, %v1363, %v1367
      %s1369 = scalar_lea.vmem %s1, 32
      %v1370 = vld [vmem:[%s1369] sm:$0xf]
      %v1371 = vunpack.c.l.b16 %v1270
      %v1372 = vunpack.c.l.b16 %v1284
      %v1373 = vunpack.c.l.b16 %v1298
      %v1374 = vunpack.c.l.b16 %v1312
      %v1375 = vunpack.c.l.b16 %v1326
      %v1376 = vunpack.c.l.b16 %v1340
      %v1377 = vunpack.c.l.b16 %v1354
      %v1378 = vunpack.c.l.b16 %v1368
      %v1379 = vpack.c.b16 %v1372, %v1371
      %v1380 = vpack.c.b16 %v1374, %v1373
      %v1381 = vpack.c.b16 %v1376, %v1375
      %v1382 = vpack.c.b16 %v1378, %v1377
      %v1384 = vsel %vm246, %v1379, 0
      %v1387 = vsel %vm246, %v1380, 0
      %v1390 = vsel %vm246, %v1381, 0
      %v1393 = vsel %vm246, %v1382, 0
      %v1396 = vsel %vm259, %v1370, 0
      %1398 = vmatpush.bf16.msra.mxu0 0
      %1399 = vmatpush.bf16.msra.mxu0 0
      %1400 = vmatpush.bf16.msra.mxu0 0
      %1401 = vmatpush.bf16.msra.mxu0 0
      %1402 = vmatpush.bf16.msra.mxu0 0
      %1403 = vmatpush.bf16.msra.mxu0 0
      %1404 = vmatpush.bf16.msra.mxu0 0
      %1405 = vmatpush.bf16.msra.mxu0 %v1396
      %1406 = vmatmul.bf16.gmra.mxu0 %v1384
      %v1407 = vpop.f32.mrf.mxu0
      %v1408 = vadd.f32 0.0, %v1407
      %v1409 = vpop.f32.mrf.mxu0
      %v1410 = vadd.f32 0.0, %v1409
      %1411 = vmatmul.bf16.gmra.mxu0 %v1387
      %v1412 = vpop.f32.mrf.mxu0
      %v1413 = vadd.f32 0.0, %v1412
      %v1414 = vpop.f32.mrf.mxu0
      %v1415 = vadd.f32 0.0, %v1414
      %1416 = vmatmul.bf16.gmra.mxu0 %v1390
      %v1417 = vpop.f32.mrf.mxu0
      %v1418 = vadd.f32 0.0, %v1417
      %v1419 = vpop.f32.mrf.mxu0
      %v1420 = vadd.f32 0.0, %v1419
      %1421 = vmatmul.bf16.gmra.mxu0 %v1393
      %v1422 = vpop.f32.mrf.mxu0
      %v1423 = vadd.f32 0.0, %v1422
      %v1424 = vpop.f32.mrf.mxu0
      %v1425 = vadd.f32 0.0, %v1424
      %1426 = vdwg.mxu0
      %v1427 = vadd.f32 %v1233, %v1408
      %v1428 = vadd.f32 %v1234, %v1410
      %v1429 = vadd.f32 %v1235, %v1413
      %v1430 = vadd.f32 %v1236, %v1415
      %v1431 = vadd.f32 %v1237, %v1418
      %v1432 = vadd.f32 %v1238, %v1420
      %v1433 = vadd.f32 %v1239, %v1423
      %v1434 = vadd.f32 %v1240, %v1425
      %1435 = vst [vmem:[%s204] sm:$0xff] %v1427
      %1436 = vst [vmem:[%s204 + $0x8] sm:$0xff] %v1428
      %1437 = vst [vmem:[%s204 + $0x10] sm:$0xff] %v1429
      %1438 = vst [vmem:[%s204 + $0x18] sm:$0xff] %v1430
      %1439 = vst [vmem:[%s204 + $0x20] sm:$0xff] %v1431
      %1440 = vst [vmem:[%s204 + $0x28] sm:$0xff] %v1432
      %1441 = vst [vmem:[%s204 + $0x30] sm:$0xff] %v1433
      %1442 = vst [vmem:[%s204 + $0x38] sm:$0xff] %v1434
      %v1443 = vld [vmem:[%s204] sm:$0xff]
      %v1444 = vld [vmem:[%s204 + $0x8] sm:$0xff]
      %v1445 = vld [vmem:[%s204 + $0x10] sm:$0xff]
      %v1446 = vld [vmem:[%s204 + $0x18] sm:$0xff]
      %v1447 = vld [vmem:[%s204 + $0x20] sm:$0xff]
      %v1448 = vld [vmem:[%s204 + $0x28] sm:$0xff]
      %v1449 = vld [vmem:[%s204 + $0x30] sm:$0xff]
      %v1450 = vld [vmem:[%s204 + $0x38] sm:$0xff]
      %v1451 = vadd.f32 %v1443, %v1444
      %v1452 = vadd.f32 %v1451, %v1445
      %v1453 = vadd.f32 %v1452, %v1446
      %v1454 = vadd.f32 %v1453, %v1447
      %v1455 = vadd.f32 %v1454, %v1448
      %v1456 = vadd.f32 %v1455, %v1449
      %v1457 = vadd.f32 %v1456, %v1450
      %v1458 = vrot.slane %v1457, 4
      %v1459 = vadd.f32 %v1457, %v1458
      %v1460 = vrot.slane %v1459, 2
      %v1461 = vadd.f32 %v1459, %v1460
      %v1462 = vrot.slane %v1461, 1
      %v1463 = vadd.f32 %v1461, %v1462
      %1464 = vst [vmem:[%s211] sm:$0x1] %v1463
      %v1465 = vmul.f32 %v1443, %v1443
      %v1466 = vmul.f32 %v1444, %v1444
      %v1467 = vmul.f32 %v1445, %v1445
      %v1468 = vmul.f32 %v1446, %v1446
      %v1469 = vmul.f32 %v1447, %v1447
      %v1470 = vmul.f32 %v1448, %v1448
      %v1471 = vmul.f32 %v1449, %v1449
      %v1472 = vmul.f32 %v1450, %v1450
      %v1473 = vadd.f32 %v1465, %v1466
      %v1474 = vadd.f32 %v1473, %v1467
      %v1475 = vadd.f32 %v1474, %v1468
      %v1476 = vadd.f32 %v1475, %v1469
      %v1477 = vadd.f32 %v1476, %v1470
      %v1478 = vadd.f32 %v1477, %v1471
      %v1479 = vadd.f32 %v1478, %v1472
      %v1480 = vrot.slane %v1479, 4
      %v1481 = vadd.f32 %v1479, %v1480
      %v1482 = vrot.slane %v1481, 2
      %v1483 = vadd.f32 %v1481, %v1482
      %v1484 = vrot.slane %v1483, 1
      %v1485 = vadd.f32 %v1483, %v1484
      %1486 = vst [vmem:[%s211 + $0x1] sm:$0x1] %v1485
      %p1487 = scmp.lt.s32.totalorder %s19, 1
      %s1488 = scalar_select %p1487, %s19, 1
      %p1489 = scmp.lt.s32.totalorder %s20, 0
      %s1490 = scalar_select %p1489, %s20, 0
      %s1491 = smul.addr %s1490, 8
      %s1492 = smul.addr %s1488, 8
      %s1493 = sadd.s32 %s1491, %s1492
      %s1494 = smul.addr %s1493, 8
      %s1495 = scalar_lea.vmem %s2, %s1494
      %p1496 = scmp.lt.s32.totalorder %s19, 1
      %s1497 = scalar_select %p1496, %s19, 1
      %p1498 = scmp.lt.s32.totalorder %s20, 0
      %s1499 = scalar_select %p1498, %s20, 0
      %s1500 = sadd.s32 %s1499, %s1497
      %s1501 = smul.addr %s1500, 2
      %s1502 = scalar_lea.vmem %s3, %s1501
      // Predicated region
      $region29: #{hrnet_forward.6} parent=27 // pred_check
        %p1503 = pneg %p94
      $region30: #{hrnet_forward.6} parent=27 // pred_check_branch
        %1505 = sbr.rel (%p1503) target = $region32
      $region31: #{hrnet_forward.6} parent=27 // pred_region
        _
      $region32: #{hrnet_forward.6} parent=27 // pred_fallthru
        _
      // Predicated region
      $region33: #{hrnet_forward.6} parent=27 // pred_check
        %p1506 = pneg %p122
      $region34: #{hrnet_forward.6} parent=27 // pred_check_branch
        %1508 = sbr.rel (%p1506) target = $region36
      $region35: #{hrnet_forward.6} parent=27 // pred_region
        _
      $region36: #{hrnet_forward.6} parent=27 // pred_fallthru
        _
    $region28: #{hrnet_forward.6} parent=5 // pred_fallthru
      _
    %p1509 = scmp.le.s32.totalorder 2, %s10
    // Predicated region
    $region37: #{hrnet_forward.6} parent=5 // pred_check
      %p1510 = pneg %p1509
    $region38: #{hrnet_forward.6} parent=5 // pred_check_branch
      %1512 = sbr.rel (%p1510) target = $region40
    $region39: #{hrnet_forward.6} parent=5 // pred_region
      %s1513 = ssub.s32 %s10, 2
      // Predicated region
      $region41: #{hrnet_forward.6} parent=39 // pred_check
        %p1514 = pneg %p100
      $region42: #{hrnet_forward.6} parent=39 // pred_check_branch
        %1516 = sbr.rel (%p1514) target = $region44
      $region43: #{hrnet_forward.6} parent=39 // pred_region
        %p1517 = scmp.lt.s32.totalorder %s21, 1
        %s1518 = scalar_select %p1517, %s21, 1
        %p1519 = scmp.lt.s32.totalorder %s22, 0
        %s1520 = scalar_select %p1519, %s22, 0
        %s1521 = smul.addr %s1520, 8
        %s1522 = smul.addr %s1518, 8
        %s1523 = sadd.s32 %s1521, %s1522
        %s1524 = smul.addr %s1523, 8
        %s1525 = scalar_lea.vmem %s2, %s1524
      $region44: #{hrnet_forward.6} parent=39 // pred_fallthru
        _
      // Predicated region
      $region45: #{hrnet_forward.6} parent=39 // pred_check
        %p1526 = pneg %p128
      $region46: #{hrnet_forward.6} parent=39 // pred_check_branch
        %1528 = sbr.rel (%p1526) target = $region48
      $region47: #{hrnet_forward.6} parent=39 // pred_region
        %p1529 = scmp.lt.s32.totalorder %s21, 1
        %s1530 = scalar_select %p1529, %s21, 1
        %p1531 = scmp.lt.s32.totalorder %s22, 0
        %s1532 = scalar_select %p1531, %s22, 0
        %s1533 = sadd.s32 %s1532, %s1530
        %s1534 = smul.addr %s1533, 2
        %s1535 = scalar_lea.vmem %s3, %s1534
      $region48: #{hrnet_forward.6} parent=39 // pred_fallthru
        _
    $region40: #{hrnet_forward.6} parent=5 // pred_fallthru
      _
  $region6: #{hrnet_forward.6} parent=0 // loop_footer
    %s14 = sadd.s32 1, %s10
  $region7: #{hrnet_forward.6} parent=0 // loop_footer_branch
    %9 = sbr.rel target = $region3
  $region8: #{hrnet_forward.6} parent=0 // loop_exit
    _

// kernel: hrnet_forward.8
$region0: #{hrnet_forward.8}
  #allocation0 [shape = 'u32[]', space=smem, size = 0x4, offset = 0x4, fixed_abs, tag = 'smem constant byte address 0x4 - core index']
  #allocation1 [shape = 'u32[72,128]{1,0:T(1,128)}', space=vmem, size = 0x9000, scoped, tag = 'internal scratch']
  %s0 = inlined_call_operand.vmem [shape: bf16[2,20,5,128], index: 0, kind: input, shape index: {}]
  %s1 = inlined_call_operand.vmem [shape: bf16[9,128,128], index: 1, kind: input, shape index: {}]
  %s2 = inlined_call_operand.vmem [shape: f32[2,4,4,128], index: 2, kind: output, shape index: {0}]
  %s3 = inlined_call_operand.vmem [shape: f32[2,4,2,128], index: 3, kind: output, shape index: {1}]
  %4 = xla_tuple %s2, %s3
  %s5 = sld [smem:[#allocation0]]
  $region49: #{hrnet_forward.8} parent=0
    _
  %s7 = ssub.s32 1, %s5
  %s8 = scalar_select 0, %s7, %s5
  loop: start=0, step=1, limit=10
  $region2: #{hrnet_forward.8} parent=0 // loop_pre_header
    _
  $region3: #{hrnet_forward.8} parent=0 // loop_header
    %s10 = sphi 0, %s14
    %p11 = scmp.ge.s32.totalorder %s10, 10
    %s17 = sphi 0, %s29
    %s18 = sphi 0, %s25
    %s19 = sphi 0, %s17
    %s20 = sphi 0, %s18
    %s21 = sphi 0, %s19
    %s22 = sphi 0, %s20
    %s32 = sphi 0, %s34
    %s35 = sphi 0, %s32
    %s36 = sphi 0, %s35
    %s52 = sphi 0, %s36
    %s56 = sphi 0, %s56
    %s58 = sphi 0, %s56
    %s59 = sphi 0, %s58
    %s73 = sphi 0, %s59
    %s81 = sphi 0, %s83
    %s84 = sphi 0, %s81
    %s85 = sphi 0, %s84
    %s101 = sphi 0, %s85
    %s109 = sphi 0, %s111
    %s112 = sphi 0, %s109
    %s113 = sphi 0, %s112
    %s129 = sphi 0, %s113
  $region4: #{hrnet_forward.8} parent=0 // loop_header_branch
    %13 = sbr.rel (%p11) target = $region8
  $region5: #{hrnet_forward.8} parent=0 // loop_body
    %s15 = ssub.s32 %s10, 1
    %s16 = ssub.s32 %s10, 2
    %s23 = sadd.s32 1, %s18
    %p24 = scmp.ge.s32.totalorder %s23, 4
    %s25 = scalar_select %p24, 0, %s23
    %s26 = sadd.s32 1, %s17
    %s27 = scalar_select %p24, %s26, %s17
    %p28 = scmp.ge.s32.totalorder %s27, 2
    %s29 = scalar_select %p28, 0, %s27
    %s30 = ssub.s32 %s17, %s29
    %p31 = scmp.eq.s32.totalorder %s30, 0
    %s33 = sadd.s32 %s32, 1
    %s34 = scalar_select %p31, %s32, %s33
    %p37 = pneg %p31
    %p38 = scmp.eq.s32.totalorder %s10, 7
    %p39 = por %p37, %p38
    %p40 = scmp.ne.s32.totalorder %s32, %s35
    %p41 = scmp.eq.s32.totalorder %s10, 0
    %p42 = por %p40, %p41
    %p43 = scmp.ne.s32.totalorder %s32, %s35
    %p44 = scmp.eq.s32.totalorder %s15, 7
    %p45 = por %p43, %p44
    %p46 = scmp.ne.s32.totalorder %s35, %s36
    %p47 = scmp.eq.s32.totalorder %s15, 0
    %p48 = por %p46, %p47
    %p49 = scmp.ne.s32.totalorder %s35, %s36
    %p50 = scmp.eq.s32.totalorder %s16, 7
    %p51 = por %p49, %p50
    %p53 = scmp.ne.s32.totalorder %s36, %s52
    %p54 = scmp.eq.s32.totalorder %s16, 0
    %p55 = por %p53, %p54
    %s57 = sadd.s32 %s56, 1
    %p60 = scmp.eq.s32.totalorder %s10, 7
    %p61 = scmp.ne.s32.totalorder %s56, %s58
    %p62 = scmp.eq.s32.totalorder %s10, 0
    %p63 = por %p61, %p62
    %p64 = scmp.ne.s32.totalorder %s56, %s58
    %p65 = scmp.eq.s32.totalorder %s15, 7
    %p66 = por %p64, %p65
    %p67 = scmp.ne.s32.totalorder %s58, %s59
    %p68 = scmp.eq.s32.totalorder %s15, 0
    %p69 = por %p67, %p68
    %p70 = scmp.ne.s32.totalorder %s58, %s59
    %p71 = scmp.eq.s32.totalorder %s16, 7
    %p72 = por %p70, %p71
    %p74 = scmp.ne.s32.totalorder %s59, %s73
    %p75 = scmp.eq.s32.totalorder %s16, 0
    %p76 = por %p74, %p75
    %s77 = ssub.s32 %s17, %s29
    %s78 = ssub.s32 %s18, %s25
    %s79 = sor.u32 %s77, %s78
    %p80 = scmp.eq.s32.totalorder %s79, 0
    %s82 = sadd.s32 %s81, 1
    %s83 = scalar_select %p80, %s81, %s82
    %p86 = pneg %p80
    %p87 = scmp.eq.s32.totalorder %s10, 7
    %p88 = por %p86, %p87
    %p89 = scmp.ne.s32.totalorder %s81, %s84
    %p90 = scmp.eq.s32.totalorder %s10, 0
    %p91 = por %p89, %p90
    %p92 = scmp.ne.s32.totalorder %s81, %s84
    %p93 = scmp.eq.s32.totalorder %s15, 7
    %p94 = por %p92, %p93
    %p95 = scmp.ne.s32.totalorder %s84, %s85
    %p96 = scmp.eq.s32.totalorder %s15, 0
    %p97 = por %p95, %p96
    %p98 = scmp.ne.s32.totalorder %s84, %s85
    %p99 = scmp.eq.s32.totalorder %s16, 7
    %p100 = por %p98, %p99
    %p102 = scmp.ne.s32.totalorder %s85, %s101
    %p103 = scmp.eq.s32.totalorder %s16, 0
    %p104 = por %p102, %p103
    %s105 = ssub.s32 %s17, %s29
    %s106 = ssub.s32 %s18, %s25
    %s107 = sor.u32 %s105, %s106
    %p108 = scmp.eq.s32.totalorder %s107, 0
    %s110 = sadd.s32 %s109, 1
    %s111 = scalar_select %p108, %s109, %s110
    %p114 = pneg %p108
    %p115 = scmp.eq.s32.totalorder %s10, 7
    %p116 = por %p114, %p115
    %p117 = scmp.ne.s32.totalorder %s109, %s112
    %p118 = scmp.eq.s32.totalorder %s10, 0
    %p119 = por %p117, %p118
    %p120 = scmp.ne.s32.totalorder %s109, %s112
    %p121 = scmp.eq.s32.totalorder %s15, 7
    %p122 = por %p120, %p121
    %p123 = scmp.ne.s32.totalorder %s112, %s113
    %p124 = scmp.eq.s32.totalorder %s15, 0
    %p125 = por %p123, %p124
    %p126 = scmp.ne.s32.totalorder %s112, %s113
    %p127 = scmp.eq.s32.totalorder %s16, 7
    %p128 = por %p126, %p127
    %p130 = scmp.ne.s32.totalorder %s113, %s129
    %p131 = scmp.eq.s32.totalorder %s16, 0
    %p132 = por %p130, %p131
    %p133 = scmp.le.s32.totalorder 1, %s10
    %p134 = scmp.lt.s32.totalorder %s10, 9
    %p135 = pnand %p133, %p134
    %p136 = pneg %p135
    // Predicated region
    $region9: #{hrnet_forward.8} parent=5 // pred_check
      _
    $region10: #{hrnet_forward.8} parent=5 // pred_check_branch
      %138 = sbr.rel (%p135) target = $region12
    $region11: #{hrnet_forward.8} parent=5 // pred_region
      %s139 = ssub.s32 %s10, 1
      // Predicated region
      $region13: #{hrnet_forward.8} parent=11 // pred_check
        %p140 = pneg %p69
      $region14: #{hrnet_forward.8} parent=11 // pred_check_branch
        %142 = sbr.rel (%p140) target = $region16
      $region15: #{hrnet_forward.8} parent=11 // pred_region
        _
      $region16: #{hrnet_forward.8} parent=11 // pred_fallthru
        _
    $region12: #{hrnet_forward.8} parent=5 // pred_fallthru
      _
    %p143 = scmp.lt.s32.totalorder %s10, 8
    // Predicated region
    $region17: #{hrnet_forward.8} parent=5 // pred_check
      %p144 = pneg %p143
    $region18: #{hrnet_forward.8} parent=5 // pred_check_branch
      %146 = sbr.rel (%p144) target = $region20
    $region19: #{hrnet_forward.8} parent=5 // pred_region
      // Predicated region
      $region21: #{hrnet_forward.8} parent=19 // pred_check
        %p147 = pneg %p42
      $region22: #{hrnet_forward.8} parent=19 // pred_check_branch
        %149 = sbr.rel (%p147) target = $region24
      $region23: #{hrnet_forward.8} parent=19 // pred_region
        %p150 = scmp.lt.s32.totalorder %s17, 1
        %s151 = scalar_select %p150, %s17, 1
        %s152 = smul.addr %s151, 20
        %s153 = smul.addr %s152, 4
        %s154 = scalar_lea.vmem %s0, %s153
      $region24: #{hrnet_forward.8} parent=19 // pred_fallthru
        _
    $region20: #{hrnet_forward.8} parent=5 // pred_fallthru
      _
    %p155 = scmp.le.s32.totalorder 1, %s10
    %p156 = scmp.lt.s32.totalorder %s10, 9
    %p157 = pnand %p155, %p156
    %p158 = pneg %p157
    // Predicated region
    $region25: #{hrnet_forward.8} parent=5 // pred_check
      _
    $region26: #{hrnet_forward.8} parent=5 // pred_check_branch
      %160 = sbr.rel (%p157) target = $region28
    $region27: #{hrnet_forward.8} parent=5 // pred_region
      %s161 = ssub.s32 %s10, 1
      %p162 = scmp.lt.s32.totalorder %s19, 1
      %s163 = scalar_select %p162, %s19, 1
      %s164 = smul.addr %s163, 20
      %s165 = smul.addr %s164, 4
      %s166 = scalar_lea.vmem %s0, %s165
      %p167 = pneg %p48
      %p168 = pneg %p45
      %p169 = pneg %p69
      %p170 = pneg %p66
      %p171 = pneg %p97
      %p172 = pneg %p94
      %p173 = scmp.lt.s32.totalorder %s19, 1
      %s174 = scalar_select %p173, %s19, 1
      %p175 = scmp.lt.s32.totalorder %s20, 3
      %s176 = scalar_select %p175, %s20, 3
      %s177 = smul.addr %s174, 4
      %s178 = sadd.s32 %s176, %s177
      %s179 = smul.addr %s178, 4
      %s180 = scalar_lea.vmem %s2, %s179
      %p181 = pneg %p125
      %p182 = pneg %p122
      %p183 = scmp.lt.s32.totalorder %s19, 1
      %s184 = scalar_select %p183, %s19, 1
      %p185 = scmp.lt.s32.totalorder %s20, 3
      %s186 = scalar_select %p185, %s20, 3
      %s187 = smul.addr %s184, 4
      %s188 = sadd.s32 %s186, %s187
      %s189 = smul.addr %s188, 2
      %s190 = scalar_lea.vmem %s3, %s189
      %p191 = scmp.lt.s32.totalorder %s19, 1
      %s192 = scalar_select %p191, %s19, 1
      %s193 = smul.addr %s192, 20
      %s194 = smul.addr %s193, 4
      %s195 = scalar_lea.vmem %s0, %s194
      %p196 = scmp.lt.s32.totalorder %s19, 1
      %s197 = scalar_select %p196, %s19, 1
      %p198 = scmp.lt.s32.totalorder %s20, 3
      %s199 = scalar_select %p198, %s20, 3
      %s200 = smul.addr %s197, 4
      %s201 = sadd.s32 %s199, %s200
      %s202 = smul.addr %s201, 4
      %s203 = scalar_lea.vmem %s2, %s202
      %p204 = scmp.lt.s32.totalorder %s19, 1
      %s205 = scalar_select %p204, %s19, 1
      %p206 = scmp.lt.s32.totalorder %s20, 3
      %s207 = scalar_select %p206, %s20, 3
      %s208 = smul.addr %s205, 4
      %s209 = sadd.s32 %s207, %s208
      %s210 = smul.addr %s209, 2
      %s211 = scalar_lea.vmem %s3, %s210
      %s212 = smul.addr %s20, 4
      %s213 = scalar_lea.vmem %s195, %s212
      %v214 = vld [vmem:[%s213] sm:$0x3]
      %v215 = vld [vmem:[%s1] sm:$0xf]
      %v216 = vld [vmem:[%s1 + $0x4] sm:$0xf]
      %v217 = vld [vmem:[%s1 + $0x8] sm:$0xf]
      %v218 = vld [vmem:[%s1 + $0xc] sm:$0xf]
      %v219 = vld [vmem:[%s1 + $0x10] sm:$0xf]
      %v220 = vld [vmem:[%s1 + $0x14] sm:$0xf]
      %v221 = vld [vmem:[%s1 + $0x18] sm:$0xf]
      %v222 = vld [vmem:[%s1 + $0x1c] sm:$0xf]
      %v223 = vld [vmem:[%s1 + $0x20] sm:$0xf]
      %v224 = vld [vmem:[%s1 + $0x24] sm:$0xf]
      %v225 = vld [vmem:[%s1 + $0x28] sm:$0xf]
      %v226 = vld [vmem:[%s1 + $0x2c] sm:$0xf]
      %v227 = vld [vmem:[%s1 + $0x30] sm:$0xf]
      %v228 = vld [vmem:[%s1 + $0x34] sm:$0xf]
      %v229 = vld [vmem:[%s1 + $0x38] sm:$0xf]
      %v230 = vld [vmem:[%s1 + $0x3c] sm:$0xf]
      %v247 = vunpack.c.l.b16 %v215
      %v248 = vunpack.c.l.b16 %v216
      %v249 = vunpack.c.l.b16 %v217
      %v250 = vunpack.c.l.b16 %v218
      %v251 = vunpack.c.l.b16 %v219
      %v252 = vunpack.c.l.b16 %v220
      %v253 = vunpack.c.l.b16 %v221
      %v254 = vunpack.c.l.b16 %v222
      %v255 = vunpack.c.l.b16 %v223
      %v256 = vunpack.c.l.b16 %v224
      %v257 = vunpack.c.l.b16 %v225
      %v258 = vunpack.c.l.b16 %v226
      %v259 = vunpack.c.l.b16 %v227
      %v260 = vunpack.c.l.b16 %v228
      %v261 = vunpack.c.l.b16 %v229
      %v262 = vunpack.c.l.b16 %v230
      %v263 = vpack.c.b16 %v248, %v247
      %v264 = vpack.c.b16 %v250, %v249
      %v265 = vpack.c.b16 %v252, %v251
      %v266 = vpack.c.b16 %v254, %v253
      %v267 = vpack.c.b16 %v256, %v255
      %v268 = vpack.c.b16 %v258, %v257
      %v269 = vpack.c.b16 %v260, %v259
      %v270 = vpack.c.b16 %v262, %v261
      %279 = vmatpush.bf16.msra.mxu0 %v270
      %280 = vmatpush.bf16.msra.mxu0 %v269
      %281 = vmatpush.bf16.msra.mxu0 %v268
      %282 = vmatpush.bf16.msra.mxu0 %v267
      %283 = vmatpush.bf16.msra.mxu0 %v266
      %284 = vmatpush.bf16.msra.mxu0 %v265
      %285 = vmatpush.bf16.msra.mxu0 %v264
      %286 = vmatpush.bf16.msra.mxu0 %v263
      %287 = vmatmul.bf16.gmra.mxu0 %v214
      %v288 = vpop.f32.mrf.mxu0
      %v289 = vadd.f32 0.0, %v288
      %v290 = vpop.f32.mrf.mxu0
      %291 = vdwg.mxu0
      %292 = vst [vmem:[%s203] sm:$0xf] %v289
      %v293 = vld [vmem:[%s203] sm:$0xf]
      %s294 = sadd.s32 %s20, 5
      %s295 = smul.addr %s294, 4
      %s296 = scalar_lea.vmem %s195, %s295
      %v297 = vld [vmem:[%s296] sm:$0x3]
      %s298 = scalar_lea.vmem %s1, 64
      %v299 = vld [vmem:[%s298] sm:$0xf]
      %v300 = vld [vmem:[%s298 + $0x4] sm:$0xf]
      %v301 = vld [vmem:[%s298 + $0x8] sm:$0xf]
      %v302 = vld [vmem:[%s298 + $0xc] sm:$0xf]
      %v303 = vld [vmem:[%s298 + $0x10] sm:$0xf]
      %v304 = vld [vmem:[%s298 + $0x14] sm:$0xf]
      %v305 = vld [vmem:[%s298 + $0x18] sm:$0xf]
      %v306 = vld [vmem:[%s298 + $0x1c] sm:$0xf]
      %v307 = vld [vmem:[%s298 + $0x20] sm:$0xf]
      %v308 = vld [vmem:[%s298 + $0x24] sm:$0xf]
      %v309 = vld [vmem:[%s298 + $0x28] sm:$0xf]
      %v310 = vld [vmem:[%s298 + $0x2c] sm:$0xf]
      %v311 = vld [vmem:[%s298 + $0x30] sm:$0xf]
      %v312 = vld [vmem:[%s298 + $0x34] sm:$0xf]
      %v313 = vld [vmem:[%s298 + $0x38] sm:$0xf]
      %v314 = vld [vmem:[%s298 + $0x3c] sm:$0xf]
      %v331 = vunpack.c.l.b16 %v299
      %v332 = vunpack.c.l.b16 %v300
      %v333 = vunpack.c.l.b16 %v301
      %v334 = vunpack.c.l.b16 %v302
      %v335 = vunpack.c.l.b16 %v303
      %v336 = vunpack.c.l.b16 %v304
      %v337 = vunpack.c.l.b16 %v305
      %v338 = vunpack.c.l.b16 %v306
      %v339 = vunpack.c.l.b16 %v307
      %v340 = vunpack.c.l.b16 %v308
      %v341 = vunpack.c.l.b16 %v309
      %v342 = vunpack.c.l.b16 %v310
      %v343 = vunpack.c.l.b16 %v311
      %v344 = vunpack.c.l.b16 %v312
      %v345 = vunpack.c.l.b16 %v313
      %v346 = vunpack.c.l.b16 %v314
      %v347 = vpack.c.b16 %v332, %v331
      %v348 = vpack.c.b16 %v334, %v333
      %v349 = vpack.c.b16 %v336, %v335
      %v350 = vpack.c.b16 %v338, %v337
      %v351 = vpack.c.b16 %v340, %v339
      %v352 = vpack.c.b16 %v342, %v341
      %v353 = vpack.c.b16 %v344, %v343
      %v354 = vpack.c.b16 %v346, %v345
      %363 = vmatpush.bf16.msra.mxu0 %v354
      %364 = vmatpush.bf16.msra.mxu0 %v353
      %365 = vmatpush.bf16.msra.mxu0 %v352
      %366 = vmatpush.bf16.msra.mxu0 %v351
      %367 = vmatpush.bf16.msra.mxu0 %v350
      %368 = vmatpush.bf16.msra.mxu0 %v349
      %369 = vmatpush.bf16.msra.mxu0 %v348
      %370 = vmatpush.bf16.msra.mxu0 %v347
      %371 = vmatmul.bf16.gmra.mxu0 %v297
      %v372 = vpop.f32.mrf.mxu0
      %v373 = vadd.f32 0.0, %v372
      %v374 = vpop.f32.mrf.mxu0
      %375 = vdwg.mxu0
      %v376 = vadd.f32 %v293, %v373
      %377 = vst [vmem:[%s203] sm:$0xf] %v376
      %v378 = vld [vmem:[%s203] sm:$0xf]
      %v379 = vld [vmem:[%s213] sm:$0x7]
      %s380 = scalar_lea.vmem %s1, 128
      %v381 = vld [vmem:[%s380] sm:$0xf]
      %v382 = vld [vmem:[%s380 + $0x4] sm:$0xf]
      %v383 = vld [vmem:[%s380 + $0x8] sm:$0xf]
      %v384 = vld [vmem:[%s380 + $0xc] sm:$0xf]
      %v385 = vld [vmem:[%s380 + $0x10] sm:$0xf]
      %v386 = vld [vmem:[%s380 + $0x14] sm:$0xf]
      %v387 = vld [vmem:[%s380 + $0x18] sm:$0xf]
      %v388 = vld [vmem:[%s380 + $0x1c] sm:$0xf]
      %v389 = vld [vmem:[%s380 + $0x20] sm:$0xf]
      %v390 = vld [vmem:[%s380 + $0x24] sm:$0xf]
      %v391 = vld [vmem:[%s380 + $0x28] sm:$0xf]
      %v392 = vld [vmem:[%s380 + $0x2c] sm:$0xf]
      %v393 = vld [vmem:[%s380 + $0x30] sm:$0xf]
      %v394 = vld [vmem:[%s380 + $0x34] sm:$0xf]
      %v395 = vld [vmem:[%s380 + $0x38] sm:$0xf]
      %v396 = vld [vmem:[%s380 + $0x3c] sm:$0xf]
      %v398 = vunpack.c.l.b16 %v379
      %v399 = vpack.c.b16 %v398, %v398
      %v401 = vshrl.u32 %v399, 16
      %v403 = vshll.u32 %v399, 16
      %v405 = vrot.slane %v403, 1
      %v406 = vor.u32 %v401, %v405
      %v424 = vunpack.c.l.b16 %v381
      %v425 = vunpack.c.l.b16 %v382
      %v426 = vunpack.c.l.b16 %v383
      %v427 = vunpack.c.l.b16 %v384
      %v428 = vunpack.c.l.b16 %v385
      %v429 = vunpack.c.l.b16 %v386
      %v430 = vunpack.c.l.b16 %v387
      %v431 = vunpack.c.l.b16 %v388
      %v432 = vunpack.c.l.b16 %v389
      %v433 = vunpack.c.l.b16 %v390
      %v434 = vunpack.c.l.b16 %v391
      %v435 = vunpack.c.l.b16 %v392
      %v436 = vunpack.c.l.b16 %v393
      %v437 = vunpack.c.l.b16 %v394
      %v438 = vunpack.c.l.b16 %v395
      %v439 = vunpack.c.l.b16 %v396
      %v440 = vpack.c.b16 %v425, %v424
      %v441 = vpack.c.b16 %v427, %v426
      %v442 = vpack.c.b16 %v429, %v428
      %v443 = vpack.c.b16 %v431, %v430
      %v444 = vpack.c.b16 %v433, %v432
      %v445 = vpack.c.b16 %v435, %v434
      %v446 = vpack.c.b16 %v437, %v436
      %v447 = vpack.c.b16 %v439, %v438
      %456 = vmatpush.bf16.msra.mxu0 %v447
      %457 = vmatpush.bf16.msra.mxu0 %v446
      %458 = vmatpush.bf16.msra.mxu0 %v445
      %459 = vmatpush.bf16.msra.mxu0 %v444
      %460 = vmatpush.bf16.msra.mxu0 %v443
      %461 = vmatpush.bf16.msra.mxu0 %v442
      %462 = vmatpush.bf16.msra.mxu0 %v441
      %463 = vmatpush.bf16.msra.mxu0 %v440
      %464 = vmatmul.bf16.gmra.mxu0 %v406
      %v465 = vpop.f32.mrf.mxu0
      %v466 = vadd.f32 0.0, %v465
      %v467 = vpop.f32.mrf.mxu0
      %468 = vdwg.mxu0
      %v469 = vadd.f32 %v378, %v466
      %470 = vst [vmem:[%s203] sm:$0xf] %v469
      %v471 = vld [vmem:[%s203] sm:$0xf]
      %s472 = sadd.s32 %s20, 10
      %s473 = smul.addr %s472, 4
      %s474 = scalar_lea.vmem %s195, %s473
      %v475 = vld [vmem:[%s474] sm:$0x3]
      %s476 = scalar_lea.vmem %s1, 192
      %v477 = vld [vmem:[%s476] sm:$0xf]
      %v478 = vld [vmem:[%s476 + $0x4] sm:$0xf]
      %v479 = vld [vmem:[%s476 + $0x8] sm:$0xf]
      %v480 = vld [vmem:[%s476 + $0xc] sm:$0xf]
      %v481 = vld [vmem:[%s476 + $0x10] sm:$0xf]
      %v482 = vld [vmem:[%s476 + $0x14] sm:$0xf]
      %v483 = vld [vmem:[%s476 + $0x18] sm:$0xf]
      %v484 = vld [vmem:[%s476 + $0x1c] sm:$0xf]
      %v485 = vld [vmem:[%s476 + $0x20] sm:$0xf]
      %v486 = vld [vmem:[%s476 + $0x24] sm:$0xf]
      %v487 = vld [vmem:[%s476 + $0x28] sm:$0xf]
      %v488 = vld [vmem:[%s476 + $0x2c] sm:$0xf]
      %v489 = vld [vmem:[%s476 + $0x30] sm:$0xf]
      %v490 = vld [vmem:[%s476 + $0x34] sm:$0xf]
      %v491 = vld [vmem:[%s476 + $0x38] sm:$0xf]
      %v492 = vld [vmem:[%s476 + $0x3c] sm:$0xf]
      %v509 = vunpack.c.l.b16 %v477
      %v510 = vunpack.c.l.b16 %v478
      %v511 = vunpack.c.l.b16 %v479
      %v512 = vunpack.c.l.b16 %v480
      %v513 = vunpack.c.l.b16 %v481
      %v514 = vunpack.c.l.b16 %v482
      %v515 = vunpack.c.l.b16 %v483
      %v516 = vunpack.c.l.b16 %v484
      %v517 = vunpack.c.l.b16 %v485
      %v518 = vunpack.c.l.b16 %v486
      %v519 = vunpack.c.l.b16 %v487
      %v520 = vunpack.c.l.b16 %v488
      %v521 = vunpack.c.l.b16 %v489
      %v522 = vunpack.c.l.b16 %v490
      %v523 = vunpack.c.l.b16 %v491
      %v524 = vunpack.c.l.b16 %v492
      %v525 = vpack.c.b16 %v510, %v509
      %v526 = vpack.c.b16 %v512, %v511
      %v527 = vpack.c.b16 %v514, %v513
      %v528 = vpack.c.b16 %v516, %v515
      %v529 = vpack.c.b16 %v518, %v517
      %v530 = vpack.c.b16 %v520, %v519
      %v531 = vpack.c.b16 %v522, %v521
      %v532 = vpack.c.b16 %v524, %v523
      %541 = vmatpush.bf16.msra.mxu0 %v532
      %542 = vmatpush.bf16.msra.mxu0 %v531
      %543 = vmatpush.bf16.msra.mxu0 %v530
      %544 = vmatpush.bf16.msra.mxu0 %v529
      %545 = vmatpush.bf16.msra.mxu0 %v528
      %546 = vmatpush.bf16.msra.mxu0 %v527
      %547 = vmatpush.bf16.msra.mxu0 %v526
      %548 = vmatpush.bf16.msra.mxu0 %v525
      %549 = vmatmul.bf16.gmra.mxu0 %v475
      %v550 = vpop.f32.mrf.mxu0
      %v551 = vadd.f32 0.0, %v550
      %v552 = vpop.f32.mrf.mxu0
      %553 = vdwg.mxu0
      %v554 = vadd.f32 %v471, %v551
      %555 = vst [vmem:[%s203] sm:$0xf] %v554
      %v556 = vld [vmem:[%s203] sm:$0xf]
      %s557 = sadd.s32 %s20, 15
      %s558 = smul.addr %s557, 4
      %s559 = scalar_lea.vmem %s195, %s558
      %v560 = vld [vmem:[%s559] sm:$0x3]
      %s561 = scalar_lea.vmem %s1, 256
      %v562 = vld [vmem:[%s561] sm:$0xf]
      %v563 = vld [vmem:[%s561 + $0x4] sm:$0xf]
      %v564 = vld [vmem:[%s561 + $0x8] sm:$0xf]
      %v565 = vld [vmem:[%s561 + $0xc] sm:$0xf]
      %v566 = vld [vmem:[%s561 + $0x10] sm:$0xf]
      %v567 = vld [vmem:[%s561 + $0x14] sm:$0xf]
      %v568 = vld [vmem:[%s561 + $0x18] sm:$0xf]
      %v569 = vld [vmem:[%s561 + $0x1c] sm:$0xf]
      %v570 = vld [vmem:[%s561 + $0x20] sm:$0xf]
      %v571 = vld [vmem:[%s561 + $0x24] sm:$0xf]
      %v572 = vld [vmem:[%s561 + $0x28] sm:$0xf]
      %v573 = vld [vmem:[%s561 + $0x2c] sm:$0xf]
      %v574 = vld [vmem:[%s561 + $0x30] sm:$0xf]
      %v575 = vld [vmem:[%s561 + $0x34] sm:$0xf]
      %v576 = vld [vmem:[%s561 + $0x38] sm:$0xf]
      %v577 = vld [vmem:[%s561 + $0x3c] sm:$0xf]
      %v594 = vunpack.c.l.b16 %v562
      %v595 = vunpack.c.l.b16 %v563
      %v596 = vunpack.c.l.b16 %v564
      %v597 = vunpack.c.l.b16 %v565
      %v598 = vunpack.c.l.b16 %v566
      %v599 = vunpack.c.l.b16 %v567
      %v600 = vunpack.c.l.b16 %v568
      %v601 = vunpack.c.l.b16 %v569
      %v602 = vunpack.c.l.b16 %v570
      %v603 = vunpack.c.l.b16 %v571
      %v604 = vunpack.c.l.b16 %v572
      %v605 = vunpack.c.l.b16 %v573
      %v606 = vunpack.c.l.b16 %v574
      %v607 = vunpack.c.l.b16 %v575
      %v608 = vunpack.c.l.b16 %v576
      %v609 = vunpack.c.l.b16 %v577
      %v610 = vpack.c.b16 %v595, %v594
      %v611 = vpack.c.b16 %v597, %v596
      %v612 = vpack.c.b16 %v599, %v598
      %v613 = vpack.c.b16 %v601, %v600
      %v614 = vpack.c.b16 %v603, %v602
      %v615 = vpack.c.b16 %v605, %v604
      %v616 = vpack.c.b16 %v607, %v606
      %v617 = vpack.c.b16 %v609, %v608
      %626 = vmatpush.bf16.msra.mxu0 %v617
      %627 = vmatpush.bf16.msra.mxu0 %v616
      %628 = vmatpush.bf16.msra.mxu0 %v615
      %629 = vmatpush.bf16.msra.mxu0 %v614
      %630 = vmatpush.bf16.msra.mxu0 %v613
      %631 = vmatpush.bf16.msra.mxu0 %v612
      %632 = vmatpush.bf16.msra.mxu0 %v611
      %633 = vmatpush.bf16.msra.mxu0 %v610
      %634 = vmatmul.bf16.gmra.mxu0 %v560
      %v635 = vpop.f32.mrf.mxu0
      %v636 = vadd.f32 0.0, %v635
      %v637 = vpop.f32.mrf.mxu0
      %638 = vdwg.mxu0
      %v639 = vadd.f32 %v556, %v636
      %640 = vst [vmem:[%s203] sm:$0xf] %v639
      %v641 = vld [vmem:[%s203] sm:$0xf]
      %v642 = vld [vmem:[%s474] sm:$0x7]
      %s643 = scalar_lea.vmem %s1, 320
      %v644 = vld [vmem:[%s643] sm:$0xf]
      %v645 = vld [vmem:[%s643 + $0x4] sm:$0xf]
      %v646 = vld [vmem:[%s643 + $0x8] sm:$0xf]
      %v647 = vld [vmem:[%s643 + $0xc] sm:$0xf]
      %v648 = vld [vmem:[%s643 + $0x10] sm:$0xf]
      %v649 = vld [vmem:[%s643 + $0x14] sm:$0xf]
      %v650 = vld [vmem:[%s643 + $0x18] sm:$0xf]
      %v651 = vld [vmem:[%s643 + $0x1c] sm:$0xf]
      %v652 = vld [vmem:[%s643 + $0x20] sm:$0xf]
      %v653 = vld [vmem:[%s643 + $0x24] sm:$0xf]
      %v654 = vld [vmem:[%s643 + $0x28] sm:$0xf]
      %v655 = vld [vmem:[%s643 + $0x2c] sm:$0xf]
      %v656 = vld [vmem:[%s643 + $0x30] sm:$0xf]
      %v657 = vld [vmem:[%s643 + $0x34] sm:$0xf]
      %v658 = vld [vmem:[%s643 + $0x38] sm:$0xf]
      %v659 = vld [vmem:[%s643 + $0x3c] sm:$0xf]
      %v661 = vunpack.c.l.b16 %v642
      %v662 = vpack.c.b16 %v661, %v661
      %v664 = vshrl.u32 %v662, 16
      %v666 = vshll.u32 %v662, 16
      %v668 = vrot.slane %v666, 1
      %v669 = vor.u32 %v664, %v668
      %v687 = vunpack.c.l.b16 %v644
      %v688 = vunpack.c.l.b16 %v645
      %v689 = vunpack.c.l.b16 %v646
      %v690 = vunpack.c.l.b16 %v647
      %v691 = vunpack.c.l.b16 %v648
      %v692 = vunpack.c.l.b16 %v649
      %v693 = vunpack.c.l.b16 %v650
      %v694 = vunpack.c.l.b16 %v651
      %v695 = vunpack.c.l.b16 %v652
      %v696 = vunpack.c.l.b16 %v653
      %v697 = vunpack.c.l.b16 %v654
      %v698 = vunpack.c.l.b16 %v655
      %v699 = vunpack.c.l.b16 %v656
      %v700 = vunpack.c.l.b16 %v657
      %v701 = vunpack.c.l.b16 %v658
      %v702 = vunpack.c.l.b16 %v659
      %v703 = vpack.c.b16 %v688, %v687
      %v704 = vpack.c.b16 %v690, %v689
      %v705 = vpack.c.b16 %v692, %v691
      %v706 = vpack.c.b16 %v694, %v693
      %v707 = vpack.c.b16 %v696, %v695
      %v708 = vpack.c.b16 %v698, %v697
      %v709 = vpack.c.b16 %v700, %v699
      %v710 = vpack.c.b16 %v702, %v701
      %719 = vmatpush.bf16.msra.mxu0 %v710
      %720 = vmatpush.bf16.msra.mxu0 %v709
      %721 = vmatpush.bf16.msra.mxu0 %v708
      %722 = vmatpush.bf16.msra.mxu0 %v707
      %723 = vmatpush.bf16.msra.mxu0 %v706
      %724 = vmatpush.bf16.msra.mxu0 %v705
      %725 = vmatpush.bf16.msra.mxu0 %v704
      %726 = vmatpush.bf16.msra.mxu0 %v703
      %727 = vmatmul.bf16.gmra.mxu0 %v669
      %v728 = vpop.f32.mrf.mxu0
      %v729 = vadd.f32 0.0, %v728
      %v730 = vpop.f32.mrf.mxu0
      %731 = vdwg.mxu0
      %v732 = vadd.f32 %v641, %v729
      %733 = vst [vmem:[%s203] sm:$0xf] %v732
      %v734 = vld [vmem:[%s203] sm:$0xf]
      %s735 = sadd.s32 %s20, 1
      %s736 = smul.addr %s735, 4
      %s737 = scalar_lea.vmem %s195, %s736
      %v738 = vld [vmem:[%s737] sm:$0x3]
      %s739 = scalar_lea.vmem %s1, 384
      %v740 = vld [vmem:[%s739] sm:$0xf]
      %v741 = vld [vmem:[%s739 + $0x4] sm:$0xf]
      %v742 = vld [vmem:[%s739 + $0x8] sm:$0xf]
      %v743 = vld [vmem:[%s739 + $0xc] sm:$0xf]
      %v744 = vld [vmem:[%s739 + $0x10] sm:$0xf]
      %v745 = vld [vmem:[%s739 + $0x14] sm:$0xf]
      %v746 = vld [vmem:[%s739 + $0x18] sm:$0xf]
      %v747 = vld [vmem:[%s739 + $0x1c] sm:$0xf]
      %v748 = vld [vmem:[%s739 + $0x20] sm:$0xf]
      %v749 = vld [vmem:[%s739 + $0x24] sm:$0xf]
      %v750 = vld [vmem:[%s739 + $0x28] sm:$0xf]
      %v751 = vld [vmem:[%s739 + $0x2c] sm:$0xf]
      %v752 = vld [vmem:[%s739 + $0x30] sm:$0xf]
      %v753 = vld [vmem:[%s739 + $0x34] sm:$0xf]
      %v754 = vld [vmem:[%s739 + $0x38] sm:$0xf]
      %v755 = vld [vmem:[%s739 + $0x3c] sm:$0xf]
      %v772 = vunpack.c.l.b16 %v740
      %v773 = vunpack.c.l.b16 %v741
      %v774 = vunpack.c.l.b16 %v742
      %v775 = vunpack.c.l.b16 %v743
      %v776 = vunpack.c.l.b16 %v744
      %v777 = vunpack.c.l.b16 %v745
      %v778 = vunpack.c.l.b16 %v746
      %v779 = vunpack.c.l.b16 %v747
      %v780 = vunpack.c.l.b16 %v748
      %v781 = vunpack.c.l.b16 %v749
      %v782 = vunpack.c.l.b16 %v750
      %v783 = vunpack.c.l.b16 %v751
      %v784 = vunpack.c.l.b16 %v752
      %v785 = vunpack.c.l.b16 %v753
      %v786 = vunpack.c.l.b16 %v754
      %v787 = vunpack.c.l.b16 %v755
      %v788 = vpack.c.b16 %v773, %v772
      %v789 = vpack.c.b16 %v775, %v774
      %v790 = vpack.c.b16 %v777, %v776
      %v791 = vpack.c.b16 %v779, %v778
      %v792 = vpack.c.b16 %v781, %v780
      %v793 = vpack.c.b16 %v783, %v782
      %v794 = vpack.c.b16 %v785, %v784
      %v795 = vpack.c.b16 %v787, %v786
      %804 = vmatpush.bf16.msra.mxu0 %v795
      %805 = vmatpush.bf16.msra.mxu0 %v794
      %806 = vmatpush.bf16.msra.mxu0 %v793
      %807 = vmatpush.bf16.msra.mxu0 %v792
      %808 = vmatpush.bf16.msra.mxu0 %v791
      %809 = vmatpush.bf16.msra.mxu0 %v790
      %810 = vmatpush.bf16.msra.mxu0 %v789
      %811 = vmatpush.bf16.msra.mxu0 %v788
      %812 = vmatmul.bf16.gmra.mxu0 %v738
      %v813 = vpop.f32.mrf.mxu0
      %v814 = vadd.f32 0.0, %v813
      %v815 = vpop.f32.mrf.mxu0
      %816 = vdwg.mxu0
      %v817 = vadd.f32 %v734, %v814
      %818 = vst [vmem:[%s203] sm:$0xf] %v817
      %v819 = vld [vmem:[%s203] sm:$0xf]
      %s820 = sadd.s32 %s20, 6
      %s821 = smul.addr %s820, 4
      %s822 = scalar_lea.vmem %s195, %s821
      %v823 = vld [vmem:[%s822] sm:$0x3]
      %s824 = scalar_lea.vmem %s1, 448
      %v825 = vld [vmem:[%s824] sm:$0xf]
      %v826 = vld [vmem:[%s824 + $0x4] sm:$0xf]
      %v827 = vld [vmem:[%s824 + $0x8] sm:$0xf]
      %v828 = vld [vmem:[%s824 + $0xc] sm:$0xf]
      %v829 = vld [vmem:[%s824 + $0x10] sm:$0xf]
      %v830 = vld [vmem:[%s824 + $0x14] sm:$0xf]
      %v831 = vld [vmem:[%s824 + $0x18] sm:$0xf]
      %v832 = vld [vmem:[%s824 + $0x1c] sm:$0xf]
      %v833 = vld [vmem:[%s824 + $0x20] sm:$0xf]
      %v834 = vld [vmem:[%s824 + $0x24] sm:$0xf]
      %v835 = vld [vmem:[%s824 + $0x28] sm:$0xf]
      %v836 = vld [vmem:[%s824 + $0x2c] sm:$0xf]
      %v837 = vld [vmem:[%s824 + $0x30] sm:$0xf]
      %v838 = vld [vmem:[%s824 + $0x34] sm:$0xf]
      %v839 = vld [vmem:[%s824 + $0x38] sm:$0xf]
      %v840 = vld [vmem:[%s824 + $0x3c] sm:$0xf]
      %v857 = vunpack.c.l.b16 %v825
      %v858 = vunpack.c.l.b16 %v826
      %v859 = vunpack.c.l.b16 %v827
      %v860 = vunpack.c.l.b16 %v828
      %v861 = vunpack.c.l.b16 %v829
      %v862 = vunpack.c.l.b16 %v830
      %v863 = vunpack.c.l.b16 %v831
      %v864 = vunpack.c.l.b16 %v832
      %v865 = vunpack.c.l.b16 %v833
      %v866 = vunpack.c.l.b16 %v834
      %v867 = vunpack.c.l.b16 %v835
      %v868 = vunpack.c.l.b16 %v836
      %v869 = vunpack.c.l.b16 %v837
      %v870 = vunpack.c.l.b16 %v838
      %v871 = vunpack.c.l.b16 %v839
      %v872 = vunpack.c.l.b16 %v840
      %v873 = vpack.c.b16 %v858, %v857
      %v874 = vpack.c.b16 %v860, %v859
      %v875 = vpack.c.b16 %v862, %v861
      %v876 = vpack.c.b16 %v864, %v863
      %v877 = vpack.c.b16 %v866, %v865
      %v878 = vpack.c.b16 %v868, %v867
      %v879 = vpack.c.b16 %v870, %v869
      %v880 = vpack.c.b16 %v872, %v871
      %889 = vmatpush.bf16.msra.mxu0 %v880
      %890 = vmatpush.bf16.msra.mxu0 %v879
      %891 = vmatpush.bf16.msra.mxu0 %v878
      %892 = vmatpush.bf16.msra.mxu0 %v877
      %893 = vmatpush.bf16.msra.mxu0 %v876
      %894 = vmatpush.bf16.msra.mxu0 %v875
      %895 = vmatpush.bf16.msra.mxu0 %v874
      %896 = vmatpush.bf16.msra.mxu0 %v873
      %897 = vmatmul.bf16.gmra.mxu0 %v823
      %v898 = vpop.f32.mrf.mxu0
      %v899 = vadd.f32 0.0, %v898
      %v900 = vpop.f32.mrf.mxu0
      %901 = vdwg.mxu0
      %v902 = vadd.f32 %v819, %v899
      %903 = vst [vmem:[%s203] sm:$0xf] %v902
      %v904 = vld [vmem:[%s203] sm:$0xf]
      %v905 = vld [vmem:[%s737] sm:$0x7]
      %s906 = scalar_lea.vmem %s1, 512
      %v907 = vld [vmem:[%s906] sm:$0xf]
      %v908 = vld [vmem:[%s906 + $0x4] sm:$0xf]
      %v909 = vld [vmem:[%s906 + $0x8] sm:$0xf]
      %v910 = vld [vmem:[%s906 + $0xc] sm:$0xf]
      %v911 = vld [vmem:[%s906 + $0x10] sm:$0xf]
      %v912 = vld [vmem:[%s906 + $0x14] sm:$0xf]
      %v913 = vld [vmem:[%s906 + $0x18] sm:$0xf]
      %v914 = vld [vmem:[%s906 + $0x1c] sm:$0xf]
      %v915 = vld [vmem:[%s906 + $0x20] sm:$0xf]
      %v916 = vld [vmem:[%s906 + $0x24] sm:$0xf]
      %v917 = vld [vmem:[%s906 + $0x28] sm:$0xf]
      %v918 = vld [vmem:[%s906 + $0x2c] sm:$0xf]
      %v919 = vld [vmem:[%s906 + $0x30] sm:$0xf]
      %v920 = vld [vmem:[%s906 + $0x34] sm:$0xf]
      %v921 = vld [vmem:[%s906 + $0x38] sm:$0xf]
      %v922 = vld [vmem:[%s906 + $0x3c] sm:$0xf]
      %v924 = vunpack.c.l.b16 %v905
      %v925 = vpack.c.b16 %v924, %v924
      %v927 = vshrl.u32 %v925, 16
      %v929 = vshll.u32 %v925, 16
      %v931 = vrot.slane %v929, 1
      %v932 = vor.u32 %v927, %v931
      %v950 = vunpack.c.l.b16 %v907
      %v951 = vunpack.c.l.b16 %v908
      %v952 = vunpack.c.l.b16 %v909
      %v953 = vunpack.c.l.b16 %v910
      %v954 = vunpack.c.l.b16 %v911
      %v955 = vunpack.c.l.b16 %v912
      %v956 = vunpack.c.l.b16 %v913
      %v957 = vunpack.c.l.b16 %v914
      %v958 = vunpack.c.l.b16 %v915
      %v959 = vunpack.c.l.b16 %v916
      %v960 = vunpack.c.l.b16 %v917
      %v961 = vunpack.c.l.b16 %v918
      %v962 = vunpack.c.l.b16 %v919
      %v963 = vunpack.c.l.b16 %v920
      %v964 = vunpack.c.l.b16 %v921
      %v965 = vunpack.c.l.b16 %v922
      %v966 = vpack.c.b16 %v951, %v950
      %v967 = vpack.c.b16 %v953, %v952
      %v968 = vpack.c.b16 %v955, %v954
      %v969 = vpack.c.b16 %v957, %v956
      %v970 = vpack.c.b16 %v959, %v958
      %v971 = vpack.c.b16 %v961, %v960
      %v972 = vpack.c.b16 %v963, %v962
      %v973 = vpack.c.b16 %v965, %v964
      %982 = vmatpush.bf16.msra.mxu0 %v973
      %983 = vmatpush.bf16.msra.mxu0 %v972
      %984 = vmatpush.bf16.msra.mxu0 %v971
      %985 = vmatpush.bf16.msra.mxu0 %v970
      %986 = vmatpush.bf16.msra.mxu0 %v969
      %987 = vmatpush.bf16.msra.mxu0 %v968
      %988 = vmatpush.bf16.msra.mxu0 %v967
      %989 = vmatpush.bf16.msra.mxu0 %v966
      %990 = vmatmul.bf16.gmra.mxu0 %v932
      %v991 = vpop.f32.mrf.mxu0
      %v992 = vadd.f32 0.0, %v991
      %v993 = vpop.f32.mrf.mxu0
      %994 = vdwg.mxu0
      %v995 = vadd.f32 %v904, %v992
      %996 = vst [vmem:[%s203] sm:$0xf] %v995
      %v997 = vld [vmem:[%s203] sm:$0xf]
      %vm998 = vcmask 1043456
      %v999 = vsel %vm998, %v997, 0.0
      %v1000 = vrot.slane %v999, 4
      %v1001 = vadd.f32 %v999, %v1000
      %v1002 = vrot.slane %v1001, 2
      %v1003 = vadd.f32 %v1001, %v1002
      %v1004 = vrot.slane %v1003, 1
      %v1005 = vadd.f32 %v1003, %v1004
      %1006 = vst [vmem:[%s211] sm:$0x1] %v1005
      %v1007 = vmul.f32 %v997, %v997
      %v1008 = vsel %vm998, %v1007, 0.0
      %v1009 = vrot.slane %v1008, 4
      %v1010 = vadd.f32 %v1008, %v1009
      %v1011 = vrot.slane %v1010, 2
      %v1012 = vadd.f32 %v1010, %v1011
      %v1013 = vrot.slane %v1012, 1
      %v1014 = vadd.f32 %v1012, %v1013
      %1015 = vst [vmem:[%s211 + $0x1] sm:$0x1] %v1014
      %p1016 = scmp.lt.s32.totalorder %s19, 1
      %s1017 = scalar_select %p1016, %s19, 1
      %p1018 = scmp.lt.s32.totalorder %s20, 3
      %s1019 = scalar_select %p1018, %s20, 3
      %s1020 = smul.addr %s1017, 4
      %s1021 = sadd.s32 %s1019, %s1020
      %s1022 = smul.addr %s1021, 4
      %s1023 = scalar_lea.vmem %s2, %s1022
      %p1024 = scmp.lt.s32.totalorder %s19, 1
      %s1025 = scalar_select %p1024, %s19, 1
      %p1026 = scmp.lt.s32.totalorder %s20, 3
      %s1027 = scalar_select %p1026, %s20, 3
      %s1028 = smul.addr %s1025, 4
      %s1029 = sadd.s32 %s1027, %s1028
      %s1030 = smul.addr %s1029, 2
      %s1031 = scalar_lea.vmem %s3, %s1030
      // Predicated region
      $region29: #{hrnet_forward.8} parent=27 // pred_check
        %p1032 = pneg %p94
      $region30: #{hrnet_forward.8} parent=27 // pred_check_branch
        %1034 = sbr.rel (%p1032) target = $region32
      $region31: #{hrnet_forward.8} parent=27 // pred_region
        _
      $region32: #{hrnet_forward.8} parent=27 // pred_fallthru
        _
      // Predicated region
      $region33: #{hrnet_forward.8} parent=27 // pred_check
        %p1035 = pneg %p122
      $region34: #{hrnet_forward.8} parent=27 // pred_check_branch
        %1037 = sbr.rel (%p1035) target = $region36
      $region35: #{hrnet_forward.8} parent=27 // pred_region
        _
      $region36: #{hrnet_forward.8} parent=27 // pred_fallthru
        _
    $region28: #{hrnet_forward.8} parent=5 // pred_fallthru
      _
    %p1038 = scmp.le.s32.totalorder 2, %s10
    // Predicated region
    $region37: #{hrnet_forward.8} parent=5 // pred_check
      %p1039 = pneg %p1038
    $region38: #{hrnet_forward.8} parent=5 // pred_check_branch
      %1041 = sbr.rel (%p1039) target = $region40
    $region39: #{hrnet_forward.8} parent=5 // pred_region
      %s1042 = ssub.s32 %s10, 2
      // Predicated region
      $region41: #{hrnet_forward.8} parent=39 // pred_check
        %p1043 = pneg %p100
      $region42: #{hrnet_forward.8} parent=39 // pred_check_branch
        %1045 = sbr.rel (%p1043) target = $region44
      $region43: #{hrnet_forward.8} parent=39 // pred_region
        %p1046 = scmp.lt.s32.totalorder %s21, 1
        %s1047 = scalar_select %p1046, %s21, 1
        %p1048 = scmp.lt.s32.totalorder %s22, 3
        %s1049 = scalar_select %p1048, %s22, 3
        %s1050 = smul.addr %s1047, 4
        %s1051 = sadd.s32 %s1049, %s1050
        %s1052 = smul.addr %s1051, 4
        %s1053 = scalar_lea.vmem %s2, %s1052
      $region44: #{hrnet_forward.8} parent=39 // pred_fallthru
        _
      // Predicated region
      $region45: #{hrnet_forward.8} parent=39 // pred_check
        %p1054 = pneg %p128
      $region46: #{hrnet_forward.8} parent=39 // pred_check_branch
        %1056 = sbr.rel (%p1054) target = $region48
      $region47: #{hrnet_forward.8} parent=39 // pred_region
        %p1057 = scmp.lt.s32.totalorder %s21, 1
        %s1058 = scalar_select %p1057, %s21, 1
        %p1059 = scmp.lt.s32.totalorder %s22, 3
        %s1060 = scalar_select %p1059, %s22, 3
        %s1061 = smul.addr %s1058, 4
        %s1062 = sadd.s32 %s1060, %s1061
        %s1063 = smul.addr %s1062, 2
        %s1064 = scalar_lea.vmem %s3, %s1063
      $region48: #{hrnet_forward.8} parent=39 // pred_fallthru
        _
    $region40: #{hrnet_forward.8} parent=5 // pred_fallthru
      _
  $region6: #{hrnet_forward.8} parent=0 // loop_footer
    %s14 = sadd.s32 1, %s10
  $region7: #{hrnet_forward.8} parent=0 // loop_footer_branch
    %9 = sbr.rel target = $region3
  $region8: #{hrnet_forward.8} parent=0 // loop_exit
    _

// kernel: hrnet_forward.11
$region0: #{hrnet_forward.11}
  #allocation0 [shape = 'u32[]', space=smem, size = 0x4, offset = 0x4, fixed_abs, tag = 'smem constant byte address 0x4 - core index']
  #allocation1 [shape = 'u32[72,128]{1,0:T(1,128)}', space=vmem, size = 0x9000, scoped, tag = 'internal scratch']
  %s0 = inlined_call_operand.vmem [shape: f32[2,4,4,256], index: 0, kind: input, shape index: {}]
  %s1 = inlined_call_operand.vmem [shape: f32[1,256], index: 1, kind: input, shape index: {}]
  %s2 = inlined_call_operand.vmem [shape: f32[1,256], index: 2, kind: input, shape index: {}]
  %s3 = inlined_call_operand.hbm [shape: f32[2,4,4,256], index: 3, kind: output, shape index: {}]
  %s4 = sld [smem:[#allocation0]]
  $region45: #{hrnet_forward.11} parent=0
    _
  %s6 = ssub.s32 1, %s4
  %s7 = scalar_select 0, %s6, %s4
  $region1: #{hrnet_forward.11} parent=0
    #allocation2 [shape = 'u8[8192]{0}', space=vmem, size = 0x2000, scoped, tag = 'output window, operand 0']
    #allocation3 [shape = 's32[2]{0}', space=sflag, size = 0x8, scoped, tag = 'scoped memory for hrnet_forward.11']
    %8 = vsyncpa [#allocation3], 0
    %s9 = scalar_lea.sflag [#allocation3], 1
    %10 = vsyncpa %s9, 0
    loop: start=0, step=1, limit=10
    $region2: #{hrnet_forward.11} parent=1 // loop_pre_header
      _
    $region3: #{hrnet_forward.11} parent=1 // loop_header
      %s12 = sphi 0, %s16
      %p13 = scmp.ge.s32.totalorder %s12, 10
      %s19 = sphi 0, %s31
      %s20 = sphi 0, %s27
      %s21 = sphi 0, %s19
      %s22 = sphi 0, %s20
      %s23 = sphi 0, %s21
      %s24 = sphi 0, %s22
      %s36 = sphi 0, %s38
      %s39 = sphi 0, %s36
      %s40 = sphi 0, %s39
      %s56 = sphi 0, %s40
      %s60 = sphi 0, %s60
      %s62 = sphi 0, %s60
      %s63 = sphi 0, %s62
      %s77 = sphi 0, %s63
      %s81 = sphi 0, %s81
      %s83 = sphi 0, %s81
      %s84 = sphi 0, %s83
      %s98 = sphi 0, %s84
      %s106 = sphi 0, %s108
      %s109 = sphi 0, %s106
      %s110 = sphi 0, %s109
      %s126 = sphi 0, %s110
    $region4: #{hrnet_forward.11} parent=1 // loop_header_branch
      %15 = sbr.rel (%p13) target = $region8
    $region5: #{hrnet_forward.11} parent=1 // loop_body
      %s17 = ssub.s32 %s12, 1
      %s18 = ssub.s32 %s12, 2
      %s25 = sadd.s32 1, %s20
      %p26 = scmp.ge.s32.totalorder %s25, 4
      %s27 = scalar_select %p26, 0, %s25
      %s28 = sadd.s32 1, %s19
      %s29 = scalar_select %p26, %s28, %s19
      %p30 = scmp.ge.s32.totalorder %s29, 2
      %s31 = scalar_select %p30, 0, %s29
      %s32 = ssub.s32 %s19, %s31
      %s33 = ssub.s32 %s20, %s27
      %s34 = sor.u32 %s32, %s33
      %p35 = scmp.eq.s32.totalorder %s34, 0
      %s37 = sadd.s32 %s36, 1
      %s38 = scalar_select %p35, %s36, %s37
      %p41 = pneg %p35
      %p42 = scmp.eq.s32.totalorder %s12, 7
      %p43 = por %p41, %p42
      %p44 = scmp.ne.s32.totalorder %s36, %s39
      %p45 = scmp.eq.s32.totalorder %s12, 0
      %p46 = por %p44, %p45
      %p47 = scmp.ne.s32.totalorder %s36, %s39
      %p48 = scmp.eq.s32.totalorder %s17, 7
      %p49 = por %p47, %p48
      %p50 = scmp.ne.s32.totalorder %s39, %s40
      %p51 = scmp.eq.s32.totalorder %s17, 0
      %p52 = por %p50, %p51
      %p53 = scmp.ne.s32.totalorder %s39, %s40
      %p54 = scmp.eq.s32.totalorder %s18, 7
      %p55 = por %p53, %p54
      %p57 = scmp.ne.s32.totalorder %s40, %s56
      %p58 = scmp.eq.s32.totalorder %s18, 0
      %p59 = por %p57, %p58
      %s61 = sadd.s32 %s60, 1
      %p64 = scmp.eq.s32.totalorder %s12, 7
      %p65 = scmp.ne.s32.totalorder %s60, %s62
      %p66 = scmp.eq.s32.totalorder %s12, 0
      %p67 = por %p65, %p66
      %p68 = scmp.ne.s32.totalorder %s60, %s62
      %p69 = scmp.eq.s32.totalorder %s17, 7
      %p70 = por %p68, %p69
      %p71 = scmp.ne.s32.totalorder %s62, %s63
      %p72 = scmp.eq.s32.totalorder %s17, 0
      %p73 = por %p71, %p72
      %p74 = scmp.ne.s32.totalorder %s62, %s63
      %p75 = scmp.eq.s32.totalorder %s18, 7
      %p76 = por %p74, %p75
      %p78 = scmp.ne.s32.totalorder %s63, %s77
      %p79 = scmp.eq.s32.totalorder %s18, 0
      %p80 = por %p78, %p79
      %s82 = sadd.s32 %s81, 1
      %p85 = scmp.eq.s32.totalorder %s12, 7
      %p86 = scmp.ne.s32.totalorder %s81, %s83
      %p87 = scmp.eq.s32.totalorder %s12, 0
      %p88 = por %p86, %p87
      %p89 = scmp.ne.s32.totalorder %s81, %s83
      %p90 = scmp.eq.s32.totalorder %s17, 7
      %p91 = por %p89, %p90
      %p92 = scmp.ne.s32.totalorder %s83, %s84
      %p93 = scmp.eq.s32.totalorder %s17, 0
      %p94 = por %p92, %p93
      %p95 = scmp.ne.s32.totalorder %s83, %s84
      %p96 = scmp.eq.s32.totalorder %s18, 7
      %p97 = por %p95, %p96
      %p99 = scmp.ne.s32.totalorder %s84, %s98
      %p100 = scmp.eq.s32.totalorder %s18, 0
      %p101 = por %p99, %p100
      %s102 = ssub.s32 %s19, %s31
      %s103 = ssub.s32 %s20, %s27
      %s104 = sor.u32 %s102, %s103
      %p105 = scmp.eq.s32.totalorder %s104, 0
      %s107 = sadd.s32 %s106, 1
      %s108 = scalar_select %p105, %s106, %s107
      %p111 = pneg %p105
      %p112 = scmp.eq.s32.totalorder %s12, 7
      %p113 = por %p111, %p112
      %p114 = scmp.ne.s32.totalorder %s106, %s109
      %p115 = scmp.eq.s32.totalorder %s12, 0
      %p116 = por %p114, %p115
      %p117 = scmp.ne.s32.totalorder %s106, %s109
      %p118 = scmp.eq.s32.totalorder %s17, 7
      %p119 = por %p117, %p118
      %p120 = scmp.ne.s32.totalorder %s109, %s110
      %p121 = scmp.eq.s32.totalorder %s17, 0
      %p122 = por %p120, %p121
      %p123 = scmp.ne.s32.totalorder %s109, %s110
      %p124 = scmp.eq.s32.totalorder %s18, 7
      %p125 = por %p123, %p124
      %p127 = scmp.ne.s32.totalorder %s110, %s126
      %p128 = scmp.eq.s32.totalorder %s18, 0
      %p129 = por %p127, %p128
      %p130 = scmp.le.s32.totalorder 1, %s12
      %p131 = scmp.lt.s32.totalorder %s12, 9
      %p132 = pnand %p130, %p131
      %p133 = pneg %p132
      // Predicated region
      $region9: #{hrnet_forward.11} parent=5 // pred_check
        _
      $region10: #{hrnet_forward.11} parent=5 // pred_check_branch
        %135 = sbr.rel (%p132) target = $region12
      $region11: #{hrnet_forward.11} parent=5 // pred_region
        %s136 = ssub.s32 %s12, 1
        // Predicated region
        $region13: #{hrnet_forward.11} parent=11 // pred_check
          %p137 = pneg %p73
        $region14: #{hrnet_forward.11} parent=11 // pred_check_branch
          %139 = sbr.rel (%p137) target = $region16
        $region15: #{hrnet_forward.11} parent=11 // pred_region
          _
        $region16: #{hrnet_forward.11} parent=11 // pred_fallthru
          _
        // Predicated region
        $region17: #{hrnet_forward.11} parent=11 // pred_check
          %p140 = pneg %p94
        $region18: #{hrnet_forward.11} parent=11 // pred_check_branch
          %142 = sbr.rel (%p140) target = $region20
        $region19: #{hrnet_forward.11} parent=11 // pred_region
          _
        $region20: #{hrnet_forward.11} parent=11 // pred_fallthru
          _
      $region12: #{hrnet_forward.11} parent=5 // pred_fallthru
        _
      %p143 = scmp.lt.s32.totalorder %s12, 8
      // Predicated region
      $region21: #{hrnet_forward.11} parent=5 // pred_check
        %p144 = pneg %p143
      $region22: #{hrnet_forward.11} parent=5 // pred_check_branch
        %146 = sbr.rel (%p144) target = $region24
      $region23: #{hrnet_forward.11} parent=5 // pred_region
        // Predicated region
        $region25: #{hrnet_forward.11} parent=23 // pred_check
          %p147 = pneg %p46
        $region26: #{hrnet_forward.11} parent=23 // pred_check_branch
          %149 = sbr.rel (%p147) target = $region28
        $region27: #{hrnet_forward.11} parent=23 // pred_region
          %p150 = scmp.lt.s32.totalorder %s19, 1
          %s151 = scalar_select %p150, %s19, 1
          %p152 = scmp.lt.s32.totalorder %s20, 3
          %s153 = scalar_select %p152, %s20, 3
          %s154 = smul.addr %s153, 2
          %s155 = smul.addr %s151, 8
          %s156 = sadd.s32 %s154, %s155
          %s157 = smul.addr %s156, 4
          %s158 = scalar_lea.vmem %s0, %s157
        $region28: #{hrnet_forward.11} parent=23 // pred_fallthru
          _
      $region24: #{hrnet_forward.11} parent=5 // pred_fallthru
        _
      %p159 = scmp.le.s32.totalorder 1, %s12
      %p160 = scmp.lt.s32.totalorder %s12, 9
      %p161 = pnand %p159, %p160
      %p162 = pneg %p161
      // Predicated region
      $region29: #{hrnet_forward.11} parent=5 // pred_check
        _
      $region30: #{hrnet_forward.11} parent=5 // pred_check_branch
        %164 = sbr.rel (%p161) target = $region32
      $region31: #{hrnet_forward.11} parent=5 // pred_region
        %s165 = ssub.s32 %s12, 1
        %p166 = scmp.lt.s32.totalorder %s21, 1
        %s167 = scalar_select %p166, %s21, 1
        %p168 = scmp.lt.s32.totalorder %s22, 3
        %s169 = scalar_select %p168, %s22, 3
        %s170 = smul.addr %s169, 2
        %s171 = smul.addr %s167, 8
        %s172 = sadd.s32 %s170, %s171
        %s173 = smul.addr %s172, 4
        %s174 = scalar_lea.vmem %s0, %s173
        %p175 = pneg %p52
        %p176 = pneg %p49
        %p177 = pneg %p73
        %p178 = pneg %p70
        %p179 = pneg %p94
        %p180 = pneg %p91
        %p181 = pneg %p122
        %p182 = pneg %p119
        %s183 = sand.u32 %s109, 1
        %s184 = scalar_lea.sflag [#allocation3], %s183
        %s185 = sand.u32 %s109, 1
        %s186 = smul.addr %s185, 8
        %s187 = scalar_lea.vmem [#allocation2], %s186
        %p188 = scmp.lt.s32.totalorder %s21, 1
        %s189 = scalar_select %p188, %s21, 1
        %p190 = scmp.lt.s32.totalorder %s22, 3
        %s191 = scalar_select %p190, %s22, 3
        %s192 = smul.addr %s191, 2
        %s193 = smul.addr %s189, 8
        %s194 = sadd.s32 %s192, %s193
        %s195 = smul.addr %s194, 4
        %s196 = scalar_lea.vmem %s0, %s195
        %v197 = vld [vmem:[%s196] sm:$0xff]
        %v198 = vld [vmem:[%s1] sm:$0x3]
        %v200 = vperm.slane %v198, 0
        %v201 = vperm.slane %v198, 1
        %v202 = vrot.slane %v201, 4
        %vm203 = vcmask 1043456
        %v204 = vsel %vm203, %v200, %v202
        %v206 = vmul.f32 %v197, %v204
        %v207 = vld [vmem:[%s2] sm:$0x3]
        %v209 = vperm.slane %v207, 0
        %v210 = vperm.slane %v207, 1
        %v211 = vrot.slane %v210, 4
        %v212 = vsel %vm203, %v209, %v211
        %v214 = vadd.f32 %v206, %v212
        %v215 = vmax.f32 %v214, 0.0
        %216 = vst [vmem:[%s187] sm:$0xff] %v215
        %s217 = sand.u32 %s109, 1
        %s218 = scalar_lea.sflag [#allocation3], %s217
        %s219 = sand.u32 %s109, 1
        %s220 = smul.addr %s219, 8
        %s221 = scalar_lea.vmem [#allocation2], %s220
        // Predicated region
        $region33: #{hrnet_forward.11} parent=31 // pred_check
          %p222 = pneg %p119
        $region34: #{hrnet_forward.11} parent=31 // pred_check_branch
          %224 = sbr.rel (%p222) target = $region36
        $region35: #{hrnet_forward.11} parent=31 // pred_region
          %226 = vsyncadd %s218, 0
          %s227 = smul.addr %s22, 2
          %s228 = smul.addr %s21, 8
          %s229 = sadd.s32 %s227, %s228
          %s230 = smul.addr %s229, 4
          %s231 = scalar_lea.hbm %s3, %s230
          %s233 = sshll.u32 %s221, 4
          %s234 = int_to_ptr.vmem [resolvable:$true] %s233
          %s235 = sshll.u32 %s231, 4
          %s236 = int_to_ptr.hbm [resolvable:$true] %s235
          %238 = dma.vmem_to_hbm [thread:$0]  %s234, 128, %s236, %s218
        $region36: #{hrnet_forward.11} parent=31 // pred_fallthru
          _
      $region32: #{hrnet_forward.11} parent=5 // pred_fallthru
        _
      %p239 = scmp.le.s32.totalorder 2, %s12
      // Predicated region
      $region37: #{hrnet_forward.11} parent=5 // pred_check
        %p240 = pneg %p239
      $region38: #{hrnet_forward.11} parent=5 // pred_check_branch
        %242 = sbr.rel (%p240) target = $region40
      $region39: #{hrnet_forward.11} parent=5 // pred_region
        %s243 = ssub.s32 %s12, 2
        // Predicated region
        $region41: #{hrnet_forward.11} parent=39 // pred_check
          %p244 = pneg %p125
        $region42: #{hrnet_forward.11} parent=39 // pred_check_branch
          %246 = sbr.rel (%p244) target = $region44
        $region43: #{hrnet_forward.11} parent=39 // pred_region
          %s247 = sand.u32 %s110, 1
          %s248 = scalar_lea.sflag [#allocation3], %s247
          %s249 = sand.u32 %s110, 1
          %s250 = smul.addr %s249, 8
          %s251 = scalar_lea.vmem [#allocation2], %s250
          %253 = dma.done %s248, 128
        $region44: #{hrnet_forward.11} parent=39 // pred_fallthru
          _
      $region40: #{hrnet_forward.11} parent=5 // pred_fallthru
        _
    $region6: #{hrnet_forward.11} parent=1 // loop_footer
      %s16 = sadd.s32 1, %s12
    $region7: #{hrnet_forward.11} parent=1 // loop_footer_branch
      %11 = sbr.rel target = $region3
    $region8: #{hrnet_forward.11} parent=1 // loop_exit
      _
    %254 = vsyncpa [#allocation3], 1
    %s255 = scalar_lea.sflag [#allocation3], 1
    %256 = vsyncpa %s255, 1

// kernel: hrnet_forward.10
$region0: #{hrnet_forward.10}
  #allocation0 [shape = 'u32[]', space=smem, size = 0x4, offset = 0x4, fixed_abs, tag = 'smem constant byte address 0x4 - core index']
  #allocation1 [shape = 'u32[72,128]{1,0:T(1,128)}', space=vmem, size = 0x9000, scoped, tag = 'internal scratch']
  %s0 = inlined_call_operand.vmem [shape: bf16[2,6,6,128], index: 0, kind: input, shape index: {}]
  %s1 = inlined_call_operand.vmem [shape: bf16[9,128,256], index: 1, kind: input, shape index: {}]
  %s2 = inlined_call_operand.vmem [shape: f32[2,4,4,256], index: 2, kind: output, shape index: {0}]
  %s3 = inlined_call_operand.vmem [shape: f32[2,4,2,256], index: 3, kind: output, shape index: {1}]
  %4 = xla_tuple %s2, %s3
  %s5 = sld [smem:[#allocation0]]
  $region49: #{hrnet_forward.10} parent=0
    _
  %s7 = ssub.s32 1, %s5
  %s8 = scalar_select 0, %s7, %s5
  loop: start=0, step=1, limit=10
  $region2: #{hrnet_forward.10} parent=0 // loop_pre_header
    _
  $region3: #{hrnet_forward.10} parent=0 // loop_header
    %s10 = sphi 0, %s14
    %p11 = scmp.ge.s32.totalorder %s10, 10
    %s17 = sphi 0, %s29
    %s18 = sphi 0, %s25
    %s19 = sphi 0, %s17
    %s20 = sphi 0, %s18
    %s21 = sphi 0, %s19
    %s22 = sphi 0, %s20
    %s32 = sphi 0, %s34
    %s35 = sphi 0, %s32
    %s36 = sphi 0, %s35
    %s52 = sphi 0, %s36
    %s56 = sphi 0, %s56
    %s58 = sphi 0, %s56
    %s59 = sphi 0, %s58
    %s73 = sphi 0, %s59
    %s81 = sphi 0, %s83
    %s84 = sphi 0, %s81
    %s85 = sphi 0, %s84
    %s101 = sphi 0, %s85
    %s109 = sphi 0, %s111
    %s112 = sphi 0, %s109
    %s113 = sphi 0, %s112
    %s129 = sphi 0, %s113
  $region4: #{hrnet_forward.10} parent=0 // loop_header_branch
    %13 = sbr.rel (%p11) target = $region8
  $region5: #{hrnet_forward.10} parent=0 // loop_body
    %s15 = ssub.s32 %s10, 1
    %s16 = ssub.s32 %s10, 2
    %s23 = sadd.s32 1, %s18
    %p24 = scmp.ge.s32.totalorder %s23, 4
    %s25 = scalar_select %p24, 0, %s23
    %s26 = sadd.s32 1, %s17
    %s27 = scalar_select %p24, %s26, %s17
    %p28 = scmp.ge.s32.totalorder %s27, 2
    %s29 = scalar_select %p28, 0, %s27
    %s30 = ssub.s32 %s17, %s29
    %p31 = scmp.eq.s32.totalorder %s30, 0
    %s33 = sadd.s32 %s32, 1
    %s34 = scalar_select %p31, %s32, %s33
    %p37 = pneg %p31
    %p38 = scmp.eq.s32.totalorder %s10, 7
    %p39 = por %p37, %p38
    %p40 = scmp.ne.s32.totalorder %s32, %s35
    %p41 = scmp.eq.s32.totalorder %s10, 0
    %p42 = por %p40, %p41
    %p43 = scmp.ne.s32.totalorder %s32, %s35
    %p44 = scmp.eq.s32.totalorder %s15, 7
    %p45 = por %p43, %p44
    %p46 = scmp.ne.s32.totalorder %s35, %s36
    %p47 = scmp.eq.s32.totalorder %s15, 0
    %p48 = por %p46, %p47
    %p49 = scmp.ne.s32.totalorder %s35, %s36
    %p50 = scmp.eq.s32.totalorder %s16, 7
    %p51 = por %p49, %p50
    %p53 = scmp.ne.s32.totalorder %s36, %s52
    %p54 = scmp.eq.s32.totalorder %s16, 0
    %p55 = por %p53, %p54
    %s57 = sadd.s32 %s56, 1
    %p60 = scmp.eq.s32.totalorder %s10, 7
    %p61 = scmp.ne.s32.totalorder %s56, %s58
    %p62 = scmp.eq.s32.totalorder %s10, 0
    %p63 = por %p61, %p62
    %p64 = scmp.ne.s32.totalorder %s56, %s58
    %p65 = scmp.eq.s32.totalorder %s15, 7
    %p66 = por %p64, %p65
    %p67 = scmp.ne.s32.totalorder %s58, %s59
    %p68 = scmp.eq.s32.totalorder %s15, 0
    %p69 = por %p67, %p68
    %p70 = scmp.ne.s32.totalorder %s58, %s59
    %p71 = scmp.eq.s32.totalorder %s16, 7
    %p72 = por %p70, %p71
    %p74 = scmp.ne.s32.totalorder %s59, %s73
    %p75 = scmp.eq.s32.totalorder %s16, 0
    %p76 = por %p74, %p75
    %s77 = ssub.s32 %s17, %s29
    %s78 = ssub.s32 %s18, %s25
    %s79 = sor.u32 %s77, %s78
    %p80 = scmp.eq.s32.totalorder %s79, 0
    %s82 = sadd.s32 %s81, 1
    %s83 = scalar_select %p80, %s81, %s82
    %p86 = pneg %p80
    %p87 = scmp.eq.s32.totalorder %s10, 7
    %p88 = por %p86, %p87
    %p89 = scmp.ne.s32.totalorder %s81, %s84
    %p90 = scmp.eq.s32.totalorder %s10, 0
    %p91 = por %p89, %p90
    %p92 = scmp.ne.s32.totalorder %s81, %s84
    %p93 = scmp.eq.s32.totalorder %s15, 7
    %p94 = por %p92, %p93
    %p95 = scmp.ne.s32.totalorder %s84, %s85
    %p96 = scmp.eq.s32.totalorder %s15, 0
    %p97 = por %p95, %p96
    %p98 = scmp.ne.s32.totalorder %s84, %s85
    %p99 = scmp.eq.s32.totalorder %s16, 7
    %p100 = por %p98, %p99
    %p102 = scmp.ne.s32.totalorder %s85, %s101
    %p103 = scmp.eq.s32.totalorder %s16, 0
    %p104 = por %p102, %p103
    %s105 = ssub.s32 %s17, %s29
    %s106 = ssub.s32 %s18, %s25
    %s107 = sor.u32 %s105, %s106
    %p108 = scmp.eq.s32.totalorder %s107, 0
    %s110 = sadd.s32 %s109, 1
    %s111 = scalar_select %p108, %s109, %s110
    %p114 = pneg %p108
    %p115 = scmp.eq.s32.totalorder %s10, 7
    %p116 = por %p114, %p115
    %p117 = scmp.ne.s32.totalorder %s109, %s112
    %p118 = scmp.eq.s32.totalorder %s10, 0
    %p119 = por %p117, %p118
    %p120 = scmp.ne.s32.totalorder %s109, %s112
    %p121 = scmp.eq.s32.totalorder %s15, 7
    %p122 = por %p120, %p121
    %p123 = scmp.ne.s32.totalorder %s112, %s113
    %p124 = scmp.eq.s32.totalorder %s15, 0
    %p125 = por %p123, %p124
    %p126 = scmp.ne.s32.totalorder %s112, %s113
    %p127 = scmp.eq.s32.totalorder %s16, 7
    %p128 = por %p126, %p127
    %p130 = scmp.ne.s32.totalorder %s113, %s129
    %p131 = scmp.eq.s32.totalorder %s16, 0
    %p132 = por %p130, %p131
    %p133 = scmp.le.s32.totalorder 1, %s10
    %p134 = scmp.lt.s32.totalorder %s10, 9
    %p135 = pnand %p133, %p134
    %p136 = pneg %p135
    // Predicated region
    $region9: #{hrnet_forward.10} parent=5 // pred_check
      _
    $region10: #{hrnet_forward.10} parent=5 // pred_check_branch
      %138 = sbr.rel (%p135) target = $region12
    $region11: #{hrnet_forward.10} parent=5 // pred_region
      %s139 = ssub.s32 %s10, 1
      // Predicated region
      $region13: #{hrnet_forward.10} parent=11 // pred_check
        %p140 = pneg %p69
      $region14: #{hrnet_forward.10} parent=11 // pred_check_branch
        %142 = sbr.rel (%p140) target = $region16
      $region15: #{hrnet_forward.10} parent=11 // pred_region
        _
      $region16: #{hrnet_forward.10} parent=11 // pred_fallthru
        _
    $region12: #{hrnet_forward.10} parent=5 // pred_fallthru
      _
    %p143 = scmp.lt.s32.totalorder %s10, 8
    // Predicated region
    $region17: #{hrnet_forward.10} parent=5 // pred_check
      %p144 = pneg %p143
    $region18: #{hrnet_forward.10} parent=5 // pred_check_branch
      %146 = sbr.rel (%p144) target = $region20
    $region19: #{hrnet_forward.10} parent=5 // pred_region
      // Predicated region
      $region21: #{hrnet_forward.10} parent=19 // pred_check
        %p147 = pneg %p42
      $region22: #{hrnet_forward.10} parent=19 // pred_check_branch
        %149 = sbr.rel (%p147) target = $region24
      $region23: #{hrnet_forward.10} parent=19 // pred_region
        %p150 = scmp.lt.s32.totalorder %s17, 1
        %s151 = scalar_select %p150, %s17, 1
        %s152 = smul.addr %s151, 6
        %s153 = smul.addr %s152, 4
        %s154 = scalar_lea.vmem %s0, %s153
      $region24: #{hrnet_forward.10} parent=19 // pred_fallthru
        _
    $region20: #{hrnet_forward.10} parent=5 // pred_fallthru
      _
    %p155 = scmp.le.s32.totalorder 1, %s10
    %p156 = scmp.lt.s32.totalorder %s10, 9
    %p157 = pnand %p155, %p156
    %p158 = pneg %p157
    // Predicated region
    $region25: #{hrnet_forward.10} parent=5 // pred_check
      _
    $region26: #{hrnet_forward.10} parent=5 // pred_check_branch
      %160 = sbr.rel (%p157) target = $region28
    $region27: #{hrnet_forward.10} parent=5 // pred_region
      %s161 = ssub.s32 %s10, 1
      %p162 = scmp.lt.s32.totalorder %s19, 1
      %s163 = scalar_select %p162, %s19, 1
      %s164 = smul.addr %s163, 6
      %s165 = smul.addr %s164, 4
      %s166 = scalar_lea.vmem %s0, %s165
      %p167 = pneg %p48
      %p168 = pneg %p45
      %p169 = pneg %p69
      %p170 = pneg %p66
      %p171 = pneg %p97
      %p172 = pneg %p94
      %p173 = scmp.lt.s32.totalorder %s19, 1
      %s174 = scalar_select %p173, %s19, 1
      %p175 = scmp.lt.s32.totalorder %s20, 3
      %s176 = scalar_select %p175, %s20, 3
      %s177 = smul.addr %s176, 2
      %s178 = smul.addr %s174, 8
      %s179 = sadd.s32 %s177, %s178
      %s180 = smul.addr %s179, 4
      %s181 = scalar_lea.vmem %s2, %s180
      %p182 = pneg %p125
      %p183 = pneg %p122
      %p184 = scmp.lt.s32.totalorder %s19, 1
      %s185 = scalar_select %p184, %s19, 1
      %p186 = scmp.lt.s32.totalorder %s20, 3
      %s187 = scalar_select %p186, %s20, 3
      %s188 = smul.addr %s187, 2
      %s189 = smul.addr %s185, 8
      %s190 = sadd.s32 %s188, %s189
      %s191 = smul.addr %s190, 2
      %s192 = scalar_lea.vmem %s3, %s191
      %p193 = scmp.lt.s32.totalorder %s19, 1
      %s194 = scalar_select %p193, %s19, 1
      %s195 = smul.addr %s194, 6
      %s196 = smul.addr %s195, 4
      %s197 = scalar_lea.vmem %s0, %s196
      %p198 = scmp.lt.s32.totalorder %s19, 1
      %s199 = scalar_select %p198, %s19, 1
      %p200 = scmp.lt.s32.totalorder %s20, 3
      %s201 = scalar_select %p200, %s20, 3
      %s202 = smul.addr %s201, 2
      %s203 = smul.addr %s199, 8
      %s204 = sadd.s32 %s202, %s203
      %s205 = smul.addr %s204, 4
      %s206 = scalar_lea.vmem %s2, %s205
      %p207 = scmp.lt.s32.totalorder %s19, 1
      %s208 = scalar_select %p207, %s19, 1
      %p209 = scmp.lt.s32.totalorder %s20, 3
      %s210 = scalar_select %p209, %s20, 3
      %s211 = smul.addr %s210, 2
      %s212 = smul.addr %s208, 8
      %s213 = sadd.s32 %s211, %s212
      %s214 = smul.addr %s213, 2
      %s215 = scalar_lea.vmem %s3, %s214
      %s216 = smul.addr %s20, 4
      %s217 = scalar_lea.vmem %s197, %s216
      %v218 = vld [vmem:[%s217] sm:$0x3]
      %v219 = vld [vmem:[%s1] sm:$0xff]
      %v220 = vld [vmem:[%s1 + $0x8] sm:$0xff]
      %v221 = vld [vmem:[%s1 + $0x10] sm:$0xff]
      %v222 = vld [vmem:[%s1 + $0x18] sm:$0xff]
      %v223 = vld [vmem:[%s1 + $0x20] sm:$0xff]
      %v224 = vld [vmem:[%s1 + $0x28] sm:$0xff]
      %v225 = vld [vmem:[%s1 + $0x30] sm:$0xff]
      %v226 = vld [vmem:[%s1 + $0x38] sm:$0xff]
      %v227 = vld [vmem:[%s1 + $0x40] sm:$0xff]
      %v228 = vld [vmem:[%s1 + $0x48] sm:$0xff]
      %v229 = vld [vmem:[%s1 + $0x50] sm:$0xff]
      %v230 = vld [vmem:[%s1 + $0x58] sm:$0xff]
      %v231 = vld [vmem:[%s1 + $0x60] sm:$0xff]
      %v232 = vld [vmem:[%s1 + $0x68] sm:$0xff]
      %v233 = vld [vmem:[%s1 + $0x70] sm:$0xff]
      %v234 = vld [vmem:[%s1 + $0x78] sm:$0xff]
      %v251 = vunpack.c.l.b16 %v219
      %v252 = vunpack.c.h.b16 %v219
      %v253 = vunpack.c.l.b16 %v220
      %v254 = vunpack.c.h.b16 %v220
      %v255 = vunpack.c.l.b16 %v221
      %v256 = vunpack.c.h.b16 %v221
      %v257 = vunpack.c.l.b16 %v222
      %v258 = vunpack.c.h.b16 %v222
      %v259 = vunpack.c.l.b16 %v223
      %v260 = vunpack.c.h.b16 %v223
      %v261 = vunpack.c.l.b16 %v224
      %v262 = vunpack.c.h.b16 %v224
      %v263 = vunpack.c.l.b16 %v225
      %v264 = vunpack.c.h.b16 %v225
      %v265 = vunpack.c.l.b16 %v226
      %v266 = vunpack.c.h.b16 %v226
      %v267 = vunpack.c.l.b16 %v227
      %v268 = vunpack.c.h.b16 %v227
      %v269 = vunpack.c.l.b16 %v228
      %v270 = vunpack.c.h.b16 %v228
      %v271 = vunpack.c.l.b16 %v229
      %v272 = vunpack.c.h.b16 %v229
      %v273 = vunpack.c.l.b16 %v230
      %v274 = vunpack.c.h.b16 %v230
      %v275 = vunpack.c.l.b16 %v231
      %v276 = vunpack.c.h.b16 %v231
      %v277 = vunpack.c.l.b16 %v232
      %v278 = vunpack.c.h.b16 %v232
      %v279 = vunpack.c.l.b16 %v233
      %v280 = vunpack.c.h.b16 %v233
      %v281 = vunpack.c.l.b16 %v234
      %v282 = vunpack.c.h.b16 %v234
      %v283 = vpack.c.b16 %v253, %v251
      %v284 = vpack.c.b16 %v254, %v252
      %v285 = vpack.c.b16 %v257, %v255
      %v286 = vpack.c.b16 %v258, %v256
      %v287 = vpack.c.b16 %v261, %v259
      %v288 = vpack.c.b16 %v262, %v260
      %v289 = vpack.c.b16 %v265, %v263
      %v290 = vpack.c.b16 %v266, %v264
      %v291 = vpack.c.b16 %v269, %v267
      %v292 = vpack.c.b16 %v270, %v268
      %v293 = vpack.c.b16 %v273, %v271
      %v294 = vpack.c.b16 %v274, %v272
      %v295 = vpack.c.b16 %v277, %v275
      %v296 = vpack.c.b16 %v278, %v276
      %v297 = vpack.c.b16 %v281, %v279
      %v298 = vpack.c.b16 %v282, %v280
      %315 = vmatpush.bf16.msra.mxu0 %v297
      %316 = vmatpush.bf16.msra.mxu0 %v295
      %317 = vmatpush.bf16.msra.mxu0 %v293
      %318 = vmatpush.bf16.msra.mxu0 %v291
      %319 = vmatpush.bf16.msra.mxu0 %v289
      %320 = vmatpush.bf16.msra.mxu0 %v287
      %321 = vmatpush.bf16.msra.mxu0 %v285
      %322 = vmatpush.bf16.msra.mxu0 %v283
      %323 = vmatmul.bf16.gmra.mxu0 %v218
      %v324 = vpop.f32.mrf.mxu0
      %v325 = vadd.f32 0.0, %v324
      %v326 = vpop.f32.mrf.mxu0
      %327 = vdwg.mxu0
      %328 = vmatpush.bf16.msra.mxu0 %v298
      %329 = vmatpush.bf16.msra.mxu0 %v296
      %330 = vmatpush.bf16.msra.mxu0 %v294
      %331 = vmatpush.bf16.msra.mxu0 %v292
      %332 = vmatpush.bf16.msra.mxu0 %v290
      %333 = vmatpush.bf16.msra.mxu0 %v288
      %334 = vmatpush.bf16.msra.mxu0 %v286
      %335 = vmatpush.bf16.msra.mxu0 %v284
      %336 = vmatmul.bf16.gmra.mxu0 %v218
      %v337 = vpop.f32.mrf.mxu0
      %v338 = vadd.f32 0.0, %v337
      %v339 = vpop.f32.mrf.mxu0
      %340 = vdwg.mxu0
      %v343 = vrot.slane %v338, 4
      %vm344 = vcmask 1043456
      %v345 = vsel %vm344, %v325, %v343
      %347 = vst [vmem:[%s206] sm:$0xff] %v345
      %v348 = vld [vmem:[%s206] sm:$0xff]
      %v349 = vld [vmem:[%s217] sm:$0x7]
      %s350 = scalar_lea.vmem %s1, 128
      %v351 = vld [vmem:[%s350] sm:$0xff]
      %v352 = vld [vmem:[%s350 + $0x8] sm:$0xff]
      %v353 = vld [vmem:[%s350 + $0x10] sm:$0xff]
      %v354 = vld [vmem:[%s350 + $0x18] sm:$0xff]
      %v355 = vld [vmem:[%s350 + $0x20] sm:$0xff]
      %v356 = vld [vmem:[%s350 + $0x28] sm:$0xff]
      %v357 = vld [vmem:[%s350 + $0x30] sm:$0xff]
      %v358 = vld [vmem:[%s350 + $0x38] sm:$0xff]
      %v359 = vld [vmem:[%s350 + $0x40] sm:$0xff]
      %v360 = vld [vmem:[%s350 + $0x48] sm:$0xff]
      %v361 = vld [vmem:[%s350 + $0x50] sm:$0xff]
      %v362 = vld [vmem:[%s350 + $0x58] sm:$0xff]
      %v363 = vld [vmem:[%s350 + $0x60] sm:$0xff]
      %v364 = vld [vmem:[%s350 + $0x68] sm:$0xff]
      %v365 = vld [vmem:[%s350 + $0x70] sm:$0xff]
      %v366 = vld [vmem:[%s350 + $0x78] sm:$0xff]
      %v368 = vunpack.c.l.b16 %v349
      %v369 = vpack.c.b16 %v368, %v368
      %v371 = vshrl.u32 %v369, 16
      %v373 = vshll.u32 %v369, 16
      %v375 = vrot.slane %v373, 1
      %v376 = vor.u32 %v371, %v375
      %v394 = vunpack.c.l.b16 %v351
      %v395 = vunpack.c.h.b16 %v351
      %v396 = vunpack.c.l.b16 %v352
      %v397 = vunpack.c.h.b16 %v352
      %v398 = vunpack.c.l.b16 %v353
      %v399 = vunpack.c.h.b16 %v353
      %v400 = vunpack.c.l.b16 %v354
      %v401 = vunpack.c.h.b16 %v354
      %v402 = vunpack.c.l.b16 %v355
      %v403 = vunpack.c.h.b16 %v355
      %v404 = vunpack.c.l.b16 %v356
      %v405 = vunpack.c.h.b16 %v356
      %v406 = vunpack.c.l.b16 %v357
      %v407 = vunpack.c.h.b16 %v357
      %v408 = vunpack.c.l.b16 %v358
      %v409 = vunpack.c.h.b16 %v358
      %v410 = vunpack.c.l.b16 %v359
      %v411 = vunpack.c.h.b16 %v359
      %v412 = vunpack.c.l.b16 %v360
      %v413 = vunpack.c.h.b16 %v360
      %v414 = vunpack.c.l.b16 %v361
      %v415 = vunpack.c.h.b16 %v361
      %v416 = vunpack.c.l.b16 %v362
      %v417 = vunpack.c.h.b16 %v362
      %v418 = vunpack.c.l.b16 %v363
      %v419 = vunpack.c.h.b16 %v363
      %v420 = vunpack.c.l.b16 %v364
      %v421 = vunpack.c.h.b16 %v364
      %v422 = vunpack.c.l.b16 %v365
      %v423 = vunpack.c.h.b16 %v365
      %v424 = vunpack.c.l.b16 %v366
      %v425 = vunpack.c.h.b16 %v366
      %v426 = vpack.c.b16 %v396, %v394
      %v427 = vpack.c.b16 %v397, %v395
      %v428 = vpack.c.b16 %v400, %v398
      %v429 = vpack.c.b16 %v401, %v399
      %v430 = vpack.c.b16 %v404, %v402
      %v431 = vpack.c.b16 %v405, %v403
      %v432 = vpack.c.b16 %v408, %v406
      %v433 = vpack.c.b16 %v409, %v407
      %v434 = vpack.c.b16 %v412, %v410
      %v435 = vpack.c.b16 %v413, %v411
      %v436 = vpack.c.b16 %v416, %v414
      %v437 = vpack.c.b16 %v417, %v415
      %v438 = vpack.c.b16 %v420, %v418
      %v439 = vpack.c.b16 %v421, %v419
      %v440 = vpack.c.b16 %v424, %v422
      %v441 = vpack.c.b16 %v425, %v423
      %458 = vmatpush.bf16.msra.mxu0 %v440
      %459 = vmatpush.bf16.msra.mxu0 %v438
      %460 = vmatpush.bf16.msra.mxu0 %v436
      %461 = vmatpush.bf16.msra.mxu0 %v434
      %462 = vmatpush.bf16.msra.mxu0 %v432
      %463 = vmatpush.bf16.msra.mxu0 %v430
      %464 = vmatpush.bf16.msra.mxu0 %v428
      %465 = vmatpush.bf16.msra.mxu0 %v426
      %466 = vmatmul.bf16.gmra.mxu0 %v376
      %v467 = vpop.f32.mrf.mxu0
      %v468 = vadd.f32 0.0, %v467
      %v469 = vpop.f32.mrf.mxu0
      %470 = vdwg.mxu0
      %471 = vmatpush.bf16.msra.mxu0 %v441
      %472 = vmatpush.bf16.msra.mxu0 %v439
      %473 = vmatpush.bf16.msra.mxu0 %v437
      %474 = vmatpush.bf16.msra.mxu0 %v435
      %475 = vmatpush.bf16.msra.mxu0 %v433
      %476 = vmatpush.bf16.msra.mxu0 %v431
      %477 = vmatpush.bf16.msra.mxu0 %v429
      %478 = vmatpush.bf16.msra.mxu0 %v427
      %479 = vmatmul.bf16.gmra.mxu0 %v376
      %v480 = vpop.f32.mrf.mxu0
      %v481 = vadd.f32 0.0, %v480
      %v482 = vpop.f32.mrf.mxu0
      %483 = vdwg.mxu0
      %v486 = vrot.slane %v481, 4
      %v487 = vsel %vm344, %v468, %v486
      %v489 = vadd.f32 %v348, %v487
      %490 = vst [vmem:[%s206] sm:$0xff] %v489
      %v491 = vld [vmem:[%s206] sm:$0xff]
      %v492 = vld [vmem:[%s217] sm:$0x6]
      %s493 = scalar_lea.vmem %s1, 256
      %v494 = vld [vmem:[%s493] sm:$0xff]
      %v495 = vld [vmem:[%s493 + $0x8] sm:$0xff]
      %v496 = vld [vmem:[%s493 + $0x10] sm:$0xff]
      %v497 = vld [vmem:[%s493 + $0x18] sm:$0xff]
      %v498 = vld [vmem:[%s493 + $0x20] sm:$0xff]
      %v499 = vld [vmem:[%s493 + $0x28] sm:$0xff]
      %v500 = vld [vmem:[%s493 + $0x30] sm:$0xff]
      %v501 = vld [vmem:[%s493 + $0x38] sm:$0xff]
      %v502 = vld [vmem:[%s493 + $0x40] sm:$0xff]
      %v503 = vld [vmem:[%s493 + $0x48] sm:$0xff]
      %v504 = vld [vmem:[%s493 + $0x50] sm:$0xff]
      %v505 = vld [vmem:[%s493 + $0x58] sm:$0xff]
      %v506 = vld [vmem:[%s493 + $0x60] sm:$0xff]
      %v507 = vld [vmem:[%s493 + $0x68] sm:$0xff]
      %v508 = vld [vmem:[%s493 + $0x70] sm:$0xff]
      %v509 = vld [vmem:[%s493 + $0x78] sm:$0xff]
      %v511 = vunpack.c.l.b16 %v492
      %v512 = vpack.c.b16 %v511, %v511
      %v513 = vrot.slane %v512, 1
      %v531 = vunpack.c.l.b16 %v494
      %v532 = vunpack.c.h.b16 %v494
      %v533 = vunpack.c.l.b16 %v495
      %v534 = vunpack.c.h.b16 %v495
      %v535 = vunpack.c.l.b16 %v496
      %v536 = vunpack.c.h.b16 %v496
      %v537 = vunpack.c.l.b16 %v497
      %v538 = vunpack.c.h.b16 %v497
      %v539 = vunpack.c.l.b16 %v498
      %v540 = vunpack.c.h.b16 %v498
      %v541 = vunpack.c.l.b16 %v499
      %v542 = vunpack.c.h.b16 %v499
      %v543 = vunpack.c.l.b16 %v500
      %v544 = vunpack.c.h.b16 %v500
      %v545 = vunpack.c.l.b16 %v501
      %v546 = vunpack.c.h.b16 %v501
      %v547 = vunpack.c.l.b16 %v502
      %v548 = vunpack.c.h.b16 %v502
      %v549 = vunpack.c.l.b16 %v503
      %v550 = vunpack.c.h.b16 %v503
      %v551 = vunpack.c.l.b16 %v504
      %v552 = vunpack.c.h.b16 %v504
      %v553 = vunpack.c.l.b16 %v505
      %v554 = vunpack.c.h.b16 %v505
      %v555 = vunpack.c.l.b16 %v506
      %v556 = vunpack.c.h.b16 %v506
      %v557 = vunpack.c.l.b16 %v507
      %v558 = vunpack.c.h.b16 %v507
      %v559 = vunpack.c.l.b16 %v508
      %v560 = vunpack.c.h.b16 %v508
      %v561 = vunpack.c.l.b16 %v509
      %v562 = vunpack.c.h.b16 %v509
      %v563 = vpack.c.b16 %v533, %v531
      %v564 = vpack.c.b16 %v534, %v532
      %v565 = vpack.c.b16 %v537, %v535
      %v566 = vpack.c.b16 %v538, %v536
      %v567 = vpack.c.b16 %v541, %v539
      %v568 = vpack.c.b16 %v542, %v540
      %v569 = vpack.c.b16 %v545, %v543
      %v570 = vpack.c.b16 %v546, %v544
      %v571 = vpack.c.b16 %v549, %v547
      %v572 = vpack.c.b16 %v550, %v548
      %v573 = vpack.c.b16 %v553, %v551
      %v574 = vpack.c.b16 %v554, %v552
      %v575 = vpack.c.b16 %v557, %v555
      %v576 = vpack.c.b16 %v558, %v556
      %v577 = vpack.c.b16 %v561, %v559
      %v578 = vpack.c.b16 %v562, %v560
      %595 = vmatpush.bf16.msra.mxu0 %v577
      %596 = vmatpush.bf16.msra.mxu0 %v575
      %597 = vmatpush.bf16.msra.mxu0 %v573
      %598 = vmatpush.bf16.msra.mxu0 %v571
      %599 = vmatpush.bf16.msra.mxu0 %v569
      %600 = vmatpush.bf16.msra.mxu0 %v567
      %601 = vmatpush.bf16.msra.mxu0 %v565
      %602 = vmatpush.bf16.msra.mxu0 %v563
      %603 = vmatmul.bf16.gmra.mxu0 %v513
      %v604 = vpop.f32.mrf.mxu0
      %v605 = vadd.f32 0.0, %v604
      %v606 = vpop.f32.mrf.mxu0
      %607 = vdwg.mxu0
      %608 = vmatpush.bf16.msra.mxu0 %v578
      %609 = vmatpush.bf16.msra.mxu0 %v576
      %610 = vmatpush.bf16.msra.mxu0 %v574
      %611 = vmatpush.bf16.msra.mxu0 %v572
      %612 = vmatpush.bf16.msra.mxu0 %v570
      %613 = vmatpush.bf16.msra.mxu0 %v568
      %614 = vmatpush.bf16.msra.mxu0 %v566
      %615 = vmatpush.bf16.msra.mxu0 %v564
      %616 = vmatmul.bf16.gmra.mxu0 %v513
      %v617 = vpop.f32.mrf.mxu0
      %v618 = vadd.f32 0.0, %v617
      %v619 = vpop.f32.mrf.mxu0
      %620 = vdwg.mxu0
      %v623 = vrot.slane %v618, 4
      %v624 = vsel %vm344, %v605, %v623
      %v626 = vadd.f32 %v491, %v624
      %627 = vst [vmem:[%s206] sm:$0xff] %v626
      %v628 = vld [vmem:[%s206] sm:$0xff]
      %s629 = sadd.s32 %s20, 1
      %s630 = smul.addr %s629, 4
      %s631 = scalar_lea.vmem %s197, %s630
      %v632 = vld [vmem:[%s631] sm:$0x3]
      %s633 = scalar_lea.vmem %s1, 384
      %v634 = vld [vmem:[%s633] sm:$0xff]
      %v635 = vld [vmem:[%s633 + $0x8] sm:$0xff]
      %v636 = vld [vmem:[%s633 + $0x10] sm:$0xff]
      %v637 = vld [vmem:[%s633 + $0x18] sm:$0xff]
      %v638 = vld [vmem:[%s633 + $0x20] sm:$0xff]
      %v639 = vld [vmem:[%s633 + $0x28] sm:$0xff]
      %v640 = vld [vmem:[%s633 + $0x30] sm:$0xff]
      %v641 = vld [vmem:[%s633 + $0x38] sm:$0xff]
      %v642 = vld [vmem:[%s633 + $0x40] sm:$0xff]
      %v643 = vld [vmem:[%s633 + $0x48] sm:$0xff]
      %v644 = vld [vmem:[%s633 + $0x50] sm:$0xff]
      %v645 = vld [vmem:[%s633 + $0x58] sm:$0xff]
      %v646 = vld [vmem:[%s633 + $0x60] sm:$0xff]
      %v647 = vld [vmem:[%s633 + $0x68] sm:$0xff]
      %v648 = vld [vmem:[%s633 + $0x70] sm:$0xff]
      %v649 = vld [vmem:[%s633 + $0x78] sm:$0xff]
      %v666 = vunpack.c.l.b16 %v634
      %v667 = vunpack.c.h.b16 %v634
      %v668 = vunpack.c.l.b16 %v635
      %v669 = vunpack.c.h.b16 %v635
      %v670 = vunpack.c.l.b16 %v636
      %v671 = vunpack.c.h.b16 %v636
      %v672 = vunpack.c.l.b16 %v637
      %v673 = vunpack.c.h.b16 %v637
      %v674 = vunpack.c.l.b16 %v638
      %v675 = vunpack.c.h.b16 %v638
      %v676 = vunpack.c.l.b16 %v639
      %v677 = vunpack.c.h.b16 %v639
      %v678 = vunpack.c.l.b16 %v640
      %v679 = vunpack.c.h.b16 %v640
      %v680 = vunpack.c.l.b16 %v641
      %v681 = vunpack.c.h.b16 %v641
      %v682 = vunpack.c.l.b16 %v642
      %v683 = vunpack.c.h.b16 %v642
      %v684 = vunpack.c.l.b16 %v643
      %v685 = vunpack.c.h.b16 %v643
      %v686 = vunpack.c.l.b16 %v644
      %v687 = vunpack.c.h.b16 %v644
      %v688 = vunpack.c.l.b16 %v645
      %v689 = vunpack.c.h.b16 %v645
      %v690 = vunpack.c.l.b16 %v646
      %v691 = vunpack.c.h.b16 %v646
      %v692 = vunpack.c.l.b16 %v647
      %v693 = vunpack.c.h.b16 %v647
      %v694 = vunpack.c.l.b16 %v648
      %v695 = vunpack.c.h.b16 %v648
      %v696 = vunpack.c.l.b16 %v649
      %v697 = vunpack.c.h.b16 %v649
      %v698 = vpack.c.b16 %v668, %v666
      %v699 = vpack.c.b16 %v669, %v667
      %v700 = vpack.c.b16 %v672, %v670
      %v701 = vpack.c.b16 %v673, %v671
      %v702 = vpack.c.b16 %v676, %v674
      %v703 = vpack.c.b16 %v677, %v675
      %v704 = vpack.c.b16 %v680, %v678
      %v705 = vpack.c.b16 %v681, %v679
      %v706 = vpack.c.b16 %v684, %v682
      %v707 = vpack.c.b16 %v685, %v683
      %v708 = vpack.c.b16 %v688, %v686
      %v709 = vpack.c.b16 %v689, %v687
      %v710 = vpack.c.b16 %v692, %v690
      %v711 = vpack.c.b16 %v693, %v691
      %v712 = vpack.c.b16 %v696, %v694
      %v713 = vpack.c.b16 %v697, %v695
      %730 = vmatpush.bf16.msra.mxu0 %v712
      %731 = vmatpush.bf16.msra.mxu0 %v710
      %732 = vmatpush.bf16.msra.mxu0 %v708
      %733 = vmatpush.bf16.msra.mxu0 %v706
      %734 = vmatpush.bf16.msra.mxu0 %v704
      %735 = vmatpush.bf16.msra.mxu0 %v702
      %736 = vmatpush.bf16.msra.mxu0 %v700
      %737 = vmatpush.bf16.msra.mxu0 %v698
      %738 = vmatmul.bf16.gmra.mxu0 %v632
      %v739 = vpop.f32.mrf.mxu0
      %v740 = vadd.f32 0.0, %v739
      %v741 = vpop.f32.mrf.mxu0
      %742 = vdwg.mxu0
      %743 = vmatpush.bf16.msra.mxu0 %v713
      %744 = vmatpush.bf16.msra.mxu0 %v711
      %745 = vmatpush.bf16.msra.mxu0 %v709
      %746 = vmatpush.bf16.msra.mxu0 %v707
      %747 = vmatpush.bf16.msra.mxu0 %v705
      %748 = vmatpush.bf16.msra.mxu0 %v703
      %749 = vmatpush.bf16.msra.mxu0 %v701
      %750 = vmatpush.bf16.msra.mxu0 %v699
      %751 = vmatmul.bf16.gmra.mxu0 %v632
      %v752 = vpop.f32.mrf.mxu0
      %v753 = vadd.f32 0.0, %v752
      %v754 = vpop.f32.mrf.mxu0
      %755 = vdwg.mxu0
      %v758 = vrot.slane %v753, 4
      %v759 = vsel %vm344, %v740, %v758
      %v761 = vadd.f32 %v628, %v759
      %762 = vst [vmem:[%s206] sm:$0xff] %v761
      %v763 = vld [vmem:[%s206] sm:$0xff]
      %v764 = vld [vmem:[%s631] sm:$0x7]
      %s765 = scalar_lea.vmem %s1, 512
      %v766 = vld [vmem:[%s765] sm:$0xff]
      %v767 = vld [vmem:[%s765 + $0x8] sm:$0xff]
      %v768 = vld [vmem:[%s765 + $0x10] sm:$0xff]
      %v769 = vld [vmem:[%s765 + $0x18] sm:$0xff]
      %v770 = vld [vmem:[%s765 + $0x20] sm:$0xff]
      %v771 = vld [vmem:[%s765 + $0x28] sm:$0xff]
      %v772 = vld [vmem:[%s765 + $0x30] sm:$0xff]
      %v773 = vld [vmem:[%s765 + $0x38] sm:$0xff]
      %v774 = vld [vmem:[%s765 + $0x40] sm:$0xff]
      %v775 = vld [vmem:[%s765 + $0x48] sm:$0xff]
      %v776 = vld [vmem:[%s765 + $0x50] sm:$0xff]
      %v777 = vld [vmem:[%s765 + $0x58] sm:$0xff]
      %v778 = vld [vmem:[%s765 + $0x60] sm:$0xff]
      %v779 = vld [vmem:[%s765 + $0x68] sm:$0xff]
      %v780 = vld [vmem:[%s765 + $0x70] sm:$0xff]
      %v781 = vld [vmem:[%s765 + $0x78] sm:$0xff]
      %v783 = vunpack.c.l.b16 %v764
      %v784 = vpack.c.b16 %v783, %v783
      %v786 = vshrl.u32 %v784, 16
      %v788 = vshll.u32 %v784, 16
      %v790 = vrot.slane %v788, 1
      %v791 = vor.u32 %v786, %v790
      %v809 = vunpack.c.l.b16 %v766
      %v810 = vunpack.c.h.b16 %v766
      %v811 = vunpack.c.l.b16 %v767
      %v812 = vunpack.c.h.b16 %v767
      %v813 = vunpack.c.l.b16 %v768
      %v814 = vunpack.c.h.b16 %v768
      %v815 = vunpack.c.l.b16 %v769
      %v816 = vunpack.c.h.b16 %v769
      %v817 = vunpack.c.l.b16 %v770
      %v818 = vunpack.c.h.b16 %v770
      %v819 = vunpack.c.l.b16 %v771
      %v820 = vunpack.c.h.b16 %v771
      %v821 = vunpack.c.l.b16 %v772
      %v822 = vunpack.c.h.b16 %v772
      %v823 = vunpack.c.l.b16 %v773
      %v824 = vunpack.c.h.b16 %v773
      %v825 = vunpack.c.l.b16 %v774
      %v826 = vunpack.c.h.b16 %v774
      %v827 = vunpack.c.l.b16 %v775
      %v828 = vunpack.c.h.b16 %v775
      %v829 = vunpack.c.l.b16 %v776
      %v830 = vunpack.c.h.b16 %v776
      %v831 = vunpack.c.l.b16 %v777
      %v832 = vunpack.c.h.b16 %v777
      %v833 = vunpack.c.l.b16 %v778
      %v834 = vunpack.c.h.b16 %v778
      %v835 = vunpack.c.l.b16 %v779
      %v836 = vunpack.c.h.b16 %v779
      %v837 = vunpack.c.l.b16 %v780
      %v838 = vunpack.c.h.b16 %v780
      %v839 = vunpack.c.l.b16 %v781
      %v840 = vunpack.c.h.b16 %v781
      %v841 = vpack.c.b16 %v811, %v809
      %v842 = vpack.c.b16 %v812, %v810
      %v843 = vpack.c.b16 %v815, %v813
      %v844 = vpack.c.b16 %v816, %v814
      %v845 = vpack.c.b16 %v819, %v817
      %v846 = vpack.c.b16 %v820, %v818
      %v847 = vpack.c.b16 %v823, %v821
      %v848 = vpack.c.b16 %v824, %v822
      %v849 = vpack.c.b16 %v827, %v825
      %v850 = vpack.c.b16 %v828, %v826
      %v851 = vpack.c.b16 %v831, %v829
      %v852 = vpack.c.b16 %v832, %v830
      %v853 = vpack.c.b16 %v835, %v833
      %v854 = vpack.c.b16 %v836, %v834
      %v855 = vpack.c.b16 %v839, %v837
      %v856 = vpack.c.b16 %v840, %v838
      %873 = vmatpush.bf16.msra.mxu0 %v855
      %874 = vmatpush.bf16.msra.mxu0 %v853
      %875 = vmatpush.bf16.msra.mxu0 %v851
      %876 = vmatpush.bf16.msra.mxu0 %v849
      %877 = vmatpush.bf16.msra.mxu0 %v847
      %878 = vmatpush.bf16.msra.mxu0 %v845
      %879 = vmatpush.bf16.msra.mxu0 %v843
      %880 = vmatpush.bf16.msra.mxu0 %v841
      %881 = vmatmul.bf16.gmra.mxu0 %v791
      %v882 = vpop.f32.mrf.mxu0
      %v883 = vadd.f32 0.0, %v882
      %v884 = vpop.f32.mrf.mxu0
      %885 = vdwg.mxu0
      %886 = vmatpush.bf16.msra.mxu0 %v856
      %887 = vmatpush.bf16.msra.mxu0 %v854
      %888 = vmatpush.bf16.msra.mxu0 %v852
      %889 = vmatpush.bf16.msra.mxu0 %v850
      %890 = vmatpush.bf16.msra.mxu0 %v848
      %891 = vmatpush.bf16.msra.mxu0 %v846
      %892 = vmatpush.bf16.msra.mxu0 %v844
      %893 = vmatpush.bf16.msra.mxu0 %v842
      %894 = vmatmul.bf16.gmra.mxu0 %v791
      %v895 = vpop.f32.mrf.mxu0
      %v896 = vadd.f32 0.0, %v895
      %v897 = vpop.f32.mrf.mxu0
      %898 = vdwg.mxu0
      %v901 = vrot.slane %v896, 4
      %v902 = vsel %vm344, %v883, %v901
      %v904 = vadd.f32 %v763, %v902
      %905 = vst [vmem:[%s206] sm:$0xff] %v904
      %v906 = vld [vmem:[%s206] sm:$0xff]
      %v907 = vld [vmem:[%s631] sm:$0x6]
      %s908 = scalar_lea.vmem %s1, 640
      %v909 = vld [vmem:[%s908] sm:$0xff]
      %v910 = vld [vmem:[%s908 + $0x8] sm:$0xff]
      %v911 = vld [vmem:[%s908 + $0x10] sm:$0xff]
      %v912 = vld [vmem:[%s908 + $0x18] sm:$0xff]
      %v913 = vld [vmem:[%s908 + $0x20] sm:$0xff]
      %v914 = vld [vmem:[%s908 + $0x28] sm:$0xff]
      %v915 = vld [vmem:[%s908 + $0x30] sm:$0xff]
      %v916 = vld [vmem:[%s908 + $0x38] sm:$0xff]
      %v917 = vld [vmem:[%s908 + $0x40] sm:$0xff]
      %v918 = vld [vmem:[%s908 + $0x48] sm:$0xff]
      %v919 = vld [vmem:[%s908 + $0x50] sm:$0xff]
      %v920 = vld [vmem:[%s908 + $0x58] sm:$0xff]
      %v921 = vld [vmem:[%s908 + $0x60] sm:$0xff]
      %v922 = vld [vmem:[%s908 + $0x68] sm:$0xff]
      %v923 = vld [vmem:[%s908 + $0x70] sm:$0xff]
      %v924 = vld [vmem:[%s908 + $0x78] sm:$0xff]
      %v926 = vunpack.c.l.b16 %v907
      %v927 = vpack.c.b16 %v926, %v926
      %v928 = vrot.slane %v927, 1
      %v946 = vunpack.c.l.b16 %v909
      %v947 = vunpack.c.h.b16 %v909
      %v948 = vunpack.c.l.b16 %v910
      %v949 = vunpack.c.h.b16 %v910
      %v950 = vunpack.c.l.b16 %v911
      %v951 = vunpack.c.h.b16 %v911
      %v952 = vunpack.c.l.b16 %v912
      %v953 = vunpack.c.h.b16 %v912
      %v954 = vunpack.c.l.b16 %v913
      %v955 = vunpack.c.h.b16 %v913
      %v956 = vunpack.c.l.b16 %v914
      %v957 = vunpack.c.h.b16 %v914
      %v958 = vunpack.c.l.b16 %v915
      %v959 = vunpack.c.h.b16 %v915
      %v960 = vunpack.c.l.b16 %v916
      %v961 = vunpack.c.h.b16 %v916
      %v962 = vunpack.c.l.b16 %v917
      %v963 = vunpack.c.h.b16 %v917
      %v964 = vunpack.c.l.b16 %v918
      %v965 = vunpack.c.h.b16 %v918
      %v966 = vunpack.c.l.b16 %v919
      %v967 = vunpack.c.h.b16 %v919
      %v968 = vunpack.c.l.b16 %v920
      %v969 = vunpack.c.h.b16 %v920
      %v970 = vunpack.c.l.b16 %v921
      %v971 = vunpack.c.h.b16 %v921
      %v972 = vunpack.c.l.b16 %v922
      %v973 = vunpack.c.h.b16 %v922
      %v974 = vunpack.c.l.b16 %v923
      %v975 = vunpack.c.h.b16 %v923
      %v976 = vunpack.c.l.b16 %v924
      %v977 = vunpack.c.h.b16 %v924
      %v978 = vpack.c.b16 %v948, %v946
      %v979 = vpack.c.b16 %v949, %v947
      %v980 = vpack.c.b16 %v952, %v950
      %v981 = vpack.c.b16 %v953, %v951
      %v982 = vpack.c.b16 %v956, %v954
      %v983 = vpack.c.b16 %v957, %v955
      %v984 = vpack.c.b16 %v960, %v958
      %v985 = vpack.c.b16 %v961, %v959
      %v986 = vpack.c.b16 %v964, %v962
      %v987 = vpack.c.b16 %v965, %v963
      %v988 = vpack.c.b16 %v968, %v966
      %v989 = vpack.c.b16 %v969, %v967
      %v990 = vpack.c.b16 %v972, %v970
      %v991 = vpack.c.b16 %v973, %v971
      %v992 = vpack.c.b16 %v976, %v974
      %v993 = vpack.c.b16 %v977, %v975
      %1010 = vmatpush.bf16.msra.mxu0 %v992
      %1011 = vmatpush.bf16.msra.mxu0 %v990
      %1012 = vmatpush.bf16.msra.mxu0 %v988
      %1013 = vmatpush.bf16.msra.mxu0 %v986
      %1014 = vmatpush.bf16.msra.mxu0 %v984
      %1015 = vmatpush.bf16.msra.mxu0 %v982
      %1016 = vmatpush.bf16.msra.mxu0 %v980
      %1017 = vmatpush.bf16.msra.mxu0 %v978
      %1018 = vmatmul.bf16.gmra.mxu0 %v928
      %v1019 = vpop.f32.mrf.mxu0
      %v1020 = vadd.f32 0.0, %v1019
      %v1021 = vpop.f32.mrf.mxu0
      %1022 = vdwg.mxu0
      %1023 = vmatpush.bf16.msra.mxu0 %v993
      %1024 = vmatpush.bf16.msra.mxu0 %v991
      %1025 = vmatpush.bf16.msra.mxu0 %v989
      %1026 = vmatpush.bf16.msra.mxu0 %v987
      %1027 = vmatpush.bf16.msra.mxu0 %v985
      %1028 = vmatpush.bf16.msra.mxu0 %v983
      %1029 = vmatpush.bf16.msra.mxu0 %v981
      %1030 = vmatpush.bf16.msra.mxu0 %v979
      %1031 = vmatmul.bf16.gmra.mxu0 %v928
      %v1032 = vpop.f32.mrf.mxu0
      %v1033 = vadd.f32 0.0, %v1032
      %v1034 = vpop.f32.mrf.mxu0
      %1035 = vdwg.mxu0
      %v1038 = vrot.slane %v1033, 4
      %v1039 = vsel %vm344, %v1020, %v1038
      %v1041 = vadd.f32 %v906, %v1039
      %1042 = vst [vmem:[%s206] sm:$0xff] %v1041
      %v1043 = vld [vmem:[%s206] sm:$0xff]
      %s1044 = sadd.s32 %s20, 2
      %s1045 = smul.addr %s1044, 4
      %s1046 = scalar_lea.vmem %s197, %s1045
      %v1047 = vld [vmem:[%s1046] sm:$0x3]
      %s1048 = scalar_lea.vmem %s1, 768
      %v1049 = vld [vmem:[%s1048] sm:$0xff]
      %v1050 = vld [vmem:[%s1048 + $0x8] sm:$0xff]
      %v1051 = vld [vmem:[%s1048 + $0x10] sm:$0xff]
      %v1052 = vld [vmem:[%s1048 + $0x18] sm:$0xff]
      %v1053 = vld [vmem:[%s1048 + $0x20] sm:$0xff]
      %v1054 = vld [vmem:[%s1048 + $0x28] sm:$0xff]
      %v1055 = vld [vmem:[%s1048 + $0x30] sm:$0xff]
      %v1056 = vld [vmem:[%s1048 + $0x38] sm:$0xff]
      %v1057 = vld [vmem:[%s1048 + $0x40] sm:$0xff]
      %v1058 = vld [vmem:[%s1048 + $0x48] sm:$0xff]
      %v1059 = vld [vmem:[%s1048 + $0x50] sm:$0xff]
      %v1060 = vld [vmem:[%s1048 + $0x58] sm:$0xff]
      %v1061 = vld [vmem:[%s1048 + $0x60] sm:$0xff]
      %v1062 = vld [vmem:[%s1048 + $0x68] sm:$0xff]
      %v1063 = vld [vmem:[%s1048 + $0x70] sm:$0xff]
      %v1064 = vld [vmem:[%s1048 + $0x78] sm:$0xff]
      %v1081 = vunpack.c.l.b16 %v1049
      %v1082 = vunpack.c.h.b16 %v1049
      %v1083 = vunpack.c.l.b16 %v1050
      %v1084 = vunpack.c.h.b16 %v1050
      %v1085 = vunpack.c.l.b16 %v1051
      %v1086 = vunpack.c.h.b16 %v1051
      %v1087 = vunpack.c.l.b16 %v1052
      %v1088 = vunpack.c.h.b16 %v1052
      %v1089 = vunpack.c.l.b16 %v1053
      %v1090 = vunpack.c.h.b16 %v1053
      %v1091 = vunpack.c.l.b16 %v1054
      %v1092 = vunpack.c.h.b16 %v1054
      %v1093 = vunpack.c.l.b16 %v1055
      %v1094 = vunpack.c.h.b16 %v1055
      %v1095 = vunpack.c.l.b16 %v1056
      %v1096 = vunpack.c.h.b16 %v1056
      %v1097 = vunpack.c.l.b16 %v1057
      %v1098 = vunpack.c.h.b16 %v1057
      %v1099 = vunpack.c.l.b16 %v1058
      %v1100 = vunpack.c.h.b16 %v1058
      %v1101 = vunpack.c.l.b16 %v1059
      %v1102 = vunpack.c.h.b16 %v1059
      %v1103 = vunpack.c.l.b16 %v1060
      %v1104 = vunpack.c.h.b16 %v1060
      %v1105 = vunpack.c.l.b16 %v1061
      %v1106 = vunpack.c.h.b16 %v1061
      %v1107 = vunpack.c.l.b16 %v1062
      %v1108 = vunpack.c.h.b16 %v1062
      %v1109 = vunpack.c.l.b16 %v1063
      %v1110 = vunpack.c.h.b16 %v1063
      %v1111 = vunpack.c.l.b16 %v1064
      %v1112 = vunpack.c.h.b16 %v1064
      %v1113 = vpack.c.b16 %v1083, %v1081
      %v1114 = vpack.c.b16 %v1084, %v1082
      %v1115 = vpack.c.b16 %v1087, %v1085
      %v1116 = vpack.c.b16 %v1088, %v1086
      %v1117 = vpack.c.b16 %v1091, %v1089
      %v1118 = vpack.c.b16 %v1092, %v1090
      %v1119 = vpack.c.b16 %v1095, %v1093
      %v1120 = vpack.c.b16 %v1096, %v1094
      %v1121 = vpack.c.b16 %v1099, %v1097
      %v1122 = vpack.c.b16 %v1100, %v1098
      %v1123 = vpack.c.b16 %v1103, %v1101
      %v1124 = vpack.c.b16 %v1104, %v1102
      %v1125 = vpack.c.b16 %v1107, %v1105
      %v1126 = vpack.c.b16 %v1108, %v1106
      %v1127 = vpack.c.b16 %v1111, %v1109
      %v1128 = vpack.c.b16 %v1112, %v1110
      %1145 = vmatpush.bf16.msra.mxu0 %v1127
      %1146 = vmatpush.bf16.msra.mxu0 %v1125
      %1147 = vmatpush.bf16.msra.mxu0 %v1123
      %1148 = vmatpush.bf16.msra.mxu0 %v1121
      %1149 = vmatpush.bf16.msra.mxu0 %v1119
      %1150 = vmatpush.bf16.msra.mxu0 %v1117
      %1151 = vmatpush.bf16.msra.mxu0 %v1115
      %1152 = vmatpush.bf16.msra.mxu0 %v1113
      %1153 = vmatmul.bf16.gmra.mxu0 %v1047
      %v1154 = vpop.f32.mrf.mxu0
      %v1155 = vadd.f32 0.0, %v1154
      %v1156 = vpop.f32.mrf.mxu0
      %1157 = vdwg.mxu0
      %1158 = vmatpush.bf16.msra.mxu0 %v1128
      %1159 = vmatpush.bf16.msra.mxu0 %v1126
      %1160 = vmatpush.bf16.msra.mxu0 %v1124
      %1161 = vmatpush.bf16.msra.mxu0 %v1122
      %1162 = vmatpush.bf16.msra.mxu0 %v1120
      %1163 = vmatpush.bf16.msra.mxu0 %v1118
      %1164 = vmatpush.bf16.msra.mxu0 %v1116
      %1165 = vmatpush.bf16.msra.mxu0 %v1114
      %1166 = vmatmul.bf16.gmra.mxu0 %v1047
      %v1167 = vpop.f32.mrf.mxu0
      %v1168 = vadd.f32 0.0, %v1167
      %v1169 = vpop.f32.mrf.mxu0
      %1170 = vdwg.mxu0
      %v1173 = vrot.slane %v1168, 4
      %v1174 = vsel %vm344, %v1155, %v1173
      %v1176 = vadd.f32 %v1043, %v1174
      %1177 = vst [vmem:[%s206] sm:$0xff] %v1176
      %v1178 = vld [vmem:[%s206] sm:$0xff]
      %v1179 = vld [vmem:[%s1046] sm:$0x7]
      %s1180 = scalar_lea.vmem %s1, 896
      %v1181 = vld [vmem:[%s1180] sm:$0xff]
      %v1182 = vld [vmem:[%s1180 + $0x8] sm:$0xff]
      %v1183 = vld [vmem:[%s1180 + $0x10] sm:$0xff]
      %v1184 = vld [vmem:[%s1180 + $0x18] sm:$0xff]
      %v1185 = vld [vmem:[%s1180 + $0x20] sm:$0xff]
      %v1186 = vld [vmem:[%s1180 + $0x28] sm:$0xff]
      %v1187 = vld [vmem:[%s1180 + $0x30] sm:$0xff]
      %v1188 = vld [vmem:[%s1180 + $0x38] sm:$0xff]
      %v1189 = vld [vmem:[%s1180 + $0x40] sm:$0xff]
      %v1190 = vld [vmem:[%s1180 + $0x48] sm:$0xff]
      %v1191 = vld [vmem:[%s1180 + $0x50] sm:$0xff]
      %v1192 = vld [vmem:[%s1180 + $0x58] sm:$0xff]
      %v1193 = vld [vmem:[%s1180 + $0x60] sm:$0xff]
      %v1194 = vld [vmem:[%s1180 + $0x68] sm:$0xff]
      %v1195 = vld [vmem:[%s1180 + $0x70] sm:$0xff]
      %v1196 = vld [vmem:[%s1180 + $0x78] sm:$0xff]
      %v1198 = vunpack.c.l.b16 %v1179
      %v1199 = vpack.c.b16 %v1198, %v1198
      %v1201 = vshrl.u32 %v1199, 16
      %v1203 = vshll.u32 %v1199, 16
      %v1205 = vrot.slane %v1203, 1
      %v1206 = vor.u32 %v1201, %v1205
      %v1224 = vunpack.c.l.b16 %v1181
      %v1225 = vunpack.c.h.b16 %v1181
      %v1226 = vunpack.c.l.b16 %v1182
      %v1227 = vunpack.c.h.b16 %v1182
      %v1228 = vunpack.c.l.b16 %v1183
      %v1229 = vunpack.c.h.b16 %v1183
      %v1230 = vunpack.c.l.b16 %v1184
      %v1231 = vunpack.c.h.b16 %v1184
      %v1232 = vunpack.c.l.b16 %v1185
      %v1233 = vunpack.c.h.b16 %v1185
      %v1234 = vunpack.c.l.b16 %v1186
      %v1235 = vunpack.c.h.b16 %v1186
      %v1236 = vunpack.c.l.b16 %v1187
      %v1237 = vunpack.c.h.b16 %v1187
      %v1238 = vunpack.c.l.b16 %v1188
      %v1239 = vunpack.c.h.b16 %v1188
      %v1240 = vunpack.c.l.b16 %v1189
      %v1241 = vunpack.c.h.b16 %v1189
      %v1242 = vunpack.c.l.b16 %v1190
      %v1243 = vunpack.c.h.b16 %v1190
      %v1244 = vunpack.c.l.b16 %v1191
      %v1245 = vunpack.c.h.b16 %v1191
      %v1246 = vunpack.c.l.b16 %v1192
      %v1247 = vunpack.c.h.b16 %v1192
      %v1248 = vunpack.c.l.b16 %v1193
      %v1249 = vunpack.c.h.b16 %v1193
      %v1250 = vunpack.c.l.b16 %v1194
      %v1251 = vunpack.c.h.b16 %v1194
      %v1252 = vunpack.c.l.b16 %v1195
      %v1253 = vunpack.c.h.b16 %v1195
      %v1254 = vunpack.c.l.b16 %v1196
      %v1255 = vunpack.c.h.b16 %v1196
      %v1256 = vpack.c.b16 %v1226, %v1224
      %v1257 = vpack.c.b16 %v1227, %v1225
      %v1258 = vpack.c.b16 %v1230, %v1228
      %v1259 = vpack.c.b16 %v1231, %v1229
      %v1260 = vpack.c.b16 %v1234, %v1232
      %v1261 = vpack.c.b16 %v1235, %v1233
      %v1262 = vpack.c.b16 %v1238, %v1236
      %v1263 = vpack.c.b16 %v1239, %v1237
      %v1264 = vpack.c.b16 %v1242, %v1240
      %v1265 = vpack.c.b16 %v1243, %v1241
      %v1266 = vpack.c.b16 %v1246, %v1244
      %v1267 = vpack.c.b16 %v1247, %v1245
      %v1268 = vpack.c.b16 %v1250, %v1248
      %v1269 = vpack.c.b16 %v1251, %v1249
      %v1270 = vpack.c.b16 %v1254, %v1252
      %v1271 = vpack.c.b16 %v1255, %v1253
      %1288 = vmatpush.bf16.msra.mxu0 %v1270
      %1289 = vmatpush.bf16.msra.mxu0 %v1268
      %1290 = vmatpush.bf16.msra.mxu0 %v1266
      %1291 = vmatpush.bf16.msra.mxu0 %v1264
      %1292 = vmatpush.bf16.msra.mxu0 %v1262
      %1293 = vmatpush.bf16.msra.mxu0 %v1260
      %1294 = vmatpush.bf16.msra.mxu0 %v1258
      %1295 = vmatpush.bf16.msra.mxu0 %v1256
      %1296 = vmatmul.bf16.gmra.mxu0 %v1206
      %v1297 = vpop.f32.mrf.mxu0
      %v1298 = vadd.f32 0.0, %v1297
      %v1299 = vpop.f32.mrf.mxu0
      %1300 = vdwg.mxu0
      %1301 = vmatpush.bf16.msra.mxu0 %v1271
      %1302 = vmatpush.bf16.msra.mxu0 %v1269
      %1303 = vmatpush.bf16.msra.mxu0 %v1267
      %1304 = vmatpush.bf16.msra.mxu0 %v1265
      %1305 = vmatpush.bf16.msra.mxu0 %v1263
      %1306 = vmatpush.bf16.msra.mxu0 %v1261
      %1307 = vmatpush.bf16.msra.mxu0 %v1259
      %1308 = vmatpush.bf16.msra.mxu0 %v1257
      %1309 = vmatmul.bf16.gmra.mxu0 %v1206
      %v1310 = vpop.f32.mrf.mxu0
      %v1311 = vadd.f32 0.0, %v1310
      %v1312 = vpop.f32.mrf.mxu0
      %1313 = vdwg.mxu0
      %v1316 = vrot.slane %v1311, 4
      %v1317 = vsel %vm344, %v1298, %v1316
      %v1319 = vadd.f32 %v1178, %v1317
      %1320 = vst [vmem:[%s206] sm:$0xff] %v1319
      %v1321 = vld [vmem:[%s206] sm:$0xff]
      %v1322 = vld [vmem:[%s1046] sm:$0x6]
      %s1323 = scalar_lea.vmem %s1, 1024
      %v1324 = vld [vmem:[%s1323] sm:$0xff]
      %v1325 = vld [vmem:[%s1323 + $0x8] sm:$0xff]
      %v1326 = vld [vmem:[%s1323 + $0x10] sm:$0xff]
      %v1327 = vld [vmem:[%s1323 + $0x18] sm:$0xff]
      %v1328 = vld [vmem:[%s1323 + $0x20] sm:$0xff]
      %v1329 = vld [vmem:[%s1323 + $0x28] sm:$0xff]
      %v1330 = vld [vmem:[%s1323 + $0x30] sm:$0xff]
      %v1331 = vld [vmem:[%s1323 + $0x38] sm:$0xff]
      %v1332 = vld [vmem:[%s1323 + $0x40] sm:$0xff]
      %v1333 = vld [vmem:[%s1323 + $0x48] sm:$0xff]
      %v1334 = vld [vmem:[%s1323 + $0x50] sm:$0xff]
      %v1335 = vld [vmem:[%s1323 + $0x58] sm:$0xff]
      %v1336 = vld [vmem:[%s1323 + $0x60] sm:$0xff]
      %v1337 = vld [vmem:[%s1323 + $0x68] sm:$0xff]
      %v1338 = vld [vmem:[%s1323 + $0x70] sm:$0xff]
      %v1339 = vld [vmem:[%s1323 + $0x78] sm:$0xff]
      %v1341 = vunpack.c.l.b16 %v1322
      %v1342 = vpack.c.b16 %v1341, %v1341
      %v1343 = vrot.slane %v1342, 1
      %v1361 = vunpack.c.l.b16 %v1324
      %v1362 = vunpack.c.h.b16 %v1324
      %v1363 = vunpack.c.l.b16 %v1325
      %v1364 = vunpack.c.h.b16 %v1325
      %v1365 = vunpack.c.l.b16 %v1326
      %v1366 = vunpack.c.h.b16 %v1326
      %v1367 = vunpack.c.l.b16 %v1327
      %v1368 = vunpack.c.h.b16 %v1327
      %v1369 = vunpack.c.l.b16 %v1328
      %v1370 = vunpack.c.h.b16 %v1328
      %v1371 = vunpack.c.l.b16 %v1329
      %v1372 = vunpack.c.h.b16 %v1329
      %v1373 = vunpack.c.l.b16 %v1330
      %v1374 = vunpack.c.h.b16 %v1330
      %v1375 = vunpack.c.l.b16 %v1331
      %v1376 = vunpack.c.h.b16 %v1331
      %v1377 = vunpack.c.l.b16 %v1332
      %v1378 = vunpack.c.h.b16 %v1332
      %v1379 = vunpack.c.l.b16 %v1333
      %v1380 = vunpack.c.h.b16 %v1333
      %v1381 = vunpack.c.l.b16 %v1334
      %v1382 = vunpack.c.h.b16 %v1334
      %v1383 = vunpack.c.l.b16 %v1335
      %v1384 = vunpack.c.h.b16 %v1335
      %v1385 = vunpack.c.l.b16 %v1336
      %v1386 = vunpack.c.h.b16 %v1336
      %v1387 = vunpack.c.l.b16 %v1337
      %v1388 = vunpack.c.h.b16 %v1337
      %v1389 = vunpack.c.l.b16 %v1338
      %v1390 = vunpack.c.h.b16 %v1338
      %v1391 = vunpack.c.l.b16 %v1339
      %v1392 = vunpack.c.h.b16 %v1339
      %v1393 = vpack.c.b16 %v1363, %v1361
      %v1394 = vpack.c.b16 %v1364, %v1362
      %v1395 = vpack.c.b16 %v1367, %v1365
      %v1396 = vpack.c.b16 %v1368, %v1366
      %v1397 = vpack.c.b16 %v1371, %v1369
      %v1398 = vpack.c.b16 %v1372, %v1370
      %v1399 = vpack.c.b16 %v1375, %v1373
      %v1400 = vpack.c.b16 %v1376, %v1374
      %v1401 = vpack.c.b16 %v1379, %v1377
      %v1402 = vpack.c.b16 %v1380, %v1378
      %v1403 = vpack.c.b16 %v1383, %v1381
      %v1404 = vpack.c.b16 %v1384, %v1382
      %v1405 = vpack.c.b16 %v1387, %v1385
      %v1406 = vpack.c.b16 %v1388, %v1386
      %v1407 = vpack.c.b16 %v1391, %v1389
      %v1408 = vpack.c.b16 %v1392, %v1390
      %1425 = vmatpush.bf16.msra.mxu0 %v1407
      %1426 = vmatpush.bf16.msra.mxu0 %v1405
      %1427 = vmatpush.bf16.msra.mxu0 %v1403
      %1428 = vmatpush.bf16.msra.mxu0 %v1401
      %1429 = vmatpush.bf16.msra.mxu0 %v1399
      %1430 = vmatpush.bf16.msra.mxu0 %v1397
      %1431 = vmatpush.bf16.msra.mxu0 %v1395
      %1432 = vmatpush.bf16.msra.mxu0 %v1393
      %1433 = vmatmul.bf16.gmra.mxu0 %v1343
      %v1434 = vpop.f32.mrf.mxu0
      %v1435 = vadd.f32 0.0, %v1434
      %v1436 = vpop.f32.mrf.mxu0
      %1437 = vdwg.mxu0
      %1438 = vmatpush.bf16.msra.mxu0 %v1408
      %1439 = vmatpush.bf16.msra.mxu0 %v1406
      %1440 = vmatpush.bf16.msra.mxu0 %v1404
      %1441 = vmatpush.bf16.msra.mxu0 %v1402
      %1442 = vmatpush.bf16.msra.mxu0 %v1400
      %1443 = vmatpush.bf16.msra.mxu0 %v1398
      %1444 = vmatpush.bf16.msra.mxu0 %v1396
      %1445 = vmatpush.bf16.msra.mxu0 %v1394
      %1446 = vmatmul.bf16.gmra.mxu0 %v1343
      %v1447 = vpop.f32.mrf.mxu0
      %v1448 = vadd.f32 0.0, %v1447
      %v1449 = vpop.f32.mrf.mxu0
      %1450 = vdwg.mxu0
      %v1453 = vrot.slane %v1448, 4
      %v1454 = vsel %vm344, %v1435, %v1453
      %v1456 = vadd.f32 %v1321, %v1454
      %1457 = vst [vmem:[%s206] sm:$0xff] %v1456
      %v1458 = vld [vmem:[%s206] sm:$0xff]
      %1460 = vst [vmem:[#allocation1] ss:$2 sm:$0xff] %v1458
      %v1461 = vld.sshfl [vmem:[#allocation1] sm:$0xff pattern:$0x75316420]
      %v1462 = vld.sshfl [vmem:[#allocation1 + $0x8] sm:$0xff pattern:$0x75316420]
      %v1465 = vsel %vm344, %v1461, 0.0
      %v1466 = vrot.slane %v1465, 4
      %v1467 = vadd.f32 %v1465, %v1466
      %v1468 = vrot.slane %v1467, 2
      %v1469 = vadd.f32 %v1467, %v1468
      %v1470 = vrot.slane %v1469, 1
      %v1471 = vadd.f32 %v1469, %v1470
      %v1472 = vsel %vm344, %v1462, 0.0
      %v1473 = vrot.slane %v1472, 4
      %v1474 = vadd.f32 %v1472, %v1473
      %v1475 = vrot.slane %v1474, 2
      %v1476 = vadd.f32 %v1474, %v1475
      %v1477 = vrot.slane %v1476, 1
      %v1478 = vadd.f32 %v1476, %v1477
      %v1481 = vrot.slane %v1478, 7
      %vm1482 = vcmask 1040384
      %v1483 = vsel %vm1482, %v1471, %v1481
      %v1485 = vlaneseq
      %vm1486 = vcmp.ge.s32.totalorder %v1485, 0
      %vm1487 = vcmp.lt.s32.totalorder %v1485, 256
      %vm1488 = vmand %vm1486, %vm1487
      %1489 = vst.msk [vmem:[%s215] ss:$2 sm:$0x3] %vm1488, %v1483
      %v1490 = vmul.f32 %v1458, %v1458
      %1492 = vst [vmem:[#allocation1] ss:$2 sm:$0xff] %v1490
      %v1493 = vld.sshfl [vmem:[#allocation1] sm:$0xff pattern:$0x75316420]
      %v1494 = vld.sshfl [vmem:[#allocation1 + $0x8] sm:$0xff pattern:$0x75316420]
      %v1497 = vsel %vm344, %v1493, 0.0
      %v1498 = vrot.slane %v1497, 4
      %v1499 = vadd.f32 %v1497, %v1498
      %v1500 = vrot.slane %v1499, 2
      %v1501 = vadd.f32 %v1499, %v1500
      %v1502 = vrot.slane %v1501, 1
      %v1503 = vadd.f32 %v1501, %v1502
      %v1504 = vsel %vm344, %v1494, 0.0
      %v1505 = vrot.slane %v1504, 4
      %v1506 = vadd.f32 %v1504, %v1505
      %v1507 = vrot.slane %v1506, 2
      %v1508 = vadd.f32 %v1506, %v1507
      %v1509 = vrot.slane %v1508, 1
      %v1510 = vadd.f32 %v1508, %v1509
      %v1513 = vrot.slane %v1510, 7
      %v1514 = vsel %vm1482, %v1503, %v1513
      %s1516 = scalar_lea.vmem %s215, 1
      %1517 = vst.msk [vmem:[%s1516] ss:$2 sm:$0x3] %vm1488, %v1514
      %p1518 = scmp.lt.s32.totalorder %s19, 1
      %s1519 = scalar_select %p1518, %s19, 1
      %p1520 = scmp.lt.s32.totalorder %s20, 3
      %s1521 = scalar_select %p1520, %s20, 3
      %s1522 = smul.addr %s1521, 2
      %s1523 = smul.addr %s1519, 8
      %s1524 = sadd.s32 %s1522, %s1523
      %s1525 = smul.addr %s1524, 4
      %s1526 = scalar_lea.vmem %s2, %s1525
      %p1527 = scmp.lt.s32.totalorder %s19, 1
      %s1528 = scalar_select %p1527, %s19, 1
      %p1529 = scmp.lt.s32.totalorder %s20, 3
      %s1530 = scalar_select %p1529, %s20, 3
      %s1531 = smul.addr %s1530, 2
      %s1532 = smul.addr %s1528, 8
      %s1533 = sadd.s32 %s1531, %s1532
      %s1534 = smul.addr %s1533, 2
      %s1535 = scalar_lea.vmem %s3, %s1534
      // Predicated region
      $region29: #{hrnet_forward.10} parent=27 // pred_check
        %p1536 = pneg %p94
      $region30: #{hrnet_forward.10} parent=27 // pred_check_branch
        %1538 = sbr.rel (%p1536) target = $region32
      $region31: #{hrnet_forward.10} parent=27 // pred_region
        _
      $region32: #{hrnet_forward.10} parent=27 // pred_fallthru
        _
      // Predicated region
      $region33: #{hrnet_forward.10} parent=27 // pred_check
        %p1539 = pneg %p122
      $region34: #{hrnet_forward.10} parent=27 // pred_check_branch
        %1541 = sbr.rel (%p1539) target = $region36
      $region35: #{hrnet_forward.10} parent=27 // pred_region
        _
      $region36: #{hrnet_forward.10} parent=27 // pred_fallthru
        _
    $region28: #{hrnet_forward.10} parent=5 // pred_fallthru
      _
    %p1542 = scmp.le.s32.totalorder 2, %s10
    // Predicated region
    $region37: #{hrnet_forward.10} parent=5 // pred_check
      %p1543 = pneg %p1542
    $region38: #{hrnet_forward.10} parent=5 // pred_check_branch
      %1545 = sbr.rel (%p1543) target = $region40
    $region39: #{hrnet_forward.10} parent=5 // pred_region
      %s1546 = ssub.s32 %s10, 2
      // Predicated region
      $region41: #{hrnet_forward.10} parent=39 // pred_check
        %p1547 = pneg %p100
      $region42: #{hrnet_forward.10} parent=39 // pred_check_branch
        %1549 = sbr.rel (%p1547) target = $region44
      $region43: #{hrnet_forward.10} parent=39 // pred_region
        %p1550 = scmp.lt.s32.totalorder %s21, 1
        %s1551 = scalar_select %p1550, %s21, 1
        %p1552 = scmp.lt.s32.totalorder %s22, 3
        %s1553 = scalar_select %p1552, %s22, 3
        %s1554 = smul.addr %s1553, 2
        %s1555 = smul.addr %s1551, 8
        %s1556 = sadd.s32 %s1554, %s1555
        %s1557 = smul.addr %s1556, 4
        %s1558 = scalar_lea.vmem %s2, %s1557
      $region44: #{hrnet_forward.10} parent=39 // pred_fallthru
        _
      // Predicated region
      $region45: #{hrnet_forward.10} parent=39 // pred_check
        %p1559 = pneg %p128
      $region46: #{hrnet_forward.10} parent=39 // pred_check_branch
        %1561 = sbr.rel (%p1559) target = $region48
      $region47: #{hrnet_forward.10} parent=39 // pred_region
        %p1562 = scmp.lt.s32.totalorder %s21, 1
        %s1563 = scalar_select %p1562, %s21, 1
        %p1564 = scmp.lt.s32.totalorder %s22, 3
        %s1565 = scalar_select %p1564, %s22, 3
        %s1566 = smul.addr %s1565, 2
        %s1567 = smul.addr %s1563, 8
        %s1568 = sadd.s32 %s1566, %s1567
        %s1569 = smul.addr %s1568, 2
        %s1570 = scalar_lea.vmem %s3, %s1569
      $region48: #{hrnet_forward.10} parent=39 // pred_fallthru
        _
    $region40: #{hrnet_forward.10} parent=5 // pred_fallthru
      _
  $region6: #{hrnet_forward.10} parent=0 // loop_footer
    %s14 = sadd.s32 1, %s10
  $region7: #{hrnet_forward.10} parent=0 // loop_footer_branch
    %9 = sbr.rel target = $region3
  $region8: #{hrnet_forward.10} parent=0 // loop_exit
    _

</llo_original>
